<compile_context>
chip_gen: v6e
topology: v6e:2x2x1
jax: 0.10.0
libtpu: 0.0.40
codegen_flags: <defaults>
</compile_context>

<pallas_src>
import functools

import jax
import jax.numpy as jnp
from jax import lax
from jax.experimental import pallas as pl
from jax.experimental.pallas import tpu as pltpu

C_FEAT = 128          # generator's internal channel width (fixed by the module)
BN_EPS = 1e-5
LANE = 128


def _round_up(x, m):
    return (x + m - 1) // m * m


def _vmem_capacity_bytes():
    try:
        info = pltpu.get_tpu_info()
        cap = getattr(info, "vmem_capacity_bytes", None)
        if cap:
            return int(cap)
    except Exception:
        pass
    return 64 * 1024 * 1024          # conservative (v7x-sized) fallback


_VMEM_CAP = _vmem_capacity_bytes()
# generation-aware limits: ~38 MiB on v7x (64 MiB VMEM), ~77 MiB on v5e/v6e.
_VMEM_LIMIT = max(32 * 1024 * 1024, min(int(_VMEM_CAP * 0.6), 100 * 1024 * 1024))
_BAND_BUDGET = max(8 * 1024 * 1024, _VMEM_CAP // 4)


# ---------------------------------------------------------------------------
# Kernel 1: fc   out = z @ W + b  (weights pre-permuted -> NHWC-flat output)
# Latency-dominated GEMM (K = latent_dim): single grid step unless the weight
# tile would not fit comfortably in VMEM.
# ---------------------------------------------------------------------------
def _fc_kernel(z_ref, w_ref, b_ref, o_ref):
    acc = jnp.dot(z_ref[...], w_ref[...], preferred_element_type=jnp.float32)
    o_ref[...] = (acc + b_ref[...]).astype(o_ref.dtype)


def fc_pallas(z_bf16, w_bf16, b_f32):
    B, L = z_bf16.shape
    F = w_bf16.shape[1]
    budget = max(4 * 1024 * 1024, _BAND_BUDGET // 2)
    tile_f = F
    if L * F * 2 > budget:
        for t in (65536, 32768, 16384, 8192, 4096, 2048, 1024, 512, 256, 128):
            if F % t == 0 and L * t * 2 <= budget:
                tile_f = t
                break
    return pl.pallas_call(
        _fc_kernel,
        out_shape=jax.ShapeDtypeStruct((B, F), jnp.bfloat16),
        grid=(F // tile_f,),
        in_specs=[
            pl.BlockSpec((B, L), lambda i: (0, 0)),
            pl.BlockSpec((L, tile_f), lambda i: (0, i)),
            pl.BlockSpec((1, tile_f), lambda i: (0, i)),
        ],
        out_specs=pl.BlockSpec((B, tile_f), lambda i: (0, i)),
        compiler_params=pltpu.CompilerParams(
            dimension_semantics=("parallel",),
            vmem_limit_bytes=_VMEM_LIMIT),
    )(z_bf16, w_bf16, b_f32.reshape(1, F))


# ---------------------------------------------------------------------------
# Kernel 2: BatchNorm sum / sum-of-squares (used for BN0 only; BN1 stats are
# fused into the block-1 kernel epilogue).  Finalisation to (scale, shift) is a
# tiny (2, C) op done in plain JAX.
# ---------------------------------------------------------------------------
def _bn_sums_kernel(x_ref, ss_ref, *, n_valid, needs_mask):
    i = pl.program_id(0)

    @pl.when(i == 0)
    def _init():
        ss_ref[...] = jnp.zeros_like(ss_ref)

    x = x_ref[...].astype(jnp.float32)                       # (TILE_N, C)
    if needs_mask:
        tile_n = x.shape[0]
        row = i * tile_n + lax.broadcasted_iota(jnp.int32, x.shape, 0)
        x = jnp.where(row < n_valid, x, 0.0)
    s = jnp.sum(x, axis=0, keepdims=True)
    sq = jnp.sum(x * x, axis=0, keepdims=True)
    ss_ref[...] += jnp.concatenate([s, sq], axis=0)          # (2, C)


def bn_sums_pallas(x2d, *, tile_n=2048):
    N, C = x2d.shape
    tile = N if N <= tile_n else tile_n                      # tile_n mult of 8
    kern = functools.partial(_bn_sums_kernel, n_valid=N,
                             needs_mask=(N % tile != 0))
    return pl.pallas_call(
        kern,
        out_shape=jax.ShapeDtypeStruct((2, C), jnp.float32),
        grid=(pl.cdiv(N, tile),),
        in_specs=[pl.BlockSpec((tile, C), lambda i: (i, 0))],
        out_specs=pl.BlockSpec((2, C), lambda i: (0, 0)),
        compiler_params=pltpu.CompilerParams(
            dimension_semantics=("arbitrary",),
            vmem_limit_bytes=_VMEM_LIMIT),
    )(x2d)


def bn_scale_shift(sums, n, gamma, beta, eps=BN_EPS):
    """(sum, sumsq) -> (scale, shift) with y = x*scale + shift (torch BN, biased var)."""
    mean = sums[0] / n
    var = sums[1] / n - mean * mean
    scale = gamma * lax.rsqrt(var + eps)
    shift = beta - mean * scale
    return jnp.stack([scale, shift], axis=0).astype(jnp.float32)


# ---------------------------------------------------------------------------
# Kernel 3: fused  BN-apply (+LeakyReLU) -> [2x nearest upsample -> 3x3 conv]
#           via the subpixel decomposition (+Tanh) (+ fused BN sum/sumsq).
# One grid step = one row band (batch folded into the block).
# ---------------------------------------------------------------------------
def _block_kernel(x_ref, ss_ref, w_ref, b_ref, o_ref, stats_ref=None, *,
                  n_bands, leaky_slope, apply_tanh, with_stats):
    bb, tin, wp2, c = x_ref.shape            # tin = T+2, wp2 = W+2 (pre-upsample)
    t = tin - 2
    w = wp2 - 2
    cout2 = o_ref.shape[-1]
    cout_p = cout2 // 2
    j = pl.program_id(0)

    # --- prologue: BN scale/shift (+LeakyReLU); keep the conv zero-pad ring 0.
    ss = ss_ref[...]                                         # (2, C) f32
    scale = ss[0:1, :].reshape(1, 1, 1, c)
    shift = ss[1:2, :].reshape(1, 1, 1, c)
    x = x_ref[...].astype(jnp.float32) * scale + shift
    if leaky_slope is not None:
        x = jnp.where(x > 0, x, leaky_slope * x)
    # pad mask built from two tiny 1-D iotas -> a single fused select
    row = lax.broadcasted_iota(jnp.int32, (1, tin, 1, 1), 1)
    col = lax.broadcasted_iota(jnp.int32, (1, 1, wp2, 1), 2)
    keep = (((row >= 1) | (j > 0)) & ((row <= t) | (j < n_bands - 1))
            & (col >= 1) & (col <= w))
    xq = jnp.where(keep, x, 0.0).astype(jnp.bfloat16)

    # --- subpixel 2x-upsample + 3x3 conv: four K = 4*C phase matmuls ---------
    sum_c = None
    sq_c = None
    for a in (0, 1):                 # output row phase
        cols = []
        for b2 in (0, 1):            # output column phase
            taps = [xq[:, a + rh:a + rh + t, b2 + rw:b2 + rw + w, :]
                    for rh in (0, 1) for rw in (0, 1)]
            patches = jnp.concatenate(taps, axis=-1).reshape(bb * t * w, 4 * c)
            acc = jnp.dot(patches, w_ref[2 * a + b2],
                          preferred_element_type=jnp.float32)
            acc = acc + b_ref[...]                           # (M, cout_p)
            if with_stats:
                ps = jnp.sum(acc, axis=0, keepdims=True)
                pq = jnp.sum(acc * acc, axis=0, keepdims=True)
                sum_c = ps if sum_c is None else sum_c + ps
                sq_c = pq if sq_c is None else sq_c + pq
            if apply_tanh:
                acc = jnp.tanh(acc)
            cols.append(acc.astype(o_ref.dtype))
        # column phases are merged along the lane axis (cheap); the 2x2 phase
        # interleave is undone by free contiguous reshapes in the wrapper.
        y_a = jnp.concatenate(cols, axis=-1).reshape(bb, t, w, cout2)
        o_ref[:, :, a, :, :] = y_a

    if with_stats:
        @pl.when(j == 0)
        def _init():
            stats_ref[...] = jnp.zeros_like(stats_ref)
        stats_ref[...] += jnp.concatenate([sum_c, sq_c], axis=0)


def _pick_band_rows(B, H, W, C, cout_p, out_bytes, budget):
    """Largest divisor of H whose per-step VMEM footprint fits the budget."""
    def est(t):
        band = B * (t + 2) * (W + 2) * C
        m = B * t * W
        x_in = 2 * band * 2                    # bf16 input block, double-buffered
        pro = band * (4 + 2)                   # f32 affine copy + bf16 copy
        patch = 2 * m * 4 * C * 2              # ~2 live bf16 patch buffers
        accs = 3 * m * cout_p * 4              # f32 phase accumulators
        outb = 2 * 4 * m * cout_p * out_bytes  # output block, double-buffered
        wgt = 2 * 4 * 4 * C * cout_p * 2
        return x_in + pro + patch + accs + outb + wgt
    for t in sorted((d for d in range(1, H + 1) if H % d == 0), reverse=True):
        if est(t) <= budget:
            return t
    return 1


def fused_upsample_conv_block(x_nhwc, scale_shift, w_k, b_k, *,
                              leaky_slope=None, apply_tanh=False,
                              out_dtype=jnp.bfloat16, with_stats=False):
    """BN-apply(+LeakyReLU) -> 2x nearest upsample -> 3x3 'same' conv (+Tanh)."""
    B, H, W, C = x_nhwc.shape
    cout_p = w_k.shape[-1]
    xp = jnp.pad(x_nhwc.astype(jnp.bfloat16), ((0, 0), (1, 1), (1, 1), (0, 0)))

    out_bytes = jnp.dtype(out_dtype).itemsize
    T = _pick_band_rows(B, H, W, C, cout_p, out_bytes, _BAND_BUDGET)
    n_bands = H // T
    if n_bands == 1:
        xb = xp[:, None]                                   # (B, 1, H+2, W+2, C)
    else:
        # TODO(synk): replace the halo-band stack with in-kernel halo DMA
        # (memory_space=pl.ANY + pltpu.make_async_copy) to avoid this HBM copy.
        xb = jnp.stack([xp[:, jj * T: jj * T + T + 2] for jj in range(n_bands)],
                       axis=1)                             # (B, nb, T+2, W+2, C)

    kern = functools.partial(_block_kernel, n_bands=n_bands,
                             leaky_slope=leaky_slope, apply_tanh=apply_tanh,
                             with_stats=with_stats)
    out_shape = jax.ShapeDtypeStruct((B, H, 2, W, 2 * cout_p), out_dtype)
    out_specs = pl.BlockSpec((B, T, 2, W, 2 * cout_p), lambda jj: (0, jj, 0, 0, 0))
    if with_stats:
        out_shape = (out_shape, jax.ShapeDtypeStruct((2, cout_p), jnp.float32))
        out_specs = (out_specs, pl.BlockSpec((2, cout_p), lambda jj: (0, 0)))

    # TODO(synk): on v7x keep a separate "parallel" batch axis for the 2 TCs.
    res = pl.pallas_call(
        kern,
        out_shape=out_shape,
        grid=(n_bands,),
        in_specs=[
            pl.BlockSpec((B, None, T + 2, W + 2, C), lambda jj: (0, jj, 0, 0, 0)),
            pl.BlockSpec((2, C), lambda jj: (0, 0)),
            pl.BlockSpec((4, 4 * C, cout_p), lambda jj: (0, 0, 0)),
            pl.BlockSpec((1, cout_p), lambda jj: (0, 0)),
        ],
        out_specs=out_specs,
        compiler_params=pltpu.CompilerParams(
            dimension_semantics=("arbitrary",) if with_stats else ("parallel",),
            vmem_limit_bytes=_VMEM_LIMIT),
    )(xb, scale_shift, w_k, b_k)

    if with_stats:
        y5, stats = res
    else:
        y5, stats = res, None
    # phase-factored -> NHWC: both reshapes are contiguous merges (free in XLA)
    y = y5.reshape(B, 2 * H, W, 2, cout_p).reshape(B, 2 * H, 2 * W, cout_p)
    return (y, stats) if with_stats else y


# ---------------------------------------------------------------------------
# Full forward pass
# ---------------------------------------------------------------------------
def generator_forward_pallas(z, kp, *, init_size, channels):
    B = z.shape[0]
    s = init_size
    zb = z.astype(jnp.bfloat16)

    # fc (weight columns pre-permuted -> output is already NHWC-flat)
    x = fc_pallas(zb, kp["fc_w"], kp["fc_b"])               # (B, s*s*128) bf16
    x = x.reshape(B, s, s, C_FEAT)

    # BN0 batch stats (small standalone reduction) -> (scale, shift)
    sums0 = bn_sums_pallas(x.reshape(B * s * s, C_FEAT))
    ss0 = bn_scale_shift(sums0, B * s * s, kp["bn0_g"], kp["bn0_b"])

    # block 1: BN0-apply -> 2x up -> conv1   (+ fused BN1 sum/sumsq epilogue)
    x, sums1 = fused_upsample_conv_block(
        x, ss0, kp["conv1_w"], kp["conv1_b"],
        leaky_slope=None, apply_tanh=False,
        out_dtype=jnp.bfloat16, with_stats=True)            # (B, 2s, 2s, 128)
    ss1 = bn_scale_shift(sums1, B * (2 * s) * (2 * s), kp["bn1_g"], kp["bn1_b"])

    # block 2: BN1-apply -> LeakyReLU(0.2) -> 2x up -> conv2 -> Tanh
    y = fused_upsample_conv_block(
        x, ss1, kp["conv2_w"], kp["conv2_b"],
        leaky_slope=0.2, apply_tanh=True,
        out_dtype=jnp.float32, with_stats=False)            # (B, 4s, 4s, cp2)

    img = y[..., :channels]
    return jnp.transpose(img, (0, 3, 1, 2))                 # NCHW like the module


# ---------------------------------------------------------------------------
# Parameters (torch-native layouts) + one-time kernel-friendly preparation
# ---------------------------------------------------------------------------
def init_torch_like_params(key, latent_dim, init_size, channels):
    ks = jax.random.split(key, 10)
    feat = C_FEAT * init_size * init_size
    return {
        "fc_w": jax.random.normal(ks[0], (feat, latent_dim), jnp.float32) * 0.05,
        "fc_b": jax.random.normal(ks[1], (feat,), jnp.float32) * 0.01,
        "bn0_g": 1.0 + 0.1 * jax.random.normal(ks[2], (C_FEAT,), jnp.float32),
        "bn0_b": 0.1 * jax.random.normal(ks[3], (C_FEAT,), jnp.float32),
        "conv1_w": jax.random.normal(ks[4], (C_FEAT, C_FEAT, 3, 3), jnp.float32) * 0.02,
        "conv1_b": jax.random.normal(ks[5], (C_FEAT,), jnp.float32) * 0.01,
        "bn1_g": 1.0 + 0.1 * jax.random.normal(ks[6], (C_FEAT,), jnp.float32),
        "bn1_b": 0.1 * jax.random.normal(ks[7], (C_FEAT,), jnp.float32),
        "conv2_w": jax.random.normal(ks[8], (channels, C_FEAT, 3, 3), jnp.float32) * 0.02,
        "conv2_b": jax.random.normal(ks[9], (channels,), jnp.float32) * 0.01,
    }


def prepare_kernel_params(p, init_size, channels):
    s = init_size
    feat = C_FEAT * s * s
    # fc: (out,in)->(in,out), permute output columns CHW -> HWC (NHWC-flat).
    perm = jnp.transpose(jnp.arange(feat).reshape(C_FEAT, s, s), (1, 2, 0)).reshape(-1)
    fc_w = p["fc_w"].T[:, perm].astype(jnp.bfloat16)
    fc_b = p["fc_b"][perm].astype(jnp.float32)

    # Subpixel decomposition of (2x nearest upsample -> 3x3 'same' conv):
    # each output phase (a,b) reads a 2x2 input neighbourhood, so the 3x3 taps
    # fold into 4 per-phase (4*Cin, Cout) matrices.  Tap order: (rh, rw).
    GRP = {0: ([0], [1, 2]), 1: ([0, 1], [2])}   # phase -> kernel-tap groups

    def conv_prep(w, bias, cout, cout_p):
        cin = w.shape[1]
        mats = []
        for a in (0, 1):
            for b2 in (0, 1):
                taps = []
                for rh in (0, 1):
                    for rw in (0, 1):
                        wsum = jnp.zeros((cout, cin), jnp.float32)
                        for kh in GRP[a][rh]:
                            for kw in GRP[b2][rw]:
                                wsum = wsum + w[:, :, kh, kw]
                        taps.append(wsum.T)                  # (cin, cout)
                m = jnp.concatenate(taps, axis=0)            # (4*cin, cout)
                mats.append(jnp.pad(m, ((0, 0), (0, cout_p - cout))))
        wk = jnp.stack(mats, axis=0).astype(jnp.bfloat16)    # (4, 4*cin, cout_p)
        bk = jnp.pad(bias, (0, cout_p - cout)).astype(jnp.float32).reshape(1, cout_p)
        return wk, bk

    c1w, c1b = conv_prep(p["conv1_w"], p["conv1_b"], C_FEAT, C_FEAT)
    cp2 = max(8, _round_up(channels, 8))      # tiny slab instead of 128 lanes
    c2w, c2b = conv_prep(p["conv2_w"], p["conv2_b"], channels, cp2)
    return {"fc_w": fc_w, "fc_b": fc_b,
            "bn0_g": p["bn0_g"], "bn0_b": p["bn0_b"],
            "bn1_g": p["bn1_g"], "bn1_b": p["bn1_b"],
            "conv1_w": c1w, "conv1_b": c1b,
            "conv2_w": c2w, "conv2_b": c2b}


# ---------------------------------------------------------------------------
# Pure-JAX f32 reference (mirrors the torch module exactly)
# ---------------------------------------------------------------------------
def _reference_forward(z, p, init_size, channels):
    s = init_size
    B = z.shape[0]
    x = (z @ p["fc_w"].T + p["fc_b"]).reshape(B, C_FEAT, s, s)

    def bn(x, g, b, eps=BN_EPS):
        mean = jnp.mean(x, axis=(0, 2, 3), keepdims=True)
        var = jnp.mean((x - mean) ** 2, axis=(0, 2, 3), keepdims=True)
        xh = (x - mean) * lax.rsqrt(var + eps)
        return xh * g.reshape(1, -1, 1, 1) + b.reshape(1, -1, 1, 1)

    def up2(x):
        return jnp.repeat(jnp.repeat(x, 2, axis=2), 2, axis=3)

    def conv(x, w, b):
        y = lax.conv_general_dilated(x, w, window_strides=(1, 1),
                                     padding=((1, 1), (1, 1)),
                                     dimension_numbers=("NCHW", "OIHW", "NCHW"))
        return y + b.reshape(1, -1, 1, 1)

    x = bn(x, p["bn0_g"], p["bn0_b"])
    x = up2(x)
    x = conv(x, p["conv1_w"], p["conv1_b"])
    x = bn(x, p["bn1_g"], p["bn1_b"])
    x = jnp.where(x > 0, x, 0.2 * x)
    x = up2(x)
    x = conv(x, p["conv2_w"], p["conv2_b"])
    return jnp.tanh(x)


if __name__ == "__main__":
    # Small config consistent with the module: image_size=16 -> init_size=4.
    latent_dim, image_size, channels, batch = 32, 16, 3, 2
    init_size = image_size // 4

    key = jax.random.PRNGKey(0)
    pkey, zkey = jax.random.split(key)
    params = init_torch_like_params(pkey, latent_dim, init_size, channels)
    z = jax.random.normal(zkey, (batch, latent_dim), jnp.float32)

    kparams = prepare_kernel_params(params, init_size, channels)
    fwd = jax.jit(functools.partial(generator_forward_pallas,
                                    init_size=init_size, channels=channels))
    img = jax.block_until_ready(fwd(z, kparams))

    assert img.shape == (batch, channels, image_size, image_size)
    assert bool(jnp.all(jnp.isfinite(img)))

    ref = _reference_forward(z, params, init_size, channels)
    max_err = float(jnp.max(jnp.abs(img - ref)))
    assert max_err < 1e-1, f"mismatch vs f32 reference: {max_err}"
    print("KERNEL_OK")
</pallas_src>

<mosaic_0001>
module attributes {stable_mosaic.version = 11 : i64} {
  func.func @_fc_kernel(%arg0: i32, %arg1: memref<2x32xbf16, #tpu.memory_space<vmem>>, %arg2: memref<32x2048xbf16, #tpu.memory_space<vmem>>, %arg3: memref<1x2048xf32, #tpu.memory_space<vmem>>, %arg4: memref<2x2048xbf16, #tpu.memory_space<vmem>>) attributes {dimension_semantics = [#tpu.dimension_semantics<parallel>], iteration_bounds = array<i64: 1>, scalar_prefetch = 0 : i64, scratch_operands = 0 : i64, tpu.core_type = #tpu.core_type<tc>, window_params = [{pipeline_mode = #tpu.pipeline_mode<synchronous>, transform_indices = @transform_0, window_bounds = array<i64: 2, 32>}, {transform_indices = @transform_1, window_bounds = array<i64: 32, 2048>}, {transform_indices = @transform_2, window_bounds = array<i64: 1, 2048>}, {transform_indices = @transform_3, window_bounds = array<i64: 2, 2048>}]} {
    %c0 = arith.constant 0 : index
    %c0_0 = arith.constant 0 : index
    %0 = vector.load %arg1[%c0, %c0_0] : memref<2x32xbf16, #tpu.memory_space<vmem>>, vector<2x32xbf16>
    %c0_1 = arith.constant 0 : index
    %c0_2 = arith.constant 0 : index
    %1 = vector.load %arg2[%c0_1, %c0_2] : memref<32x2048xbf16, #tpu.memory_space<vmem>>, vector<32x2048xbf16>
    %cst = arith.constant dense<0.000000e+00> : vector<2x2048xf32>
    %2 = tpu.matmul %0, %1, %cst {dimension_numbers = #tpu.dot_dimension_numbers<[1], [0], [0], [1], [0, 0, 1, 1], [], []>} : vector<2x32xbf16>, vector<32x2048xbf16>, vector<2x2048xf32> -> vector<2x2048xf32>
    %c0_3 = arith.constant 0 : index
    %c0_4 = arith.constant 0 : index
    %3 = vector.load %arg3[%c0_3, %c0_4] : memref<1x2048xf32, #tpu.memory_space<vmem>>, vector<1x2048xf32>
    %4 = vector.broadcast %3 : vector<1x2048xf32> to vector<2x2048xf32>
    %5 = arith.addf %2, %4 : vector<2x2048xf32>
    %6 = arith.truncf %5 : vector<2x2048xf32> to vector<2x2048xbf16>
    %c0_5 = arith.constant 0 : index
    %c0_6 = arith.constant 0 : index
    %7 = vector.load %arg4[%c0_5, %c0_6] : memref<2x2048xbf16, #tpu.memory_space<vmem>>, vector<2x2048xbf16>
    tpu.vector_store %arg4[%c0_5, %c0_6], %6 {strides = array<i32>} : memref<2x2048xbf16, #tpu.memory_space<vmem>>, vector<2x2048xbf16>,
    return
  }
  func.func @transform_0(%arg0: i32) -> (i32, i32) {
    %c0_i32 = arith.constant 0 : i32
    %c0_i32_0 = arith.constant 0 : i32
    %c0_i32_1 = arith.constant 0 : i32
    return %c0_i32, %c0_i32_0 : i32, i32
  }
  func.func @transform_1(%arg0: i32) -> (i32, i32) {
    %c0_i32 = arith.constant 0 : i32
    %c0_i32_0 = arith.constant 0 : i32
    return %c0_i32, %arg0 : i32, i32
  }
  func.func @transform_2(%arg0: i32) -> (i32, i32) {
    %c0_i32 = arith.constant 0 : i32
    %c0_i32_0 = arith.constant 0 : i32
    return %c0_i32, %arg0 : i32, i32
  }
  func.func @transform_3(%arg0: i32) -> (i32, i32) {
    %c0_i32 = arith.constant 0 : i32
    %c0_i32_0 = arith.constant 0 : i32
    return %c0_i32, %arg0 : i32, i32
  }
}

module attributes {stable_mosaic.version = 11 : i64} {
  func.func @_bn_sums_kernel(%arg0: i32, %arg1: memref<32x128xbf16, #tpu.memory_space<vmem>>, %arg2: memref<2x128xf32, #tpu.memory_space<vmem>>) attributes {dimension_semantics = [#tpu.dimension_semantics<arbitrary>], iteration_bounds = array<i64: 1>, scalar_prefetch = 0 : i64, scratch_operands = 0 : i64, tpu.core_type = #tpu.core_type<tc>, window_params = [{transform_indices = @transform_0, window_bounds = array<i64: 32, 128>}, {pipeline_mode = #tpu.pipeline_mode<synchronous>, transform_indices = @transform_1, window_bounds = array<i64: 2, 128>}]} {
    %c0_i32 = arith.constant 0 : i32
    %0 = arith.cmpi eq, %arg0, %c0_i32 : i32
    %1 = arith.extui %0 : i1 to i32
    %c0_i32_0 = arith.constant 0 : i32
    %2 = arith.cmpi ne, %1, %c0_i32_0 : i32
    scf.if %2 {
      %cst_7 = arith.constant 0.000000e+00 : f32
      %14 = vector.broadcast %cst_7 : f32 to vector<2x128xf32>
      %c0_8 = arith.constant 0 : index
      %c0_9 = arith.constant 0 : index
      %15 = vector.load %arg2[%c0_8, %c0_9] : memref<2x128xf32, #tpu.memory_space<vmem>>, vector<2x128xf32>
      tpu.vector_store %arg2[%c0_8, %c0_9], %14 {strides = array<i32>} : memref<2x128xf32, #tpu.memory_space<vmem>>, vector<2x128xf32>,
    } else {
    }
    %c0 = arith.constant 0 : index
    %c0_1 = arith.constant 0 : index
    %3 = vector.load %arg1[%c0, %c0_1] : memref<32x128xbf16, #tpu.memory_space<vmem>>, vector<32x128xbf16>
    %4 = arith.extf %3 : vector<32x128xbf16> to vector<32x128xf32>
    %cst = arith.constant dense<0.000000e+00> : vector<128xf32>
    %5 = vector.multi_reduction <add>, %4, %cst [0] : vector<32x128xf32> to vector<128xf32>
    %6 = vector.shape_cast %5 : vector<128xf32> to vector<1x128xf32>
    %7 = arith.mulf %4, %4 : vector<32x128xf32>
    %cst_2 = arith.constant dense<0.000000e+00> : vector<128xf32>
    %8 = vector.multi_reduction <add>, %7, %cst_2 [0] : vector<32x128xf32> to vector<128xf32>
    %9 = vector.shape_cast %8 : vector<128xf32> to vector<1x128xf32>
    %c0_3 = arith.constant 0 : index
    %c0_4 = arith.constant 0 : index
    %10 = vector.load %arg2[%c0_3, %c0_4] : memref<2x128xf32, #tpu.memory_space<vmem>>, vector<2x128xf32>
    %11 = tpu.concatenate %6, %9 in 0 : vector<1x128xf32>, vector<1x128xf32> -> vector<2x128xf32>
    %12 = arith.addf %10, %11 : vector<2x128xf32>
    %c0_5 = arith.constant 0 : index
    %c0_6 = arith.constant 0 : index
    %13 = vector.load %arg2[%c0_5, %c0_6] : memref<2x128xf32, #tpu.memory_space<vmem>>, vector<2x128xf32>
    tpu.vector_store %arg2[%c0_5, %c0_6], %12 {strides = array<i32>} : memref<2x128xf32, #tpu.memory_space<vmem>>, vector<2x128xf32>,
    return
  }
  func.func @transform_0(%arg0: i32) -> (i32, i32) {
    %c0_i32 = arith.constant 0 : i32
    %c0_i32_0 = arith.constant 0 : i32
    return %arg0, %c0_i32 : i32, i32
  }
  func.func @transform_1(%arg0: i32) -> (i32, i32) {
    %c0_i32 = arith.constant 0 : i32
    %c0_i32_0 = arith.constant 0 : i32
    %c0_i32_1 = arith.constant 0 : i32
    return %c0_i32, %c0_i32_0 : i32, i32
  }
}

module attributes {stable_mosaic.version = 11 : i64} {
  func.func @_block_kernel(%arg0: i32, %arg1: memref<2x1x6x6x128xbf16, #tpu.memory_space<vmem>>, %arg2: memref<2x128xf32, #tpu.memory_space<vmem>>, %arg3: memref<4x512x128xbf16, #tpu.memory_space<vmem>>, %arg4: memref<1x128xf32, #tpu.memory_space<vmem>>, %arg5: memref<2x4x2x4x256xbf16, #tpu.memory_space<vmem>>, %arg6: memref<2x128xf32, #tpu.memory_space<vmem>>) attributes {dimension_semantics = [#tpu.dimension_semantics<arbitrary>], iteration_bounds = array<i64: 1>, scalar_prefetch = 0 : i64, scratch_operands = 0 : i64, tpu.core_type = #tpu.core_type<tc>, window_params = [{transform_indices = @transform_0, window_bounds = array<i64: 2, 1, 6, 6, 128>}, {pipeline_mode = #tpu.pipeline_mode<synchronous>, transform_indices = @transform_1, window_bounds = array<i64: 2, 128>}, {pipeline_mode = #tpu.pipeline_mode<synchronous>, transform_indices = @transform_2, window_bounds = array<i64: 4, 512, 128>}, {pipeline_mode = #tpu.pipeline_mode<synchronous>, transform_indices = @transform_3, window_bounds = array<i64: 1, 128>}, {transform_indices = @transform_4, window_bounds = array<i64: 2, 4, 2, 4, 256>}, {pipeline_mode = #tpu.pipeline_mode<synchronous>, transform_indices = @transform_5, window_bounds = array<i64: 2, 128>}]} {
    %c0 = arith.constant 0 : index
    %c0_0 = arith.constant 0 : index
    %0 = vector.load %arg2[%c0, %c0_0] : memref<2x128xf32, #tpu.memory_space<vmem>>, vector<2x128xf32>
    %1 = vector.extract_strided_slice %0 {offsets = [0, 0], sizes = [1, 128], strides = [1, 1]} : vector<2x128xf32> to vector<1x128xf32>
    %2 = vector.shape_cast %1 : vector<1x128xf32> to vector<1x1x1x128xf32>
    %3 = vector.extract_strided_slice %0 {offsets = [1, 0], sizes = [1, 128], strides = [1, 1]} : vector<2x128xf32> to vector<1x128xf32>
    %4 = vector.shape_cast %3 : vector<1x128xf32> to vector<1x1x1x128xf32>
    %c0_1 = arith.constant 0 : index
    %c0_2 = arith.constant 0 : index
    %c0_3 = arith.constant 0 : index
    %c0_4 = arith.constant 0 : index
    %c0_5 = arith.constant 0 : index
    %5 = vector.load %arg1[%c0_1, %c0_2, %c0_3, %c0_4, %c0_5] : memref<2x1x6x6x128xbf16, #tpu.memory_space<vmem>>, vector<2x1x6x6x128xbf16>
    %6 = vector.shape_cast %5 : vector<2x1x6x6x128xbf16> to vector<2x6x6x128xbf16>
    %7 = arith.extf %6 : vector<2x6x6x128xbf16> to vector<2x6x6x128xf32>
    %8 = vector.broadcast %2 : vector<1x1x1x128xf32> to vector<2x6x6x128xf32>
    %9 = arith.mulf %7, %8 : vector<2x6x6x128xf32>
    %10 = vector.broadcast %4 : vector<1x1x1x128xf32> to vector<2x6x6x128xf32>
    %11 = arith.addf %9, %10 : vector<2x6x6x128xf32>
    %12 = tpu.iota {dimensions = array<i32: 1>} : vector<1x6x1x1xi32>
    %13 = tpu.iota {dimensions = array<i32: 2>} : vector<1x1x6x1xi32>
    %c1_i32 = arith.constant 1 : i32
    %14 = vector.broadcast %c1_i32 : i32 to vector<1x6x1x1xi32>
    %15 = arith.cmpi sge, %12, %14 : vector<1x6x1x1xi32>
    %c0_i32 = arith.constant 0 : i32
    %16 = arith.cmpi sgt, %arg0, %c0_i32 : i32
    %17 = vector.broadcast %16 : i1 to vector<1x6x1x1xi1>
    %18 = arith.ori %15, %17 : vector<1x6x1x1xi1>
    %c4_i32 = arith.constant 4 : i32
    %19 = vector.broadcast %c4_i32 : i32 to vector<1x6x1x1xi32>
    %20 = arith.cmpi sle, %12, %19 : vector<1x6x1x1xi32>
    %c0_i32_6 = arith.constant 0 : i32
    %21 = arith.cmpi slt, %arg0, %c0_i32_6 : i32
    %22 = vector.broadcast %21 : i1 to vector<1x6x1x1xi1>
    %23 = arith.ori %20, %22 : vector<1x6x1x1xi1>
    %24 = arith.andi %18, %23 : vector<1x6x1x1xi1>
    %c1_i32_7 = arith.constant 1 : i32
    %25 = vector.broadcast %c1_i32_7 : i32 to vector<1x1x6x1xi32>
    %26 = arith.cmpi sge, %13, %25 : vector<1x1x6x1xi32>
    %27 = vector.broadcast %24 : vector<1x6x1x1xi1> to vector<1x6x6x1xi1>
    %28 = vector.broadcast %26 : vector<1x1x6x1xi1> to vector<1x6x6x1xi1>
    %29 = arith.andi %27, %28 : vector<1x6x6x1xi1>
    %c4_i32_8 = arith.constant 4 : i32
    %30 = vector.broadcast %c4_i32_8 : i32 to vector<1x1x6x1xi32>
    %31 = arith.cmpi sle, %13, %30 : vector<1x1x6x1xi32>
    %32 = vector.broadcast %31 : vector<1x1x6x1xi1> to vector<1x6x6x1xi1>
    %33 = arith.andi %29, %32 : vector<1x6x6x1xi1>
    %cst = arith.constant 0.000000e+00 : f32
    %34 = vector.shape_cast %33 : vector<1x6x6x1xi1> to vector<1x6x6x1xi1>
    %35 = vector.broadcast %34 : vector<1x6x6x1xi1> to vector<2x6x6x128xi1>
    %36 = vector.broadcast %cst : f32 to vector<2x6x6x128xf32>
    %37 = arith.select %35, %11, %36 : vector<2x6x6x128xi1>, vector<2x6x6x128xf32>
    %38 = arith.truncf %37 : vector<2x6x6x128xf32> to vector<2x6x6x128xbf16>
    %39 = vector.extract_strided_slice %38 {offsets = [0, 0, 0, 0], sizes = [2, 4, 4, 128], strides = [1, 1, 1, 1]} : vector<2x6x6x128xbf16> to vector<2x4x4x128xbf16>
    %40 = vector.extract_strided_slice %38 {offsets = [0, 0, 1, 0], sizes = [2, 4, 4, 128], strides = [1, 1, 1, 1]} : vector<2x6x6x128xbf16> to vector<2x4x4x128xbf16>
    %41 = vector.extract_strided_slice %38 {offsets = [0, 1, 0, 0], sizes = [2, 4, 4, 128], strides = [1, 1, 1, 1]} : vector<2x6x6x128xbf16> to vector<2x4x4x128xbf16>
    %42 = vector.extract_strided_slice %38 {offsets = [0, 1, 1, 0], sizes = [2, 4, 4, 128], strides = [1, 1, 1, 1]} : vector<2x6x6x128xbf16> to vector<2x4x4x128xbf16>
    %43 = tpu.concatenate %39, %40, %41, %42 in 3 : vector<2x4x4x128xbf16>, vector<2x4x4x128xbf16>, vector<2x4x4x128xbf16>, vector<2x4x4x128xbf16> -> vector<2x4x4x512xbf16>
    %44 = vector.shape_cast %43 : vector<2x4x4x512xbf16> to vector<32x512xbf16>
    %c0_9 = arith.constant 0 : index
    %c0_10 = arith.constant 0 : index
    %c0_11 = arith.constant 0 : index
    %45 = vector.load %arg3[%c0_9, %c0_10, %c0_11] : memref<4x512x128xbf16, #tpu.memory_space<vmem>>, vector<1x512x128xbf16>
    %46 = vector.shape_cast %45 : vector<1x512x128xbf16> to vector<512x128xbf16>
    %cst_12 = arith.constant dense<0.000000e+00> : vector<32x128xf32>
    %47 = tpu.matmul %44, %46, %cst_12 {dimension_numbers = #tpu.dot_dimension_numbers<[1], [0], [0], [1], [0, 0, 1, 1], [], []>} : vector<32x512xbf16>, vector<512x128xbf16>, vector<32x128xf32> -> vector<32x128xf32>
    %c0_13 = arith.constant 0 : index
    %c0_14 = arith.constant 0 : index
    %48 = vector.load %arg4[%c0_13, %c0_14] : memref<1x128xf32, #tpu.memory_space<vmem>>, vector<1x128xf32>
    %49 = vector.broadcast %48 : vector<1x128xf32> to vector<32x128xf32>
    %50 = arith.addf %47, %49 : vector<32x128xf32>
    %cst_15 = arith.constant dense<0.000000e+00> : vector<128xf32>
    %51 = vector.multi_reduction <add>, %50, %cst_15 [0] : vector<32x128xf32> to vector<128xf32>
    %52 = vector.shape_cast %51 : vector<128xf32> to vector<1x128xf32>
    %53 = arith.mulf %50, %50 : vector<32x128xf32>
    %cst_16 = arith.constant dense<0.000000e+00> : vector<128xf32>
    %54 = vector.multi_reduction <add>, %53, %cst_16 [0] : vector<32x128xf32> to vector<128xf32>
    %55 = vector.shape_cast %54 : vector<128xf32> to vector<1x128xf32>
    %56 = arith.truncf %50 : vector<32x128xf32> to vector<32x128xbf16>
    %57 = vector.extract_strided_slice %38 {offsets = [0, 0, 1, 0], sizes = [2, 4, 4, 128], strides = [1, 1, 1, 1]} : vector<2x6x6x128xbf16> to vector<2x4x4x128xbf16>
    %58 = vector.extract_strided_slice %38 {offsets = [0, 0, 2, 0], sizes = [2, 4, 4, 128], strides = [1, 1, 1, 1]} : vector<2x6x6x128xbf16> to vector<2x4x4x128xbf16>
    %59 = vector.extract_strided_slice %38 {offsets = [0, 1, 1, 0], sizes = [2, 4, 4, 128], strides = [1, 1, 1, 1]} : vector<2x6x6x128xbf16> to vector<2x4x4x128xbf16>
    %60 = vector.extract_strided_slice %38 {offsets = [0, 1, 2, 0], sizes = [2, 4, 4, 128], strides = [1, 1, 1, 1]} : vector<2x6x6x128xbf16> to vector<2x4x4x128xbf16>
    %61 = tpu.concatenate %57, %58, %59, %60 in 3 : vector<2x4x4x128xbf16>, vector<2x4x4x128xbf16>, vector<2x4x4x128xbf16>, vector<2x4x4x128xbf16> -> vector<2x4x4x512xbf16>
    %62 = vector.shape_cast %61 : vector<2x4x4x512xbf16> to vector<32x512xbf16>
    %c1 = arith.constant 1 : index
    %c0_17 = arith.constant 0 : index
    %c0_18 = arith.constant 0 : index
    %63 = vector.load %arg3[%c1, %c0_17, %c0_18] : memref<4x512x128xbf16, #tpu.memory_space<vmem>>, vector<1x512x128xbf16>
    %64 = vector.shape_cast %63 : vector<1x512x128xbf16> to vector<512x128xbf16>
    %cst_19 = arith.constant dense<0.000000e+00> : vector<32x128xf32>
    %65 = tpu.matmul %62, %64, %cst_19 {dimension_numbers = #tpu.dot_dimension_numbers<[1], [0], [0], [1], [0, 0, 1, 1], [], []>} : vector<32x512xbf16>, vector<512x128xbf16>, vector<32x128xf32> -> vector<32x128xf32>
    %c0_20 = arith.constant 0 : index
    %c0_21 = arith.constant 0 : index
    %66 = vector.load %arg4[%c0_20, %c0_21] : memref<1x128xf32, #tpu.memory_space<vmem>>, vector<1x128xf32>
    %67 = vector.broadcast %66 : vector<1x128xf32> to vector<32x128xf32>
    %68 = arith.addf %65, %67 : vector<32x128xf32>
    %cst_22 = arith.constant dense<0.000000e+00> : vector<128xf32>
    %69 = vector.multi_reduction <add>, %68, %cst_22 [0] : vector<32x128xf32> to vector<128xf32>
    %70 = vector.shape_cast %69 : vector<128xf32> to vector<1x128xf32>
    %71 = arith.mulf %68, %68 : vector<32x128xf32>
    %cst_23 = arith.constant dense<0.000000e+00> : vector<128xf32>
    %72 = vector.multi_reduction <add>, %71, %cst_23 [0] : vector<32x128xf32> to vector<128xf32>
    %73 = vector.shape_cast %72 : vector<128xf32> to vector<1x128xf32>
    %74 = arith.addf %52, %70 : vector<1x128xf32>
    %75 = arith.addf %55, %73 : vector<1x128xf32>
    %76 = arith.truncf %68 : vector<32x128xf32> to vector<32x128xbf16>
    %77 = tpu.concatenate %56, %76 in 1 : vector<32x128xbf16>, vector<32x128xbf16> -> vector<32x256xbf16>
    %78 = vector.shape_cast %77 : vector<32x256xbf16> to vector<2x4x4x256xbf16>
    %c0_24 = arith.constant 0 : index
    %c0_25 = arith.constant 0 : index
    %c0_26 = arith.constant 0 : index
    %c0_27 = arith.constant 0 : index
    %c0_28 = arith.constant 0 : index
    %79 = vector.load %arg5[%c0_24, %c0_25, %c0_26, %c0_27, %c0_28] : memref<2x4x2x4x256xbf16, #tpu.memory_space<vmem>>, vector<2x4x1x4x256xbf16>
    %80 = vector.shape_cast %79 : vector<2x4x1x4x256xbf16> to vector<2x4x4x256xbf16>
    %81 = vector.shape_cast %78 : vector<2x4x4x256xbf16> to vector<2x4x1x4x256xbf16>
    tpu.vector_store %arg5[%c0_24, %c0_25, %c0_26, %c0_27, %c0_28], %81 {strides = array<i32>} : memref<2x4x2x4x256xbf16, #tpu.memory_space<vmem>>, vector<2x4x1x4x256xbf16>,
    %82 = vector.extract_strided_slice %38 {offsets = [0, 1, 0, 0], sizes = [2, 4, 4, 128], strides = [1, 1, 1, 1]} : vector<2x6x6x128xbf16> to vector<2x4x4x128xbf16>
    %83 = vector.extract_strided_slice %38 {offsets = [0, 1, 1, 0], sizes = [2, 4, 4, 128], strides = [1, 1, 1, 1]} : vector<2x6x6x128xbf16> to vector<2x4x4x128xbf16>
    %84 = vector.extract_strided_slice %38 {offsets = [0, 2, 0, 0], sizes = [2, 4, 4, 128], strides = [1, 1, 1, 1]} : vector<2x6x6x128xbf16> to vector<2x4x4x128xbf16>
    %85 = vector.extract_strided_slice %38 {offsets = [0, 2, 1, 0], sizes = [2, 4, 4, 128], strides = [1, 1, 1, 1]} : vector<2x6x6x128xbf16> to vector<2x4x4x128xbf16>
    %86 = tpu.concatenate %82, %83, %84, %85 in 3 : vector<2x4x4x128xbf16>, vector<2x4x4x128xbf16>, vector<2x4x4x128xbf16>, vector<2x4x4x128xbf16> -> vector<2x4x4x512xbf16>
    %87 = vector.shape_cast %86 : vector<2x4x4x512xbf16> to vector<32x512xbf16>
    %c2 = arith.constant 2 : index
    %c0_29 = arith.constant 0 : index
    %c0_30 = arith.constant 0 : index
    %88 = vector.load %arg3[%c2, %c0_29, %c0_30] : memref<4x512x128xbf16, #tpu.memory_space<vmem>>, vector<1x512x128xbf16>
    %89 = vector.shape_cast %88 : vector<1x512x128xbf16> to vector<512x128xbf16>
    %cst_31 = arith.constant dense<0.000000e+00> : vector<32x128xf32>
    %90 = tpu.matmul %87, %89, %cst_31 {dimension_numbers = #tpu.dot_dimension_numbers<[1], [0], [0], [1], [0, 0, 1, 1], [], []>} : vector<32x512xbf16>, vector<512x128xbf16>, vector<32x128xf32> -> vector<32x128xf32>
    %c0_32 = arith.constant 0 : index
    %c0_33 = arith.constant 0 : index
    %91 = vector.load %arg4[%c0_32, %c0_33] : memref<1x128xf32, #tpu.memory_space<vmem>>, vector<1x128xf32>
    %92 = vector.broadcast %91 : vector<1x128xf32> to vector<32x128xf32>
    %93 = arith.addf %90, %92 : vector<32x128xf32>
    %cst_34 = arith.constant dense<0.000000e+00> : vector<128xf32>
    %94 = vector.multi_reduction <add>, %93, %cst_34 [0] : vector<32x128xf32> to vector<128xf32>
    %95 = vector.shape_cast %94 : vector<128xf32> to vector<1x128xf32>
    %96 = arith.mulf %93, %93 : vector<32x128xf32>
    %cst_35 = arith.constant dense<0.000000e+00> : vector<128xf32>
    %97 = vector.multi_reduction <add>, %96, %cst_35 [0] : vector<32x128xf32> to vector<128xf32>
    %98 = vector.shape_cast %97 : vector<128xf32> to vector<1x128xf32>
    %99 = arith.addf %74, %95 : vector<1x128xf32>
    %100 = arith.addf %75, %98 : vector<1x128xf32>
    %101 = arith.truncf %93 : vector<32x128xf32> to vector<32x128xbf16>
    %102 = vector.extract_strided_slice %38 {offsets = [0, 1, 1, 0], sizes = [2, 4, 4, 128], strides = [1, 1, 1, 1]} : vector<2x6x6x128xbf16> to vector<2x4x4x128xbf16>
    %103 = vector.extract_strided_slice %38 {offsets = [0, 1, 2, 0], sizes = [2, 4, 4, 128], strides = [1, 1, 1, 1]} : vector<2x6x6x128xbf16> to vector<2x4x4x128xbf16>
    %104 = vector.extract_strided_slice %38 {offsets = [0, 2, 1, 0], sizes = [2, 4, 4, 128], strides = [1, 1, 1, 1]} : vector<2x6x6x128xbf16> to vector<2x4x4x128xbf16>
    %105 = vector.extract_strided_slice %38 {offsets = [0, 2, 2, 0], sizes = [2, 4, 4, 128], strides = [1, 1, 1, 1]} : vector<2x6x6x128xbf16> to vector<2x4x4x128xbf16>
    %106 = tpu.concatenate %102, %103, %104, %105 in 3 : vector<2x4x4x128xbf16>, vector<2x4x4x128xbf16>, vector<2x4x4x128xbf16>, vector<2x4x4x128xbf16> -> vector<2x4x4x512xbf16>
    %107 = vector.shape_cast %106 : vector<2x4x4x512xbf16> to vector<32x512xbf16>
    %c3 = arith.constant 3 : index
    %c0_36 = arith.constant 0 : index
    %c0_37 = arith.constant 0 : index
    %108 = vector.load %arg3[%c3, %c0_36, %c0_37] : memref<4x512x128xbf16, #tpu.memory_space<vmem>>, vector<1x512x128xbf16>
    %109 = vector.shape_cast %108 : vector<1x512x128xbf16> to vector<512x128xbf16>
    %cst_38 = arith.constant dense<0.000000e+00> : vector<32x128xf32>
    %110 = tpu.matmul %107, %109, %cst_38 {dimension_numbers = #tpu.dot_dimension_numbers<[1], [0], [0], [1], [0, 0, 1, 1], [], []>} : vector<32x512xbf16>, vector<512x128xbf16>, vector<32x128xf32> -> vector<32x128xf32>
    %c0_39 = arith.constant 0 : index
    %c0_40 = arith.constant 0 : index
    %111 = vector.load %arg4[%c0_39, %c0_40] : memref<1x128xf32, #tpu.memory_space<vmem>>, vector<1x128xf32>
    %112 = vector.broadcast %111 : vector<1x128xf32> to vector<32x128xf32>
    %113 = arith.addf %110, %112 : vector<32x128xf32>
    %cst_41 = arith.constant dense<0.000000e+00> : vector<128xf32>
    %114 = vector.multi_reduction <add>, %113, %cst_41 [0] : vector<32x128xf32> to vector<128xf32>
    %115 = vector.shape_cast %114 : vector<128xf32> to vector<1x128xf32>
    %116 = arith.mulf %113, %113 : vector<32x128xf32>
    %cst_42 = arith.constant dense<0.000000e+00> : vector<128xf32>
    %117 = vector.multi_reduction <add>, %116, %cst_42 [0] : vector<32x128xf32> to vector<128xf32>
    %118 = vector.shape_cast %117 : vector<128xf32> to vector<1x128xf32>
    %119 = arith.addf %99, %115 : vector<1x128xf32>
    %120 = arith.addf %100, %118 : vector<1x128xf32>
    %121 = arith.truncf %113 : vector<32x128xf32> to vector<32x128xbf16>
    %122 = tpu.concatenate %101, %121 in 1 : vector<32x128xbf16>, vector<32x128xbf16> -> vector<32x256xbf16>
    %123 = vector.shape_cast %122 : vector<32x256xbf16> to vector<2x4x4x256xbf16>
    %c0_43 = arith.constant 0 : index
    %c0_44 = arith.constant 0 : index
    %c1_45 = arith.constant 1 : index
    %c0_46 = arith.constant 0 : index
    %c0_47 = arith.constant 0 : index
    %124 = vector.load %arg5[%c0_43, %c0_44, %c1_45, %c0_46, %c0_47] : memref<2x4x2x4x256xbf16, #tpu.memory_space<vmem>>, vector<2x4x1x4x256xbf16>
    %125 = vector.shape_cast %124 : vector<2x4x1x4x256xbf16> to vector<2x4x4x256xbf16>
    %126 = vector.shape_cast %123 : vector<2x4x4x256xbf16> to vector<2x4x1x4x256xbf16>
    tpu.vector_store %arg5[%c0_43, %c0_44, %c1_45, %c0_46, %c0_47], %126 {strides = array<i32>} : memref<2x4x2x4x256xbf16, #tpu.memory_space<vmem>>, vector<2x4x1x4x256xbf16>,
    %c0_i32_48 = arith.constant 0 : i32
    %127 = arith.cmpi eq, %arg0, %c0_i32_48 : i32
    %128 = arith.extui %127 : i1 to i32
    %c0_i32_49 = arith.constant 0 : i32
    %129 = arith.cmpi ne, %128, %c0_i32_49 : i32
    scf.if %129 {
      %cst_54 = arith.constant 0.000000e+00 : f32
      %134 = vector.broadcast %cst_54 : f32 to vector<2x128xf32>
      %c0_55 = arith.constant 0 : index
      %c0_56 = arith.constant 0 : index
      %135 = vector.load %arg6[%c0_55, %c0_56] : memref<2x128xf32, #tpu.memory_space<vmem>>, vector<2x128xf32>
      tpu.vector_store %arg6[%c0_55, %c0_56], %134 {strides = array<i32>} : memref<2x128xf32, #tpu.memory_space<vmem>>, vector<2x128xf32>,
    } else {
    }
    %c0_50 = arith.constant 0 : index
    %c0_51 = arith.constant 0 : index
    %130 = vector.load %arg6[%c0_50, %c0_51] : memref<2x128xf32, #tpu.memory_space<vmem>>, vector<2x128xf32>
    %131 = tpu.concatenate %119, %120 in 0 : vector<1x128xf32>, vector<1x128xf32> -> vector<2x128xf32>
    %132 = arith.addf %130, %131 : vector<2x128xf32>
    %c0_52 = arith.constant 0 : index
    %c0_53 = arith.constant 0 : index
    %133 = vector.load %arg6[%c0_52, %c0_53] : memref<2x128xf32, #tpu.memory_space<vmem>>, vector<2x128xf32>
    tpu.vector_store %arg6[%c0_52, %c0_53], %132 {strides = array<i32>} : memref<2x128xf32, #tpu.memory_space<vmem>>, vector<2x128xf32>,
    return
  }
  func.func @transform_0(%arg0: i32) -> (i32, i32, i32, i32, i32) {
    %c0_i32 = arith.constant 0 : i32
    %c0_i32_0 = arith.constant 0 : i32
    %c0_i32_1 = arith.constant 0 : i32
    %c0_i32_2 = arith.constant 0 : i32
    %c0_i32_3 = arith.constant 0 : i32
    return %c0_i32, %arg0, %c0_i32_0, %c0_i32_1, %c0_i32_2 : i32, i32, i32, i32, i32
  }
  func.func @transform_1(%arg0: i32) -> (i32, i32) {
    %c0_i32 = arith.constant 0 : i32
    %c0_i32_0 = arith.constant 0 : i32
    %c0_i32_1 = arith.constant 0 : i32
    return %c0_i32, %c0_i32_0 : i32, i32
  }
  func.func @transform_2(%arg0: i32) -> (i32, i32, i32) {
    %c0_i32 = arith.constant 0 : i32
    %c0_i32_0 = arith.constant 0 : i32
    %c0_i32_1 = arith.constant 0 : i32
    %c0_i32_2 = arith.constant 0 : i32
    return %c0_i32, %c0_i32_0, %c0_i32_1 : i32, i32, i32
  }
  func.func @transform_3(%arg0: i32) -> (i32, i32) {
    %c0_i32 = arith.constant 0 : i32
    %c0_i32_0 = arith.constant 0 : i32
    %c0_i32_1 = arith.constant 0 : i32
    return %c0_i32, %c0_i32_0 : i32, i32
  }
  func.func @transform_4(%arg0: i32) -> (i32, i32, i32, i32, i32) {
    %c0_i32 = arith.constant 0 : i32
    %c0_i32_0 = arith.constant 0 : i32
    %c0_i32_1 = arith.constant 0 : i32
    %c0_i32_2 = arith.constant 0 : i32
    %c0_i32_3 = arith.constant 0 : i32
    return %c0_i32, %arg0, %c0_i32_0, %c0_i32_1, %c0_i32_2 : i32, i32, i32, i32, i32
  }
  func.func @transform_5(%arg0: i32) -> (i32, i32) {
    %c0_i32 = arith.constant 0 : i32
    %c0_i32_0 = arith.constant 0 : i32
    %c0_i32_1 = arith.constant 0 : i32
    return %c0_i32, %c0_i32_0 : i32, i32
  }
}

module attributes {stable_mosaic.version = 11 : i64} {
  func.func @_block_kernel(%arg0: i32, %arg1: memref<2x1x10x10x128xbf16, #tpu.memory_space<vmem>>, %arg2: memref<2x128xf32, #tpu.memory_space<vmem>>, %arg3: memref<4x512x8xbf16, #tpu.memory_space<vmem>>, %arg4: memref<1x8xf32, #tpu.memory_space<vmem>>, %arg5: memref<2x8x2x8x16xf32, #tpu.memory_space<vmem>>) attributes {dimension_semantics = [#tpu.dimension_semantics<parallel>], iteration_bounds = array<i64: 1>, scalar_prefetch = 0 : i64, scratch_operands = 0 : i64, tpu.core_type = #tpu.core_type<tc>, window_params = [{transform_indices = @transform_0, window_bounds = array<i64: 2, 1, 10, 10, 128>}, {pipeline_mode = #tpu.pipeline_mode<synchronous>, transform_indices = @transform_1, window_bounds = array<i64: 2, 128>}, {pipeline_mode = #tpu.pipeline_mode<synchronous>, transform_indices = @transform_2, window_bounds = array<i64: 4, 512, 8>}, {pipeline_mode = #tpu.pipeline_mode<synchronous>, transform_indices = @transform_3, window_bounds = array<i64: 1, 8>}, {transform_indices = @transform_4, window_bounds = array<i64: 2, 8, 2, 8, 16>}]} {
    %c0 = arith.constant 0 : index
    %c0_0 = arith.constant 0 : index
    %0 = vector.load %arg2[%c0, %c0_0] : memref<2x128xf32, #tpu.memory_space<vmem>>, vector<2x128xf32>
    %1 = vector.extract_strided_slice %0 {offsets = [0, 0], sizes = [1, 128], strides = [1, 1]} : vector<2x128xf32> to vector<1x128xf32>
    %2 = vector.shape_cast %1 : vector<1x128xf32> to vector<1x1x1x128xf32>
    %3 = vector.extract_strided_slice %0 {offsets = [1, 0], sizes = [1, 128], strides = [1, 1]} : vector<2x128xf32> to vector<1x128xf32>
    %4 = vector.shape_cast %3 : vector<1x128xf32> to vector<1x1x1x128xf32>
    %c0_1 = arith.constant 0 : index
    %c0_2 = arith.constant 0 : index
    %c0_3 = arith.constant 0 : index
    %c0_4 = arith.constant 0 : index
    %c0_5 = arith.constant 0 : index
    %5 = vector.load %arg1[%c0_1, %c0_2, %c0_3, %c0_4, %c0_5] : memref<2x1x10x10x128xbf16, #tpu.memory_space<vmem>>, vector<2x1x10x10x128xbf16>
    %6 = vector.shape_cast %5 : vector<2x1x10x10x128xbf16> to vector<2x10x10x128xbf16>
    %7 = arith.extf %6 : vector<2x10x10x128xbf16> to vector<2x10x10x128xf32>
    %8 = vector.broadcast %2 : vector<1x1x1x128xf32> to vector<2x10x10x128xf32>
    %9 = arith.mulf %7, %8 : vector<2x10x10x128xf32>
    %10 = vector.broadcast %4 : vector<1x1x1x128xf32> to vector<2x10x10x128xf32>
    %11 = arith.addf %9, %10 : vector<2x10x10x128xf32>
    %cst = arith.constant 0.000000e+00 : f32
    %12 = vector.broadcast %cst : f32 to vector<2x10x10x128xf32>
    %13 = arith.cmpf ogt, %11, %12 : vector<2x10x10x128xf32>
    %cst_6 = arith.constant 2.000000e-01 : f32
    %14 = vector.broadcast %cst_6 : f32 to vector<2x10x10x128xf32>
    %15 = arith.mulf %14, %11 : vector<2x10x10x128xf32>
    %16 = arith.select %13, %11, %15 : vector<2x10x10x128xi1>, vector<2x10x10x128xf32>
    %17 = tpu.iota {dimensions = array<i32: 1>} : vector<1x10x1x1xi32>
    %18 = tpu.iota {dimensions = array<i32: 2>} : vector<1x1x10x1xi32>
    %c1_i32 = arith.constant 1 : i32
    %19 = vector.broadcast %c1_i32 : i32 to vector<1x10x1x1xi32>
    %20 = arith.cmpi sge, %17, %19 : vector<1x10x1x1xi32>
    %c0_i32 = arith.constant 0 : i32
    %21 = arith.cmpi sgt, %arg0, %c0_i32 : i32
    %22 = vector.broadcast %21 : i1 to vector<1x10x1x1xi1>
    %23 = arith.ori %20, %22 : vector<1x10x1x1xi1>
    %c8_i32 = arith.constant 8 : i32
    %24 = vector.broadcast %c8_i32 : i32 to vector<1x10x1x1xi32>
    %25 = arith.cmpi sle, %17, %24 : vector<1x10x1x1xi32>
    %c0_i32_7 = arith.constant 0 : i32
    %26 = arith.cmpi slt, %arg0, %c0_i32_7 : i32
    %27 = vector.broadcast %26 : i1 to vector<1x10x1x1xi1>
    %28 = arith.ori %25, %27 : vector<1x10x1x1xi1>
    %29 = arith.andi %23, %28 : vector<1x10x1x1xi1>
    %c1_i32_8 = arith.constant 1 : i32
    %30 = vector.broadcast %c1_i32_8 : i32 to vector<1x1x10x1xi32>
    %31 = arith.cmpi sge, %18, %30 : vector<1x1x10x1xi32>
    %32 = vector.broadcast %29 : vector<1x10x1x1xi1> to vector<1x10x10x1xi1>
    %33 = vector.broadcast %31 : vector<1x1x10x1xi1> to vector<1x10x10x1xi1>
    %34 = arith.andi %32, %33 : vector<1x10x10x1xi1>
    %c8_i32_9 = arith.constant 8 : i32
    %35 = vector.broadcast %c8_i32_9 : i32 to vector<1x1x10x1xi32>
    %36 = arith.cmpi sle, %18, %35 : vector<1x1x10x1xi32>
    %37 = vector.broadcast %36 : vector<1x1x10x1xi1> to vector<1x10x10x1xi1>
    %38 = arith.andi %34, %37 : vector<1x10x10x1xi1>
    %cst_10 = arith.constant 0.000000e+00 : f32
    %39 = vector.shape_cast %38 : vector<1x10x10x1xi1> to vector<1x10x10x1xi1>
    %40 = vector.broadcast %39 : vector<1x10x10x1xi1> to vector<2x10x10x128xi1>
    %41 = vector.broadcast %cst_10 : f32 to vector<2x10x10x128xf32>
    %42 = arith.select %40, %16, %41 : vector<2x10x10x128xi1>, vector<2x10x10x128xf32>
    %43 = arith.truncf %42 : vector<2x10x10x128xf32> to vector<2x10x10x128xbf16>
    %44 = vector.extract_strided_slice %43 {offsets = [0, 0, 0, 0], sizes = [2, 8, 8, 128], strides = [1, 1, 1, 1]} : vector<2x10x10x128xbf16> to vector<2x8x8x128xbf16>
    %45 = vector.extract_strided_slice %43 {offsets = [0, 0, 1, 0], sizes = [2, 8, 8, 128], strides = [1, 1, 1, 1]} : vector<2x10x10x128xbf16> to vector<2x8x8x128xbf16>
    %46 = vector.extract_strided_slice %43 {offsets = [0, 1, 0, 0], sizes = [2, 8, 8, 128], strides = [1, 1, 1, 1]} : vector<2x10x10x128xbf16> to vector<2x8x8x128xbf16>
    %47 = vector.extract_strided_slice %43 {offsets = [0, 1, 1, 0], sizes = [2, 8, 8, 128], strides = [1, 1, 1, 1]} : vector<2x10x10x128xbf16> to vector<2x8x8x128xbf16>
    %48 = tpu.concatenate %44, %45, %46, %47 in 3 : vector<2x8x8x128xbf16>, vector<2x8x8x128xbf16>, vector<2x8x8x128xbf16>, vector<2x8x8x128xbf16> -> vector<2x8x8x512xbf16>
    %49 = vector.shape_cast %48 : vector<2x8x8x512xbf16> to vector<128x512xbf16>
    %c0_11 = arith.constant 0 : index
    %c0_12 = arith.constant 0 : index
    %c0_13 = arith.constant 0 : index
    %50 = vector.load %arg3[%c0_11, %c0_12, %c0_13] : memref<4x512x8xbf16, #tpu.memory_space<vmem>>, vector<1x512x8xbf16>
    %51 = vector.shape_cast %50 : vector<1x512x8xbf16> to vector<512x8xbf16>
    %cst_14 = arith.constant dense<0.000000e+00> : vector<128x8xf32>
    %52 = tpu.matmul %49, %51, %cst_14 {dimension_numbers = #tpu.dot_dimension_numbers<[1], [0], [0], [1], [0, 0, 1, 1], [], []>} : vector<128x512xbf16>, vector<512x8xbf16>, vector<128x8xf32> -> vector<128x8xf32>
    %c0_15 = arith.constant 0 : index
    %c0_16 = arith.constant 0 : index
    %53 = vector.load %arg4[%c0_15, %c0_16] : memref<1x8xf32, #tpu.memory_space<vmem>>, vector<1x8xf32>
    %54 = vector.broadcast %53 : vector<1x8xf32> to vector<128x8xf32>
    %55 = arith.addf %52, %54 : vector<128x8xf32>
    %56 = math.tanh %55 : vector<128x8xf32>
    %57 = vector.extract_strided_slice %43 {offsets = [0, 0, 1, 0], sizes = [2, 8, 8, 128], strides = [1, 1, 1, 1]} : vector<2x10x10x128xbf16> to vector<2x8x8x128xbf16>
    %58 = vector.extract_strided_slice %43 {offsets = [0, 0, 2, 0], sizes = [2, 8, 8, 128], strides = [1, 1, 1, 1]} : vector<2x10x10x128xbf16> to vector<2x8x8x128xbf16>
    %59 = vector.extract_strided_slice %43 {offsets = [0, 1, 1, 0], sizes = [2, 8, 8, 128], strides = [1, 1, 1, 1]} : vector<2x10x10x128xbf16> to vector<2x8x8x128xbf16>
    %60 = vector.extract_strided_slice %43 {offsets = [0, 1, 2, 0], sizes = [2, 8, 8, 128], strides = [1, 1, 1, 1]} : vector<2x10x10x128xbf16> to vector<2x8x8x128xbf16>
    %61 = tpu.concatenate %57, %58, %59, %60 in 3 : vector<2x8x8x128xbf16>, vector<2x8x8x128xbf16>, vector<2x8x8x128xbf16>, vector<2x8x8x128xbf16> -> vector<2x8x8x512xbf16>
    %62 = vector.shape_cast %61 : vector<2x8x8x512xbf16> to vector<128x512xbf16>
    %c1 = arith.constant 1 : index
    %c0_17 = arith.constant 0 : index
    %c0_18 = arith.constant 0 : index
    %63 = vector.load %arg3[%c1, %c0_17, %c0_18] : memref<4x512x8xbf16, #tpu.memory_space<vmem>>, vector<1x512x8xbf16>
    %64 = vector.shape_cast %63 : vector<1x512x8xbf16> to vector<512x8xbf16>
    %cst_19 = arith.constant dense<0.000000e+00> : vector<128x8xf32>
    %65 = tpu.matmul %62, %64, %cst_19 {dimension_numbers = #tpu.dot_dimension_numbers<[1], [0], [0], [1], [0, 0, 1, 1], [], []>} : vector<128x512xbf16>, vector<512x8xbf16>, vector<128x8xf32> -> vector<128x8xf32>
    %c0_20 = arith.constant 0 : index
    %c0_21 = arith.constant 0 : index
    %66 = vector.load %arg4[%c0_20, %c0_21] : memref<1x8xf32, #tpu.memory_space<vmem>>, vector<1x8xf32>
    %67 = vector.broadcast %66 : vector<1x8xf32> to vector<128x8xf32>
    %68 = arith.addf %65, %67 : vector<128x8xf32>
    %69 = math.tanh %68 : vector<128x8xf32>
    %70 = tpu.concatenate %56, %69 in 1 : vector<128x8xf32>, vector<128x8xf32> -> vector<128x16xf32>
    %71 = vector.shape_cast %70 : vector<128x16xf32> to vector<2x8x8x16xf32>
    %c0_22 = arith.constant 0 : index
    %c0_23 = arith.constant 0 : index
    %c0_24 = arith.constant 0 : index
    %c0_25 = arith.constant 0 : index
    %c0_26 = arith.constant 0 : index
    %72 = vector.load %arg5[%c0_22, %c0_23, %c0_24, %c0_25, %c0_26] : memref<2x8x2x8x16xf32, #tpu.memory_space<vmem>>, vector<2x8x1x8x16xf32>
    %73 = vector.shape_cast %72 : vector<2x8x1x8x16xf32> to vector<2x8x8x16xf32>
    %74 = vector.shape_cast %71 : vector<2x8x8x16xf32> to vector<2x8x1x8x16xf32>
    tpu.vector_store %arg5[%c0_22, %c0_23, %c0_24, %c0_25, %c0_26], %74 {strides = array<i32>} : memref<2x8x2x8x16xf32, #tpu.memory_space<vmem>>, vector<2x8x1x8x16xf32>,
    %75 = vector.extract_strided_slice %43 {offsets = [0, 1, 0, 0], sizes = [2, 8, 8, 128], strides = [1, 1, 1, 1]} : vector<2x10x10x128xbf16> to vector<2x8x8x128xbf16>
    %76 = vector.extract_strided_slice %43 {offsets = [0, 1, 1, 0], sizes = [2, 8, 8, 128], strides = [1, 1, 1, 1]} : vector<2x10x10x128xbf16> to vector<2x8x8x128xbf16>
    %77 = vector.extract_strided_slice %43 {offsets = [0, 2, 0, 0], sizes = [2, 8, 8, 128], strides = [1, 1, 1, 1]} : vector<2x10x10x128xbf16> to vector<2x8x8x128xbf16>
    %78 = vector.extract_strided_slice %43 {offsets = [0, 2, 1, 0], sizes = [2, 8, 8, 128], strides = [1, 1, 1, 1]} : vector<2x10x10x128xbf16> to vector<2x8x8x128xbf16>
    %79 = tpu.concatenate %75, %76, %77, %78 in 3 : vector<2x8x8x128xbf16>, vector<2x8x8x128xbf16>, vector<2x8x8x128xbf16>, vector<2x8x8x128xbf16> -> vector<2x8x8x512xbf16>
    %80 = vector.shape_cast %79 : vector<2x8x8x512xbf16> to vector<128x512xbf16>
    %c2 = arith.constant 2 : index
    %c0_27 = arith.constant 0 : index
    %c0_28 = arith.constant 0 : index
    %81 = vector.load %arg3[%c2, %c0_27, %c0_28] : memref<4x512x8xbf16, #tpu.memory_space<vmem>>, vector<1x512x8xbf16>
    %82 = vector.shape_cast %81 : vector<1x512x8xbf16> to vector<512x8xbf16>
    %cst_29 = arith.constant dense<0.000000e+00> : vector<128x8xf32>
    %83 = tpu.matmul %80, %82, %cst_29 {dimension_numbers = #tpu.dot_dimension_numbers<[1], [0], [0], [1], [0, 0, 1, 1], [], []>} : vector<128x512xbf16>, vector<512x8xbf16>, vector<128x8xf32> -> vector<128x8xf32>
    %c0_30 = arith.constant 0 : index
    %c0_31 = arith.constant 0 : index
    %84 = vector.load %arg4[%c0_30, %c0_31] : memref<1x8xf32, #tpu.memory_space<vmem>>, vector<1x8xf32>
    %85 = vector.broadcast %84 : vector<1x8xf32> to vector<128x8xf32>
    %86 = arith.addf %83, %85 : vector<128x8xf32>
    %87 = math.tanh %86 : vector<128x8xf32>
    %88 = vector.extract_strided_slice %43 {offsets = [0, 1, 1, 0], sizes = [2, 8, 8, 128], strides = [1, 1, 1, 1]} : vector<2x10x10x128xbf16> to vector<2x8x8x128xbf16>
    %89 = vector.extract_strided_slice %43 {offsets = [0, 1, 2, 0], sizes = [2, 8, 8, 128], strides = [1, 1, 1, 1]} : vector<2x10x10x128xbf16> to vector<2x8x8x128xbf16>
    %90 = vector.extract_strided_slice %43 {offsets = [0, 2, 1, 0], sizes = [2, 8, 8, 128], strides = [1, 1, 1, 1]} : vector<2x10x10x128xbf16> to vector<2x8x8x128xbf16>
    %91 = vector.extract_strided_slice %43 {offsets = [0, 2, 2, 0], sizes = [2, 8, 8, 128], strides = [1, 1, 1, 1]} : vector<2x10x10x128xbf16> to vector<2x8x8x128xbf16>
    %92 = tpu.concatenate %88, %89, %90, %91 in 3 : vector<2x8x8x128xbf16>, vector<2x8x8x128xbf16>, vector<2x8x8x128xbf16>, vector<2x8x8x128xbf16> -> vector<2x8x8x512xbf16>
    %93 = vector.shape_cast %92 : vector<2x8x8x512xbf16> to vector<128x512xbf16>
    %c3 = arith.constant 3 : index
    %c0_32 = arith.constant 0 : index
    %c0_33 = arith.constant 0 : index
    %94 = vector.load %arg3[%c3, %c0_32, %c0_33] : memref<4x512x8xbf16, #tpu.memory_space<vmem>>, vector<1x512x8xbf16>
    %95 = vector.shape_cast %94 : vector<1x512x8xbf16> to vector<512x8xbf16>
    %cst_34 = arith.constant dense<0.000000e+00> : vector<128x8xf32>
    %96 = tpu.matmul %93, %95, %cst_34 {dimension_numbers = #tpu.dot_dimension_numbers<[1], [0], [0], [1], [0, 0, 1, 1], [], []>} : vector<128x512xbf16>, vector<512x8xbf16>, vector<128x8xf32> -> vector<128x8xf32>
    %c0_35 = arith.constant 0 : index
    %c0_36 = arith.constant 0 : index
    %97 = vector.load %arg4[%c0_35, %c0_36] : memref<1x8xf32, #tpu.memory_space<vmem>>, vector<1x8xf32>
    %98 = vector.broadcast %97 : vector<1x8xf32> to vector<128x8xf32>
    %99 = arith.addf %96, %98 : vector<128x8xf32>
    %100 = math.tanh %99 : vector<128x8xf32>
    %101 = tpu.concatenate %87, %100 in 1 : vector<128x8xf32>, vector<128x8xf32> -> vector<128x16xf32>
    %102 = vector.shape_cast %101 : vector<128x16xf32> to vector<2x8x8x16xf32>
    %c0_37 = arith.constant 0 : index
    %c0_38 = arith.constant 0 : index
    %c1_39 = arith.constant 1 : index
    %c0_40 = arith.constant 0 : index
    %c0_41 = arith.constant 0 : index
    %103 = vector.load %arg5[%c0_37, %c0_38, %c1_39, %c0_40, %c0_41] : memref<2x8x2x8x16xf32, #tpu.memory_space<vmem>>, vector<2x8x1x8x16xf32>
    %104 = vector.shape_cast %103 : vector<2x8x1x8x16xf32> to vector<2x8x8x16xf32>
    %105 = vector.shape_cast %102 : vector<2x8x8x16xf32> to vector<2x8x1x8x16xf32>
    tpu.vector_store %arg5[%c0_37, %c0_38, %c1_39, %c0_40, %c0_41], %105 {strides = array<i32>} : memref<2x8x2x8x16xf32, #tpu.memory_space<vmem>>, vector<2x8x1x8x16xf32>,
    return
  }
  func.func @transform_0(%arg0: i32) -> (i32, i32, i32, i32, i32) {
    %c0_i32 = arith.constant 0 : i32
    %c0_i32_0 = arith.constant 0 : i32
    %c0_i32_1 = arith.constant 0 : i32
    %c0_i32_2 = arith.constant 0 : i32
    %c0_i32_3 = arith.constant 0 : i32
    return %c0_i32, %arg0, %c0_i32_0, %c0_i32_1, %c0_i32_2 : i32, i32, i32, i32, i32
  }
  func.func @transform_1(%arg0: i32) -> (i32, i32) {
    %c0_i32 = arith.constant 0 : i32
    %c0_i32_0 = arith.constant 0 : i32
    %c0_i32_1 = arith.constant 0 : i32
    return %c0_i32, %c0_i32_0 : i32, i32
  }
  func.func @transform_2(%arg0: i32) -> (i32, i32, i32) {
    %c0_i32 = arith.constant 0 : i32
    %c0_i32_0 = arith.constant 0 : i32
    %c0_i32_1 = arith.constant 0 : i32
    %c0_i32_2 = arith.constant 0 : i32
    return %c0_i32, %c0_i32_0, %c0_i32_1 : i32, i32, i32
  }
  func.func @transform_3(%arg0: i32) -> (i32, i32) {
    %c0_i32 = arith.constant 0 : i32
    %c0_i32_0 = arith.constant 0 : i32
    %c0_i32_1 = arith.constant 0 : i32
    return %c0_i32, %c0_i32_0 : i32, i32
  }
  func.func @transform_4(%arg0: i32) -> (i32, i32, i32, i32, i32) {
    %c0_i32 = arith.constant 0 : i32
    %c0_i32_0 = arith.constant 0 : i32
    %c0_i32_1 = arith.constant 0 : i32
    %c0_i32_2 = arith.constant 0 : i32
    %c0_i32_3 = arith.constant 0 : i32
    return %c0_i32, %arg0, %c0_i32_0, %c0_i32_1, %c0_i32_2 : i32, i32, i32, i32, i32
  }
}

</mosaic_0001>

<llo_original>
// kernel: generator_forward_pallas.5
$region0: #{generator_forward_pallas.5}
  #allocation0 [shape = 'u32[]', space=smem, size = 0x4, offset = 0x4, fixed_abs, tag = 'smem constant byte address 0x4 - core index']
  #allocation1 [shape = 'u32[144,128]{1,0:T(1,128)}', space=vmem, size = 0x12000, scoped, tag = 'internal scratch']
  %s0 = inlined_call_operand.vmem [shape: bf16[32,128], index: 0, kind: input, shape index: {}]
  %s1 = inlined_call_operand.vmem [shape: f32[2,128], index: 1, kind: output, shape index: {}]
  %s2 = sld [smem:[#allocation0]]
  $region18: #{generator_forward_pallas.5} parent=0
    _
  %s4 = ssub.s32 1, %s2
  %s5 = scalar_select 0, %s4, %s2
  // Predicated region
  $region2: #{generator_forward_pallas.5} parent=0 // pred_check
    _
  $region3: #{generator_forward_pallas.5} parent=0 // pred_check_branch
    %7 = sbr.rel (0) target = $region5
  $region4: #{generator_forward_pallas.5} parent=0 // pred_region
    _
  $region5: #{generator_forward_pallas.5} parent=0 // pred_fallthru
    _
  %p8 = scmp.eq.s32.totalorder 0, 0
  // Predicated region
  $region6: #{generator_forward_pallas.5} parent=0 // pred_check
    %p9 = pneg %p8
  $region7: #{generator_forward_pallas.5} parent=0 // pred_check_branch
    %11 = sbr.rel (%p9) target = $region9
  $region8: #{generator_forward_pallas.5} parent=0 // pred_region
    %12 = vst [vmem:[%s1] sm:$0x3] 0.0
  $region9: #{generator_forward_pallas.5} parent=0 // pred_fallthru
    _
  %v13 = vld [vmem:[%s0] sm:$0xf]
  %v14 = vld [vmem:[%s0 + $0x4] sm:$0xf]
  %v15 = vld [vmem:[%s0 + $0x8] sm:$0xf]
  %v16 = vld [vmem:[%s0 + $0xc] sm:$0xf]
  %v17 = vunpack.c.l.bf16 %v13
  %v18 = vunpack.c.l.bf16 %v14
  %v19 = vunpack.c.l.bf16 %v15
  %v20 = vunpack.c.l.bf16 %v16
  %v21 = vadd.f32 %v17, %v18
  %v22 = vadd.f32 %v21, %v19
  %v23 = vadd.f32 %v22, %v20
  %v24 = vrot.slane %v23, 4
  %v25 = vadd.f32 %v23, %v24
  %v26 = vrot.slane %v25, 2
  %v27 = vadd.f32 %v25, %v26
  %v28 = vrot.slane %v27, 1
  %v29 = vadd.f32 %v27, %v28
  %v30 = vmul.f32 %v17, %v17
  %v31 = vmul.f32 %v18, %v18
  %v32 = vmul.f32 %v19, %v19
  %v33 = vmul.f32 %v20, %v20
  %v34 = vadd.f32 %v30, %v31
  %v35 = vadd.f32 %v34, %v32
  %v36 = vadd.f32 %v35, %v33
  %v37 = vrot.slane %v36, 4
  %v38 = vadd.f32 %v36, %v37
  %v39 = vrot.slane %v38, 2
  %v40 = vadd.f32 %v38, %v39
  %v41 = vrot.slane %v40, 1
  %v42 = vadd.f32 %v40, %v41
  %v43 = vld [vmem:[%s1] sm:$0x3]
  %vm44 = vcmask 1040384
  %v45 = vsel %vm44, %v29, %v42
  %v46 = vadd.f32 %v43, %v45
  %47 = vst [vmem:[%s1] sm:$0x3] %v46
  // Predicated region
  $region10: #{generator_forward_pallas.5} parent=0 // pred_check
    _
  $region11: #{generator_forward_pallas.5} parent=0 // pred_check_branch
    %49 = sbr.rel (0) target = $region13
  $region12: #{generator_forward_pallas.5} parent=0 // pred_region
    _
  $region13: #{generator_forward_pallas.5} parent=0 // pred_fallthru
    _
  // Predicated region
  $region14: #{generator_forward_pallas.5} parent=0 // pred_check
    _
  $region15: #{generator_forward_pallas.5} parent=0 // pred_check_branch
    %51 = sbr.rel (0) target = $region17
  $region16: #{generator_forward_pallas.5} parent=0 // pred_region
    _
  $region17: #{generator_forward_pallas.5} parent=0 // pred_fallthru
    _

// kernel: generator_forward_pallas.4
$region0: #{generator_forward_pallas.4}
  #allocation0 [shape = 'u32[]', space=smem, size = 0x4, offset = 0x4, fixed_abs, tag = 'smem constant byte address 0x4 - core index']
  #allocation1 [shape = 'u32[144,128]{1,0:T(1,128)}', space=vmem, size = 0x12000, scoped, tag = 'internal scratch']
  %s0 = inlined_call_operand.vmem [shape: bf16[2,32], index: 0, kind: input, shape index: {}]
  %s1 = inlined_call_operand.hbm [shape: bf16[32,2048], index: 1, kind: input, shape index: {}]
  %s2 = inlined_call_operand.vmem [shape: f32[1,2048], index: 2, kind: input, shape index: {}]
  %s3 = inlined_call_operand.vmem [shape: bf16[2,2048], index: 3, kind: output, shape index: {}]
  %s4 = sld [smem:[#allocation0]]
  $region26: #{generator_forward_pallas.4} parent=0
    _
  %s6 = ssub.s32 1, %s4
  %s7 = scalar_select 0, %s6, %s4
  $region1: #{generator_forward_pallas.4} parent=0
    #allocation2 [shape = 'u8[131072]{0}', space=vmem, size = 0x20000, scoped, tag = 'input window, operand 1, single buffered']
    #allocation3 [shape = 's32[1]{0}', space=sflag, size = 0x4, scoped, tag = 'scoped memory for generator_forward_pallas.4']
    %8 = vsyncpa [#allocation3], 0
    // Predicated region
    $region2: #{generator_forward_pallas.4} parent=1 // pred_check
      _
    $region3: #{generator_forward_pallas.4} parent=1 // pred_check_branch
      %10 = sbr.rel (0) target = $region5
    $region4: #{generator_forward_pallas.4} parent=1 // pred_region
      _
    $region5: #{generator_forward_pallas.4} parent=1 // pred_fallthru
      _
    // Predicated region
    $region6: #{generator_forward_pallas.4} parent=1 // pred_check
      _
    $region7: #{generator_forward_pallas.4} parent=1 // pred_check_branch
      %12 = sbr.rel (0) target = $region9
    $region8: #{generator_forward_pallas.4} parent=1 // pred_region
      %s14 = ssub.s32 4096, 4096
      %15 = vsyncadd [#allocation3], %s14
      %s16 = sshll.u32 [#allocation2], 4
      %s17 = int_to_ptr.vmem [resolvable:$true] %s16
      %22 = dma.hbm_to_vmem [thread:$0]  %s1, 4096, %s17, [#allocation3], 1024, 1024, 64
    $region9: #{generator_forward_pallas.4} parent=1 // pred_fallthru
      _
    // Predicated region
    $region10: #{generator_forward_pallas.4} parent=1 // pred_check
      _
    $region11: #{generator_forward_pallas.4} parent=1 // pred_check_branch
      %24 = sbr.rel (0) target = $region13
    $region12: #{generator_forward_pallas.4} parent=1 // pred_region
      _
    $region13: #{generator_forward_pallas.4} parent=1 // pred_fallthru
      _
    // Predicated region
    $region14: #{generator_forward_pallas.4} parent=1 // pred_check
      _
    $region15: #{generator_forward_pallas.4} parent=1 // pred_check_branch
      %26 = sbr.rel (0) target = $region17
    $region16: #{generator_forward_pallas.4} parent=1 // pred_region
      %27 = dma.done [#allocation3], 4096
    $region17: #{generator_forward_pallas.4} parent=1 // pred_fallthru
      _
    %v29 = vld [vmem:[%s0] sm:$0x1]
    %v30 = vld [vmem:[#allocation2] sm:$0xff]
    %v31 = vld [vmem:[#allocation2 + $0x8] sm:$0xff]
    %v32 = vld [vmem:[#allocation2 + $0x10] sm:$0xff]
    %v33 = vld [vmem:[#allocation2 + $0x18] sm:$0xff]
    %v34 = vld [vmem:[#allocation2 + $0x20] sm:$0xff]
    %v35 = vld [vmem:[#allocation2 + $0x28] sm:$0xff]
    %v36 = vld [vmem:[#allocation2 + $0x30] sm:$0xff]
    %v37 = vld [vmem:[#allocation2 + $0x38] sm:$0xff]
    %v38 = vld [vmem:[#allocation2 + $0x40] sm:$0xff]
    %v39 = vld [vmem:[#allocation2 + $0x48] sm:$0xff]
    %v40 = vld [vmem:[#allocation2 + $0x50] sm:$0xff]
    %v41 = vld [vmem:[#allocation2 + $0x58] sm:$0xff]
    %v42 = vld [vmem:[#allocation2 + $0x60] sm:$0xff]
    %v43 = vld [vmem:[#allocation2 + $0x68] sm:$0xff]
    %v44 = vld [vmem:[#allocation2 + $0x70] sm:$0xff]
    %v45 = vld [vmem:[#allocation2 + $0x78] sm:$0xff]
    %v46 = vld [vmem:[#allocation2 + $0x80] sm:$0xff]
    %v47 = vld [vmem:[#allocation2 + $0x88] sm:$0xff]
    %v48 = vld [vmem:[#allocation2 + $0x90] sm:$0xff]
    %v49 = vld [vmem:[#allocation2 + $0x98] sm:$0xff]
    %v50 = vld [vmem:[#allocation2 + $0xa0] sm:$0xff]
    %v51 = vld [vmem:[#allocation2 + $0xa8] sm:$0xff]
    %v52 = vld [vmem:[#allocation2 + $0xb0] sm:$0xff]
    %v53 = vld [vmem:[#allocation2 + $0xb8] sm:$0xff]
    %v54 = vld [vmem:[#allocation2 + $0xc0] sm:$0xff]
    %v55 = vld [vmem:[#allocation2 + $0xc8] sm:$0xff]
    %v56 = vld [vmem:[#allocation2 + $0xd0] sm:$0xff]
    %v57 = vld [vmem:[#allocation2 + $0xd8] sm:$0xff]
    %v58 = vld [vmem:[#allocation2 + $0xe0] sm:$0xff]
    %v59 = vld [vmem:[#allocation2 + $0xe8] sm:$0xff]
    %v60 = vld [vmem:[#allocation2 + $0xf0] sm:$0xff]
    %v61 = vld [vmem:[#allocation2 + $0xf8] sm:$0xff]
    %v62 = vld [vmem:[%s2] sm:$0xff]
    %v63 = vld [vmem:[%s2 + $0x8] sm:$0xff]
    %v66 = vlaneseq
    %v67 = vshrl.u32 %v66, 7
    %v68 = vsub.s32 0, %v67
    %v69 = vrot.slane %v62, %v68
    %v70 = vlaneseq
    %v71 = vshrl.u32 %v70, 7
    %v72 = vsub.s32 1, %v71
    %v73 = vrot.slane %v62, %v72
    %v74 = vlaneseq
    %v75 = vshrl.u32 %v74, 7
    %v76 = vsub.s32 2, %v75
    %v77 = vrot.slane %v62, %v76
    %v78 = vlaneseq
    %v79 = vshrl.u32 %v78, 7
    %v80 = vsub.s32 3, %v79
    %v81 = vrot.slane %v62, %v80
    %v82 = vlaneseq
    %v83 = vshrl.u32 %v82, 7
    %v84 = vsub.s32 4, %v83
    %v85 = vrot.slane %v62, %v84
    %v86 = vlaneseq
    %v87 = vshrl.u32 %v86, 7
    %v88 = vsub.s32 5, %v87
    %v89 = vrot.slane %v62, %v88
    %v90 = vlaneseq
    %v91 = vshrl.u32 %v90, 7
    %v92 = vsub.s32 6, %v91
    %v93 = vrot.slane %v62, %v92
    %v94 = vlaneseq
    %v95 = vshrl.u32 %v94, 7
    %v96 = vsub.s32 7, %v95
    %v97 = vrot.slane %v62, %v96
    %v98 = vlaneseq
    %v99 = vshrl.u32 %v98, 7
    %v100 = vsub.s32 0, %v99
    %v101 = vrot.slane %v63, %v100
    %v102 = vlaneseq
    %v103 = vshrl.u32 %v102, 7
    %v104 = vsub.s32 1, %v103
    %v105 = vrot.slane %v63, %v104
    %v106 = vlaneseq
    %v107 = vshrl.u32 %v106, 7
    %v108 = vsub.s32 2, %v107
    %v109 = vrot.slane %v63, %v108
    %v110 = vlaneseq
    %v111 = vshrl.u32 %v110, 7
    %v112 = vsub.s32 3, %v111
    %v113 = vrot.slane %v63, %v112
    %v114 = vlaneseq
    %v115 = vshrl.u32 %v114, 7
    %v116 = vsub.s32 4, %v115
    %v117 = vrot.slane %v63, %v116
    %v118 = vlaneseq
    %v119 = vshrl.u32 %v118, 7
    %v120 = vsub.s32 5, %v119
    %v121 = vrot.slane %v63, %v120
    %v122 = vlaneseq
    %v123 = vshrl.u32 %v122, 7
    %v124 = vsub.s32 6, %v123
    %v125 = vrot.slane %v63, %v124
    %v126 = vlaneseq
    %v127 = vshrl.u32 %v126, 7
    %v128 = vsub.s32 7, %v127
    %v129 = vrot.slane %v63, %v128
    %v178 = vunpack.c.l.b16 %v30
    %v179 = vunpack.c.h.b16 %v30
    %v180 = vunpack.c.l.b16 %v31
    %v181 = vunpack.c.h.b16 %v31
    %v182 = vunpack.c.l.b16 %v32
    %v183 = vunpack.c.h.b16 %v32
    %v184 = vunpack.c.l.b16 %v33
    %v185 = vunpack.c.h.b16 %v33
    %v186 = vunpack.c.l.b16 %v34
    %v187 = vunpack.c.h.b16 %v34
    %v188 = vunpack.c.l.b16 %v35
    %v189 = vunpack.c.h.b16 %v35
    %v190 = vunpack.c.l.b16 %v36
    %v191 = vunpack.c.h.b16 %v36
    %v192 = vunpack.c.l.b16 %v37
    %v193 = vunpack.c.h.b16 %v37
    %v194 = vunpack.c.l.b16 %v38
    %v195 = vunpack.c.h.b16 %v38
    %v196 = vunpack.c.l.b16 %v39
    %v197 = vunpack.c.h.b16 %v39
    %v198 = vunpack.c.l.b16 %v40
    %v199 = vunpack.c.h.b16 %v40
    %v200 = vunpack.c.l.b16 %v41
    %v201 = vunpack.c.h.b16 %v41
    %v202 = vunpack.c.l.b16 %v42
    %v203 = vunpack.c.h.b16 %v42
    %v204 = vunpack.c.l.b16 %v43
    %v205 = vunpack.c.h.b16 %v43
    %v206 = vunpack.c.l.b16 %v44
    %v207 = vunpack.c.h.b16 %v44
    %v208 = vunpack.c.l.b16 %v45
    %v209 = vunpack.c.h.b16 %v45
    %v210 = vunpack.c.l.b16 %v46
    %v211 = vunpack.c.h.b16 %v46
    %v212 = vunpack.c.l.b16 %v47
    %v213 = vunpack.c.h.b16 %v47
    %v214 = vunpack.c.l.b16 %v48
    %v215 = vunpack.c.h.b16 %v48
    %v216 = vunpack.c.l.b16 %v49
    %v217 = vunpack.c.h.b16 %v49
    %v218 = vunpack.c.l.b16 %v50
    %v219 = vunpack.c.h.b16 %v50
    %v220 = vunpack.c.l.b16 %v51
    %v221 = vunpack.c.h.b16 %v51
    %v222 = vunpack.c.l.b16 %v52
    %v223 = vunpack.c.h.b16 %v52
    %v224 = vunpack.c.l.b16 %v53
    %v225 = vunpack.c.h.b16 %v53
    %v226 = vunpack.c.l.b16 %v54
    %v227 = vunpack.c.h.b16 %v54
    %v228 = vunpack.c.l.b16 %v55
    %v229 = vunpack.c.h.b16 %v55
    %v230 = vunpack.c.l.b16 %v56
    %v231 = vunpack.c.h.b16 %v56
    %v232 = vunpack.c.l.b16 %v57
    %v233 = vunpack.c.h.b16 %v57
    %v234 = vunpack.c.l.b16 %v58
    %v235 = vunpack.c.h.b16 %v58
    %v236 = vunpack.c.l.b16 %v59
    %v237 = vunpack.c.h.b16 %v59
    %v238 = vunpack.c.l.b16 %v60
    %v239 = vunpack.c.h.b16 %v60
    %v240 = vunpack.c.l.b16 %v61
    %v241 = vunpack.c.h.b16 %v61
    %v242 = vpack.c.b16 %v194, %v178
    %v243 = vpack.c.b16 %v195, %v179
    %v244 = vpack.c.b16 %v196, %v180
    %v245 = vpack.c.b16 %v197, %v181
    %v246 = vpack.c.b16 %v198, %v182
    %v247 = vpack.c.b16 %v199, %v183
    %v248 = vpack.c.b16 %v200, %v184
    %v249 = vpack.c.b16 %v201, %v185
    %v250 = vpack.c.b16 %v202, %v186
    %v251 = vpack.c.b16 %v203, %v187
    %v252 = vpack.c.b16 %v204, %v188
    %v253 = vpack.c.b16 %v205, %v189
    %v254 = vpack.c.b16 %v206, %v190
    %v255 = vpack.c.b16 %v207, %v191
    %v256 = vpack.c.b16 %v208, %v192
    %v257 = vpack.c.b16 %v209, %v193
    %v258 = vpack.c.b16 %v226, %v210
    %v259 = vpack.c.b16 %v227, %v211
    %v260 = vpack.c.b16 %v228, %v212
    %v261 = vpack.c.b16 %v229, %v213
    %v262 = vpack.c.b16 %v230, %v214
    %v263 = vpack.c.b16 %v231, %v215
    %v264 = vpack.c.b16 %v232, %v216
    %v265 = vpack.c.b16 %v233, %v217
    %v266 = vpack.c.b16 %v234, %v218
    %v267 = vpack.c.b16 %v235, %v219
    %v268 = vpack.c.b16 %v236, %v220
    %v269 = vpack.c.b16 %v237, %v221
    %v270 = vpack.c.b16 %v238, %v222
    %v271 = vpack.c.b16 %v239, %v223
    %v272 = vpack.c.b16 %v240, %v224
    %v273 = vpack.c.b16 %v241, %v225
    %vm306 = vcmask 261120
    %v308 = vsel %vm306, %v29, 0
    %310 = vmatprep.subr.bf16.mxu0 0
    %311 = vmatpush1.bf16.msra.mxu0 0
    %312 = vmatprep.subr.bf16.mxu0 0
    %313 = vmatpush1.bf16.msra.mxu0 0
    %314 = vmatprep.subr.bf16.mxu0 0
    %315 = vmatpush1.bf16.msra.mxu0 0
    %316 = vmatprep.subr.bf16.mxu0 0
    %317 = vmatpush1.bf16.msra.mxu0 0
    %318 = vmatprep.subr.bf16.mxu0 0
    %319 = vmatpush1.bf16.msra.mxu0 0
    %320 = vmatprep.subr.bf16.mxu0 0
    %321 = vmatpush1.bf16.msra.mxu0 0
    %322 = vmatprep.subr.bf16.mxu0 %v259
    %323 = vmatpush1.bf16.msra.mxu0 %v258
    %324 = vmatprep.subr.bf16.mxu0 %v243
    %325 = vmatpush1.bf16.msra.mxu0 %v242
    %326 = vmatprep.subr.bf16.mxu0 0
    %327 = vmatpush2.bf16.msra.mxu0 0
    %328 = vmatprep.subr.bf16.mxu0 0
    %329 = vmatpush2.bf16.msra.mxu0 0
    %330 = vmatprep.subr.bf16.mxu0 0
    %331 = vmatpush2.bf16.msra.mxu0 0
    %332 = vmatprep.subr.bf16.mxu0 0
    %333 = vmatpush2.bf16.msra.mxu0 0
    %334 = vmatprep.subr.bf16.mxu0 0
    %335 = vmatpush2.bf16.msra.mxu0 0
    %336 = vmatprep.subr.bf16.mxu0 0
    %337 = vmatpush2.bf16.msra.mxu0 0
    %338 = vmatprep.subr.bf16.mxu0 0
    %339 = vmatpush2.bf16.msra.mxu0 0
    %340 = vmatprep.subr.bf16.mxu0 0
    %341 = vmatpush2.bf16.msra.mxu0 0
    %342 = vmatprep.mubr.bf16.mxu0 0
    %343 = vmatmul.mubr.bf16.gmra.mxu0 %v308
    %v344 = vpop.f32.mrf.mxu0
    %v345 = vadd.f32 %v69, %v344
    %v346 = vpop.f32.mrf.mxu0
    %v347 = vadd.f32 %v73, %v346
    %v348 = vpop.f32.mrf.mxu0
    %v349 = vpop.f32.mrf.mxu0
    %350 = vdwg.mxu0
    %351 = vmatprep.subr.bf16.mxu0 0
    %352 = vmatpush1.bf16.msra.mxu0 0
    %353 = vmatprep.subr.bf16.mxu0 0
    %354 = vmatpush1.bf16.msra.mxu0 0
    %355 = vmatprep.subr.bf16.mxu0 0
    %356 = vmatpush1.bf16.msra.mxu0 0
    %357 = vmatprep.subr.bf16.mxu0 0
    %358 = vmatpush1.bf16.msra.mxu0 0
    %359 = vmatprep.subr.bf16.mxu0 0
    %360 = vmatpush1.bf16.msra.mxu0 0
    %361 = vmatprep.subr.bf16.mxu0 0
    %362 = vmatpush1.bf16.msra.mxu0 0
    %363 = vmatprep.subr.bf16.mxu0 %v261
    %364 = vmatpush1.bf16.msra.mxu0 %v260
    %365 = vmatprep.subr.bf16.mxu0 %v245
    %366 = vmatpush1.bf16.msra.mxu0 %v244
    %367 = vmatprep.subr.bf16.mxu0 0
    %368 = vmatpush2.bf16.msra.mxu0 0
    %369 = vmatprep.subr.bf16.mxu0 0
    %370 = vmatpush2.bf16.msra.mxu0 0
    %371 = vmatprep.subr.bf16.mxu0 0
    %372 = vmatpush2.bf16.msra.mxu0 0
    %373 = vmatprep.subr.bf16.mxu0 0
    %374 = vmatpush2.bf16.msra.mxu0 0
    %375 = vmatprep.subr.bf16.mxu0 0
    %376 = vmatpush2.bf16.msra.mxu0 0
    %377 = vmatprep.subr.bf16.mxu0 0
    %378 = vmatpush2.bf16.msra.mxu0 0
    %379 = vmatprep.subr.bf16.mxu0 0
    %380 = vmatpush2.bf16.msra.mxu0 0
    %381 = vmatprep.subr.bf16.mxu0 0
    %382 = vmatpush2.bf16.msra.mxu0 0
    %383 = vmatprep.mubr.bf16.mxu0 0
    %384 = vmatmul.mubr.bf16.gmra.mxu0 %v308
    %v385 = vpop.f32.mrf.mxu0
    %v386 = vadd.f32 %v77, %v385
    %v387 = vpop.f32.mrf.mxu0
    %v388 = vadd.f32 %v81, %v387
    %v389 = vpop.f32.mrf.mxu0
    %v390 = vpop.f32.mrf.mxu0
    %391 = vdwg.mxu0
    %392 = vmatprep.subr.bf16.mxu0 0
    %393 = vmatpush1.bf16.msra.mxu0 0
    %394 = vmatprep.subr.bf16.mxu0 0
    %395 = vmatpush1.bf16.msra.mxu0 0
    %396 = vmatprep.subr.bf16.mxu0 0
    %397 = vmatpush1.bf16.msra.mxu0 0
    %398 = vmatprep.subr.bf16.mxu0 0
    %399 = vmatpush1.bf16.msra.mxu0 0
    %400 = vmatprep.subr.bf16.mxu0 0
    %401 = vmatpush1.bf16.msra.mxu0 0
    %402 = vmatprep.subr.bf16.mxu0 0
    %403 = vmatpush1.bf16.msra.mxu0 0
    %404 = vmatprep.subr.bf16.mxu0 %v263
    %405 = vmatpush1.bf16.msra.mxu0 %v262
    %406 = vmatprep.subr.bf16.mxu0 %v247
    %407 = vmatpush1.bf16.msra.mxu0 %v246
    %408 = vmatprep.subr.bf16.mxu0 0
    %409 = vmatpush2.bf16.msra.mxu0 0
    %410 = vmatprep.subr.bf16.mxu0 0
    %411 = vmatpush2.bf16.msra.mxu0 0
    %412 = vmatprep.subr.bf16.mxu0 0
    %413 = vmatpush2.bf16.msra.mxu0 0
    %414 = vmatprep.subr.bf16.mxu0 0
    %415 = vmatpush2.bf16.msra.mxu0 0
    %416 = vmatprep.subr.bf16.mxu0 0
    %417 = vmatpush2.bf16.msra.mxu0 0
    %418 = vmatprep.subr.bf16.mxu0 0
    %419 = vmatpush2.bf16.msra.mxu0 0
    %420 = vmatprep.subr.bf16.mxu0 0
    %421 = vmatpush2.bf16.msra.mxu0 0
    %422 = vmatprep.subr.bf16.mxu0 0
    %423 = vmatpush2.bf16.msra.mxu0 0
    %424 = vmatprep.mubr.bf16.mxu0 0
    %425 = vmatmul.mubr.bf16.gmra.mxu0 %v308
    %v426 = vpop.f32.mrf.mxu0
    %v427 = vadd.f32 %v85, %v426
    %v428 = vpop.f32.mrf.mxu0
    %v429 = vadd.f32 %v89, %v428
    %v430 = vpop.f32.mrf.mxu0
    %v431 = vpop.f32.mrf.mxu0
    %432 = vdwg.mxu0
    %433 = vmatprep.subr.bf16.mxu0 0
    %434 = vmatpush1.bf16.msra.mxu0 0
    %435 = vmatprep.subr.bf16.mxu0 0
    %436 = vmatpush1.bf16.msra.mxu0 0
    %437 = vmatprep.subr.bf16.mxu0 0
    %438 = vmatpush1.bf16.msra.mxu0 0
    %439 = vmatprep.subr.bf16.mxu0 0
    %440 = vmatpush1.bf16.msra.mxu0 0
    %441 = vmatprep.subr.bf16.mxu0 0
    %442 = vmatpush1.bf16.msra.mxu0 0
    %443 = vmatprep.subr.bf16.mxu0 0
    %444 = vmatpush1.bf16.msra.mxu0 0
    %445 = vmatprep.subr.bf16.mxu0 %v265
    %446 = vmatpush1.bf16.msra.mxu0 %v264
    %447 = vmatprep.subr.bf16.mxu0 %v249
    %448 = vmatpush1.bf16.msra.mxu0 %v248
    %449 = vmatprep.subr.bf16.mxu0 0
    %450 = vmatpush2.bf16.msra.mxu0 0
    %451 = vmatprep.subr.bf16.mxu0 0
    %452 = vmatpush2.bf16.msra.mxu0 0
    %453 = vmatprep.subr.bf16.mxu0 0
    %454 = vmatpush2.bf16.msra.mxu0 0
    %455 = vmatprep.subr.bf16.mxu0 0
    %456 = vmatpush2.bf16.msra.mxu0 0
    %457 = vmatprep.subr.bf16.mxu0 0
    %458 = vmatpush2.bf16.msra.mxu0 0
    %459 = vmatprep.subr.bf16.mxu0 0
    %460 = vmatpush2.bf16.msra.mxu0 0
    %461 = vmatprep.subr.bf16.mxu0 0
    %462 = vmatpush2.bf16.msra.mxu0 0
    %463 = vmatprep.subr.bf16.mxu0 0
    %464 = vmatpush2.bf16.msra.mxu0 0
    %465 = vmatprep.mubr.bf16.mxu0 0
    %466 = vmatmul.mubr.bf16.gmra.mxu0 %v308
    %v467 = vpop.f32.mrf.mxu0
    %v468 = vadd.f32 %v93, %v467
    %v469 = vpop.f32.mrf.mxu0
    %v470 = vadd.f32 %v97, %v469
    %v471 = vpop.f32.mrf.mxu0
    %v472 = vpop.f32.mrf.mxu0
    %473 = vdwg.mxu0
    %474 = vmatprep.subr.bf16.mxu0 0
    %475 = vmatpush1.bf16.msra.mxu0 0
    %476 = vmatprep.subr.bf16.mxu0 0
    %477 = vmatpush1.bf16.msra.mxu0 0
    %478 = vmatprep.subr.bf16.mxu0 0
    %479 = vmatpush1.bf16.msra.mxu0 0
    %480 = vmatprep.subr.bf16.mxu0 0
    %481 = vmatpush1.bf16.msra.mxu0 0
    %482 = vmatprep.subr.bf16.mxu0 0
    %483 = vmatpush1.bf16.msra.mxu0 0
    %484 = vmatprep.subr.bf16.mxu0 0
    %485 = vmatpush1.bf16.msra.mxu0 0
    %486 = vmatprep.subr.bf16.mxu0 %v267
    %487 = vmatpush1.bf16.msra.mxu0 %v266
    %488 = vmatprep.subr.bf16.mxu0 %v251
    %489 = vmatpush1.bf16.msra.mxu0 %v250
    %490 = vmatprep.subr.bf16.mxu0 0
    %491 = vmatpush2.bf16.msra.mxu0 0
    %492 = vmatprep.subr.bf16.mxu0 0
    %493 = vmatpush2.bf16.msra.mxu0 0
    %494 = vmatprep.subr.bf16.mxu0 0
    %495 = vmatpush2.bf16.msra.mxu0 0
    %496 = vmatprep.subr.bf16.mxu0 0
    %497 = vmatpush2.bf16.msra.mxu0 0
    %498 = vmatprep.subr.bf16.mxu0 0
    %499 = vmatpush2.bf16.msra.mxu0 0
    %500 = vmatprep.subr.bf16.mxu0 0
    %501 = vmatpush2.bf16.msra.mxu0 0
    %502 = vmatprep.subr.bf16.mxu0 0
    %503 = vmatpush2.bf16.msra.mxu0 0
    %504 = vmatprep.subr.bf16.mxu0 0
    %505 = vmatpush2.bf16.msra.mxu0 0
    %506 = vmatprep.mubr.bf16.mxu0 0
    %507 = vmatmul.mubr.bf16.gmra.mxu0 %v308
    %v508 = vpop.f32.mrf.mxu0
    %v509 = vadd.f32 %v101, %v508
    %v510 = vpop.f32.mrf.mxu0
    %v511 = vadd.f32 %v105, %v510
    %v512 = vpop.f32.mrf.mxu0
    %v513 = vpop.f32.mrf.mxu0
    %514 = vdwg.mxu0
    %515 = vmatprep.subr.bf16.mxu0 0
    %516 = vmatpush1.bf16.msra.mxu0 0
    %517 = vmatprep.subr.bf16.mxu0 0
    %518 = vmatpush1.bf16.msra.mxu0 0
    %519 = vmatprep.subr.bf16.mxu0 0
    %520 = vmatpush1.bf16.msra.mxu0 0
    %521 = vmatprep.subr.bf16.mxu0 0
    %522 = vmatpush1.bf16.msra.mxu0 0
    %523 = vmatprep.subr.bf16.mxu0 0
    %524 = vmatpush1.bf16.msra.mxu0 0
    %525 = vmatprep.subr.bf16.mxu0 0
    %526 = vmatpush1.bf16.msra.mxu0 0
    %527 = vmatprep.subr.bf16.mxu0 %v269
    %528 = vmatpush1.bf16.msra.mxu0 %v268
    %529 = vmatprep.subr.bf16.mxu0 %v253
    %530 = vmatpush1.bf16.msra.mxu0 %v252
    %531 = vmatprep.subr.bf16.mxu0 0
    %532 = vmatpush2.bf16.msra.mxu0 0
    %533 = vmatprep.subr.bf16.mxu0 0
    %534 = vmatpush2.bf16.msra.mxu0 0
    %535 = vmatprep.subr.bf16.mxu0 0
    %536 = vmatpush2.bf16.msra.mxu0 0
    %537 = vmatprep.subr.bf16.mxu0 0
    %538 = vmatpush2.bf16.msra.mxu0 0
    %539 = vmatprep.subr.bf16.mxu0 0
    %540 = vmatpush2.bf16.msra.mxu0 0
    %541 = vmatprep.subr.bf16.mxu0 0
    %542 = vmatpush2.bf16.msra.mxu0 0
    %543 = vmatprep.subr.bf16.mxu0 0
    %544 = vmatpush2.bf16.msra.mxu0 0
    %545 = vmatprep.subr.bf16.mxu0 0
    %546 = vmatpush2.bf16.msra.mxu0 0
    %547 = vmatprep.mubr.bf16.mxu0 0
    %548 = vmatmul.mubr.bf16.gmra.mxu0 %v308
    %v549 = vpop.f32.mrf.mxu0
    %v550 = vadd.f32 %v109, %v549
    %v551 = vpop.f32.mrf.mxu0
    %v552 = vadd.f32 %v113, %v551
    %v553 = vpop.f32.mrf.mxu0
    %v554 = vpop.f32.mrf.mxu0
    %555 = vdwg.mxu0
    %556 = vmatprep.subr.bf16.mxu0 0
    %557 = vmatpush1.bf16.msra.mxu0 0
    %558 = vmatprep.subr.bf16.mxu0 0
    %559 = vmatpush1.bf16.msra.mxu0 0
    %560 = vmatprep.subr.bf16.mxu0 0
    %561 = vmatpush1.bf16.msra.mxu0 0
    %562 = vmatprep.subr.bf16.mxu0 0
    %563 = vmatpush1.bf16.msra.mxu0 0
    %564 = vmatprep.subr.bf16.mxu0 0
    %565 = vmatpush1.bf16.msra.mxu0 0
    %566 = vmatprep.subr.bf16.mxu0 0
    %567 = vmatpush1.bf16.msra.mxu0 0
    %568 = vmatprep.subr.bf16.mxu0 %v271
    %569 = vmatpush1.bf16.msra.mxu0 %v270
    %570 = vmatprep.subr.bf16.mxu0 %v255
    %571 = vmatpush1.bf16.msra.mxu0 %v254
    %572 = vmatprep.subr.bf16.mxu0 0
    %573 = vmatpush2.bf16.msra.mxu0 0
    %574 = vmatprep.subr.bf16.mxu0 0
    %575 = vmatpush2.bf16.msra.mxu0 0
    %576 = vmatprep.subr.bf16.mxu0 0
    %577 = vmatpush2.bf16.msra.mxu0 0
    %578 = vmatprep.subr.bf16.mxu0 0
    %579 = vmatpush2.bf16.msra.mxu0 0
    %580 = vmatprep.subr.bf16.mxu0 0
    %581 = vmatpush2.bf16.msra.mxu0 0
    %582 = vmatprep.subr.bf16.mxu0 0
    %583 = vmatpush2.bf16.msra.mxu0 0
    %584 = vmatprep.subr.bf16.mxu0 0
    %585 = vmatpush2.bf16.msra.mxu0 0
    %586 = vmatprep.subr.bf16.mxu0 0
    %587 = vmatpush2.bf16.msra.mxu0 0
    %588 = vmatprep.mubr.bf16.mxu0 0
    %589 = vmatmul.mubr.bf16.gmra.mxu0 %v308
    %v590 = vpop.f32.mrf.mxu0
    %v591 = vadd.f32 %v117, %v590
    %v592 = vpop.f32.mrf.mxu0
    %v593 = vadd.f32 %v121, %v592
    %v594 = vpop.f32.mrf.mxu0
    %v595 = vpop.f32.mrf.mxu0
    %596 = vdwg.mxu0
    %597 = vmatprep.subr.bf16.mxu0 0
    %598 = vmatpush1.bf16.msra.mxu0 0
    %599 = vmatprep.subr.bf16.mxu0 0
    %600 = vmatpush1.bf16.msra.mxu0 0
    %601 = vmatprep.subr.bf16.mxu0 0
    %602 = vmatpush1.bf16.msra.mxu0 0
    %603 = vmatprep.subr.bf16.mxu0 0
    %604 = vmatpush1.bf16.msra.mxu0 0
    %605 = vmatprep.subr.bf16.mxu0 0
    %606 = vmatpush1.bf16.msra.mxu0 0
    %607 = vmatprep.subr.bf16.mxu0 0
    %608 = vmatpush1.bf16.msra.mxu0 0
    %609 = vmatprep.subr.bf16.mxu0 %v273
    %610 = vmatpush1.bf16.msra.mxu0 %v272
    %611 = vmatprep.subr.bf16.mxu0 %v257
    %612 = vmatpush1.bf16.msra.mxu0 %v256
    %613 = vmatprep.subr.bf16.mxu0 0
    %614 = vmatpush2.bf16.msra.mxu0 0
    %615 = vmatprep.subr.bf16.mxu0 0
    %616 = vmatpush2.bf16.msra.mxu0 0
    %617 = vmatprep.subr.bf16.mxu0 0
    %618 = vmatpush2.bf16.msra.mxu0 0
    %619 = vmatprep.subr.bf16.mxu0 0
    %620 = vmatpush2.bf16.msra.mxu0 0
    %621 = vmatprep.subr.bf16.mxu0 0
    %622 = vmatpush2.bf16.msra.mxu0 0
    %623 = vmatprep.subr.bf16.mxu0 0
    %624 = vmatpush2.bf16.msra.mxu0 0
    %625 = vmatprep.subr.bf16.mxu0 0
    %626 = vmatpush2.bf16.msra.mxu0 0
    %627 = vmatprep.subr.bf16.mxu0 0
    %628 = vmatpush2.bf16.msra.mxu0 0
    %629 = vmatprep.mubr.bf16.mxu0 0
    %630 = vmatmul.mubr.bf16.gmra.mxu0 %v308
    %v631 = vpop.f32.mrf.mxu0
    %v632 = vadd.f32 %v125, %v631
    %v633 = vpop.f32.mrf.mxu0
    %v634 = vadd.f32 %v129, %v633
    %v635 = vpop.f32.mrf.mxu0
    %v636 = vpop.f32.mrf.mxu0
    %637 = vdwg.mxu0
    %v638 = vpack.c.bf16 %v345, %v345
    %v639 = vpack.c.bf16 %v347, %v347
    %v640 = vpack.c.bf16 %v386, %v386
    %v641 = vpack.c.bf16 %v388, %v388
    %v642 = vpack.c.bf16 %v427, %v427
    %v643 = vpack.c.bf16 %v429, %v429
    %v644 = vpack.c.bf16 %v468, %v468
    %v645 = vpack.c.bf16 %v470, %v470
    %v646 = vpack.c.bf16 %v509, %v509
    %v647 = vpack.c.bf16 %v511, %v511
    %v648 = vpack.c.bf16 %v550, %v550
    %v649 = vpack.c.bf16 %v552, %v552
    %v650 = vpack.c.bf16 %v591, %v591
    %v651 = vpack.c.bf16 %v593, %v593
    %v652 = vpack.c.bf16 %v632, %v632
    %v653 = vpack.c.bf16 %v634, %v634
    %v670 = vcombine.low %v638, %v639
    %v671 = vcombine.low %v640, %v641
    %v672 = vcombine.low %v642, %v643
    %v673 = vcombine.low %v644, %v645
    %v675 = vunpack.c.l.s4 1966171168
    %v676 = vunpack.c.0.s8 %v675
    %v677 = vlaneseq
    %v678 = vshrl.u32 %v677, 7
    %v679 = vsub.s32 %v676, %v678
    %v680 = vrot.slane %v670, %v679
    %v682 = vunpack.c.l.s4 1966171168
    %v683 = vunpack.c.0.s8 %v682
    %v684 = vlaneseq
    %v685 = vshrl.u32 %v684, 7
    %v686 = vsub.s32 %v683, %v685
    %v687 = vrot.slane %v671, %v686
    %v689 = vunpack.c.l.s4 1966171168
    %v690 = vunpack.c.0.s8 %v689
    %v691 = vlaneseq
    %v692 = vshrl.u32 %v691, 7
    %v693 = vsub.s32 %v690, %v692
    %v694 = vrot.slane %v672, %v693
    %v696 = vunpack.c.l.s4 1966171168
    %v697 = vunpack.c.0.s8 %v696
    %v698 = vlaneseq
    %v699 = vshrl.u32 %v698, 7
    %v700 = vsub.s32 %v697, %v699
    %v701 = vrot.slane %v673, %v700
    %v702 = vcombine.low %v680, %v687
    %v703 = vcombine.low %v694, %v701
    %v705 = vunpack.c.l.s4 1966171168
    %v706 = vunpack.c.0.s8 %v705
    %v707 = vlaneseq
    %v708 = vshrl.u32 %v707, 7
    %v709 = vsub.s32 %v706, %v708
    %v710 = vrot.slane %v702, %v709
    %v712 = vunpack.c.l.s4 1966171168
    %v713 = vunpack.c.0.s8 %v712
    %v714 = vlaneseq
    %v715 = vshrl.u32 %v714, 7
    %v716 = vsub.s32 %v713, %v715
    %v717 = vrot.slane %v703, %v716
    %v718 = vcombine.low %v710, %v717
    %v719 = vcombine.low %v646, %v647
    %v720 = vcombine.low %v648, %v649
    %v721 = vcombine.low %v650, %v651
    %v722 = vcombine.low %v652, %v653
    %v724 = vunpack.c.l.s4 1966171168
    %v725 = vunpack.c.0.s8 %v724
    %v726 = vlaneseq
    %v727 = vshrl.u32 %v726, 7
    %v728 = vsub.s32 %v725, %v727
    %v729 = vrot.slane %v719, %v728
    %v731 = vunpack.c.l.s4 1966171168
    %v732 = vunpack.c.0.s8 %v731
    %v733 = vlaneseq
    %v734 = vshrl.u32 %v733, 7
    %v735 = vsub.s32 %v732, %v734
    %v736 = vrot.slane %v720, %v735
    %v738 = vunpack.c.l.s4 1966171168
    %v739 = vunpack.c.0.s8 %v738
    %v740 = vlaneseq
    %v741 = vshrl.u32 %v740, 7
    %v742 = vsub.s32 %v739, %v741
    %v743 = vrot.slane %v721, %v742
    %v745 = vunpack.c.l.s4 1966171168
    %v746 = vunpack.c.0.s8 %v745
    %v747 = vlaneseq
    %v748 = vshrl.u32 %v747, 7
    %v749 = vsub.s32 %v746, %v748
    %v750 = vrot.slane %v722, %v749
    %v751 = vcombine.low %v729, %v736
    %v752 = vcombine.low %v743, %v750
    %v754 = vunpack.c.l.s4 1966171168
    %v755 = vunpack.c.0.s8 %v754
    %v756 = vlaneseq
    %v757 = vshrl.u32 %v756, 7
    %v758 = vsub.s32 %v755, %v757
    %v759 = vrot.slane %v751, %v758
    %v761 = vunpack.c.l.s4 1966171168
    %v762 = vunpack.c.0.s8 %v761
    %v763 = vlaneseq
    %v764 = vshrl.u32 %v763, 7
    %v765 = vsub.s32 %v762, %v764
    %v766 = vrot.slane %v752, %v765
    %v767 = vcombine.low %v759, %v766
    %770 = vst [vmem:[%s3] sm:$0xff] %v718
    %771 = vst [vmem:[%s3 + $0x8] sm:$0xff] %v767
    // Predicated region
    $region18: #{generator_forward_pallas.4} parent=1 // pred_check
      _
    $region19: #{generator_forward_pallas.4} parent=1 // pred_check_branch
      %773 = sbr.rel (0) target = $region21
    $region20: #{generator_forward_pallas.4} parent=1 // pred_region
      _
    $region21: #{generator_forward_pallas.4} parent=1 // pred_fallthru
      _
    // Predicated region
    $region22: #{generator_forward_pallas.4} parent=1 // pred_check
      _
    $region23: #{generator_forward_pallas.4} parent=1 // pred_check_branch
      %775 = sbr.rel (0) target = $region25
    $region24: #{generator_forward_pallas.4} parent=1 // pred_region
      _
    $region25: #{generator_forward_pallas.4} parent=1 // pred_fallthru
      _
    %776 = vsyncpa [#allocation3], 1

// kernel: generator_forward_pallas.6
$region0: #{generator_forward_pallas.6}
  #allocation0 [shape = 'u32[]', space=smem, size = 0x4, offset = 0x4, fixed_abs, tag = 'smem constant byte address 0x4 - core index']
  #allocation1 [shape = 'u32[144,128]{1,0:T(1,128)}', space=vmem, size = 0x12000, scoped, tag = 'internal scratch']
  %s0 = inlined_call_operand.vmem [shape: bf16[2,1,6,6,128], index: 0, kind: input, shape index: {}]
  %s1 = inlined_call_operand.vmem [shape: f32[2,128], index: 1, kind: input, shape index: {}]
  %s2 = inlined_call_operand.hbm [shape: bf16[4,512,128], index: 2, kind: input, shape index: {}]
  %s3 = inlined_call_operand.vmem [shape: f32[1,128], index: 3, kind: input, shape index: {}]
  %s4 = inlined_call_operand.vmem [shape: bf16[2,4,2,4,256], index: 4, kind: output, shape index: {0}]
  %s5 = inlined_call_operand.vmem [shape: f32[2,128], index: 5, kind: output, shape index: {1}]
  %6 = xla_tuple %s4, %s5
  %s7 = sld [smem:[#allocation0]]
  $region42: #{generator_forward_pallas.6} parent=0
    _
  %s9 = ssub.s32 1, %s7
  %s10 = scalar_select 0, %s9, %s7
  $region1: #{generator_forward_pallas.6} parent=0
    #allocation2 [shape = 'u8[524288]{0}', space=vmem, size = 0x80000, scoped, tag = 'input window, operand 2, single buffered']
    #allocation3 [shape = 's32[1]{0}', space=sflag, size = 0x4, scoped, tag = 'scoped memory for generator_forward_pallas.6']
    %11 = vsyncpa [#allocation3], 0
    // Predicated region
    $region2: #{generator_forward_pallas.6} parent=1 // pred_check
      _
    $region3: #{generator_forward_pallas.6} parent=1 // pred_check_branch
      %13 = sbr.rel (0) target = $region5
    $region4: #{generator_forward_pallas.6} parent=1 // pred_region
      _
    $region5: #{generator_forward_pallas.6} parent=1 // pred_fallthru
      _
    // Predicated region
    $region6: #{generator_forward_pallas.6} parent=1 // pred_check
      _
    $region7: #{generator_forward_pallas.6} parent=1 // pred_check_branch
      %15 = sbr.rel (0) target = $region9
    $region8: #{generator_forward_pallas.6} parent=1 // pred_region
      _
    $region9: #{generator_forward_pallas.6} parent=1 // pred_fallthru
      _
    // Predicated region
    $region10: #{generator_forward_pallas.6} parent=1 // pred_check
      _
    $region11: #{generator_forward_pallas.6} parent=1 // pred_check_branch
      %17 = sbr.rel (0) target = $region13
    $region12: #{generator_forward_pallas.6} parent=1 // pred_region
      %s19 = ssub.s32 16384, 16384
      %20 = vsyncadd [#allocation3], %s19
      %s21 = sshll.u32 [#allocation2], 4
      %s22 = int_to_ptr.vmem [resolvable:$true] %s21
      %27 = dma.hbm_to_vmem [thread:$0]  %s2, 16384, %s22, [#allocation3], 64, 64, 4
    $region13: #{generator_forward_pallas.6} parent=1 // pred_fallthru
      _
    // Predicated region
    $region14: #{generator_forward_pallas.6} parent=1 // pred_check
      _
    $region15: #{generator_forward_pallas.6} parent=1 // pred_check_branch
      %29 = sbr.rel (0) target = $region17
    $region16: #{generator_forward_pallas.6} parent=1 // pred_region
      _
    $region17: #{generator_forward_pallas.6} parent=1 // pred_fallthru
      _
    // Predicated region
    $region18: #{generator_forward_pallas.6} parent=1 // pred_check
      _
    $region19: #{generator_forward_pallas.6} parent=1 // pred_check_branch
      %31 = sbr.rel (0) target = $region21
    $region20: #{generator_forward_pallas.6} parent=1 // pred_region
      %32 = dma.done [#allocation3], 16384
    $region21: #{generator_forward_pallas.6} parent=1 // pred_fallthru
      _
    %v34 = vld [vmem:[%s1] sm:$0x3]
    %v35 = vld [vmem:[%s0] sm:$0x7]
    %v36 = vld [vmem:[%s0 + $0x4] sm:$0x7]
    %v37 = vld [vmem:[%s0 + $0x8] sm:$0x7]
    %v38 = vld [vmem:[%s0 + $0xc] sm:$0x7]
    %v39 = vld [vmem:[%s0 + $0x10] sm:$0x7]
    %v40 = vld [vmem:[%s0 + $0x14] sm:$0x7]
    %v41 = vld [vmem:[%s0 + $0x18] sm:$0x7]
    %v42 = vld [vmem:[%s0 + $0x1c] sm:$0x7]
    %v43 = vld [vmem:[%s0 + $0x20] sm:$0x7]
    %v44 = vld [vmem:[%s0 + $0x24] sm:$0x7]
    %v45 = vld [vmem:[%s0 + $0x28] sm:$0x7]
    %v46 = vld [vmem:[%s0 + $0x2c] sm:$0x7]
    %v47 = vunpack.c.l.bf16 %v35
    %v48 = vunpack.c.l.bf16 %v36
    %v49 = vunpack.c.l.bf16 %v37
    %v50 = vunpack.c.l.bf16 %v38
    %v51 = vunpack.c.l.bf16 %v39
    %v52 = vunpack.c.l.bf16 %v40
    %v53 = vunpack.c.l.bf16 %v41
    %v54 = vunpack.c.l.bf16 %v42
    %v55 = vunpack.c.l.bf16 %v43
    %v56 = vunpack.c.l.bf16 %v44
    %v57 = vunpack.c.l.bf16 %v45
    %v58 = vunpack.c.l.bf16 %v46
    %v59 = vlaneseq
    %v60 = vshrl.u32 %v59, 7
    %v61 = vsub.s32 0, %v60
    %v62 = vrot.slane %v34, %v61
    %v63 = vmul.f32 %v47, %v62
    %v64 = vmul.f32 %v48, %v62
    %v65 = vmul.f32 %v49, %v62
    %v66 = vmul.f32 %v50, %v62
    %v67 = vmul.f32 %v51, %v62
    %v68 = vmul.f32 %v52, %v62
    %v69 = vmul.f32 %v53, %v62
    %v70 = vmul.f32 %v54, %v62
    %v71 = vmul.f32 %v55, %v62
    %v72 = vmul.f32 %v56, %v62
    %v73 = vmul.f32 %v57, %v62
    %v74 = vmul.f32 %v58, %v62
    %v75 = vlaneseq
    %v76 = vshrl.u32 %v75, 7
    %v77 = vsub.s32 1, %v76
    %v78 = vrot.slane %v34, %v77
    %v79 = vadd.f32 %v63, %v78
    %v80 = vadd.f32 %v64, %v78
    %v81 = vadd.f32 %v65, %v78
    %v82 = vadd.f32 %v66, %v78
    %v83 = vadd.f32 %v67, %v78
    %v84 = vadd.f32 %v68, %v78
    %v85 = vadd.f32 %v69, %v78
    %v86 = vadd.f32 %v70, %v78
    %v87 = vadd.f32 %v71, %v78
    %v88 = vadd.f32 %v72, %v78
    %v89 = vadd.f32 %v73, %v78
    %v90 = vadd.f32 %v74, %v78
    %v91 = vlaneseq
    %v92 = vshrl.u32 %v91, 7
    %p93 = scmp.gt.s32.totalorder 0, 0
    %s94 = scalar_select %p93, 1, 0
    %v95 = vstv %s94
    %vm96 = vcmp.eq.s32.totalorder %v95, 1
    %p97 = scmp.lt.s32.totalorder 0, 0
    %s98 = scalar_select %p97, 1, 0
    %v99 = vstv %s98
    %vm100 = vcmp.eq.s32.totalorder %v99, 1
    %vm101 = vcmp.ge.s32.totalorder %v92, 1
    %v102 = vsel %vm96, 1, 0
    %v103 = vsel %vm100, 1, 0
    %vm104 = vcmp.eq.s32.totalorder %v102, 1
    %vm105 = vcmp.eq.s32.totalorder %v103, 1
    %v106 = vsel %vm101, 1, 0
    %vm107 = vcmp.eq.s32.totalorder %v106, 1
    %vm108 = vmand %vm104, %vm107
    %vm109 = vmand 1, %vm107
    %vm110 = vmand %vm105, %vm107
    %vm111 = vcmp.le.s32.totalorder %v92, 4
    %v112 = vsel %vm111, 1, 0
    %vm113 = vcmp.eq.s32.totalorder %v112, 1
    %vm114 = vmand %vm108, %vm113
    %vm115 = vmand %vm109, %vm113
    %vm116 = vmand %vm110, %vm113
    %v117 = vsel %vm114, 1, 0
    %v118 = vsel %vm115, 1, 0
    %v119 = vsel %vm116, 1, 0
    %vm120 = vcmp.eq.s32.totalorder %v117, 1
    %vm121 = vcmp.eq.s32.totalorder %v118, 1
    %vm122 = vcmp.eq.s32.totalorder %v119, 1
    %v123 = vsel %vm120, %v79, 0.0
    %v124 = vsel %vm121, %v80, 0.0
    %v125 = vsel %vm121, %v81, 0.0
    %v126 = vsel %vm121, %v82, 0.0
    %v127 = vsel %vm121, %v83, 0.0
    %v128 = vsel %vm122, %v84, 0.0
    %v129 = vsel %vm120, %v85, 0.0
    %v130 = vsel %vm121, %v86, 0.0
    %v131 = vsel %vm121, %v87, 0.0
    %v132 = vsel %vm121, %v88, 0.0
    %v133 = vsel %vm121, %v89, 0.0
    %v134 = vsel %vm122, %v90, 0.0
    %v135 = vpack.c.bf16 %v123, %v123
    %v136 = vpack.c.bf16 %v124, %v124
    %v137 = vpack.c.bf16 %v125, %v125
    %v138 = vpack.c.bf16 %v126, %v126
    %v139 = vpack.c.bf16 %v127, %v127
    %v140 = vpack.c.bf16 %v128, %v128
    %v141 = vpack.c.bf16 %v129, %v129
    %v142 = vpack.c.bf16 %v130, %v130
    %v143 = vpack.c.bf16 %v131, %v131
    %v144 = vpack.c.bf16 %v132, %v132
    %v145 = vpack.c.bf16 %v133, %v133
    %v146 = vpack.c.bf16 %v134, %v134
    %v148 = vshrl.u32 %v135, 16
    %v150 = vshll.u32 %v135, 16
    %v152 = vrot.slane %v150, 1
    %v153 = vor.u32 %v148, %v152
    %v155 = vshrl.u32 %v136, 16
    %v157 = vshll.u32 %v136, 16
    %v159 = vrot.slane %v157, 1
    %v160 = vor.u32 %v155, %v159
    %v162 = vshrl.u32 %v137, 16
    %v164 = vshll.u32 %v137, 16
    %v166 = vrot.slane %v164, 1
    %v167 = vor.u32 %v162, %v166
    %v169 = vshrl.u32 %v138, 16
    %v171 = vshll.u32 %v138, 16
    %v173 = vrot.slane %v171, 1
    %v174 = vor.u32 %v169, %v173
    %v176 = vshrl.u32 %v141, 16
    %v178 = vshll.u32 %v141, 16
    %v180 = vrot.slane %v178, 1
    %v181 = vor.u32 %v176, %v180
    %v183 = vshrl.u32 %v142, 16
    %v185 = vshll.u32 %v142, 16
    %v187 = vrot.slane %v185, 1
    %v188 = vor.u32 %v183, %v187
    %v190 = vshrl.u32 %v143, 16
    %v192 = vshll.u32 %v143, 16
    %v194 = vrot.slane %v192, 1
    %v195 = vor.u32 %v190, %v194
    %v197 = vshrl.u32 %v144, 16
    %v199 = vshll.u32 %v144, 16
    %v201 = vrot.slane %v199, 1
    %v202 = vor.u32 %v197, %v201
    %v204 = vshrl.u32 %v139, 16
    %v206 = vshll.u32 %v139, 16
    %v208 = vrot.slane %v206, 1
    %v209 = vor.u32 %v204, %v208
    %v211 = vshrl.u32 %v145, 16
    %v213 = vshll.u32 %v145, 16
    %v215 = vrot.slane %v213, 1
    %v216 = vor.u32 %v211, %v215
    %v227 = vcombine.low %v135, %v153
    %v228 = vcombine.low %v136, %v160
    %v230 = vunpack.c.l.s4 1983009808
    %v231 = vunpack.c.0.s8 %v230
    %v232 = vlaneseq
    %v233 = vshrl.u32 %v232, 7
    %v234 = vsub.s32 %v231, %v233
    %v235 = vrot.slane %v227, %v234
    %v237 = vunpack.c.l.s4 1983009808
    %v238 = vunpack.c.0.s8 %v237
    %v239 = vlaneseq
    %v240 = vshrl.u32 %v239, 7
    %v241 = vsub.s32 %v238, %v240
    %v242 = vrot.slane %v228, %v241
    %v243 = vcombine.low %v235, %v242
    %v244 = vcombine.low %v137, %v167
    %v246 = vunpack.c.l.s4 1983009808
    %v247 = vunpack.c.0.s8 %v246
    %v248 = vlaneseq
    %v249 = vshrl.u32 %v248, 7
    %v250 = vsub.s32 %v247, %v249
    %v251 = vrot.slane %v244, %v250
    %v252 = vcombine.low %v242, %v251
    %v253 = vcombine.low %v138, %v174
    %v255 = vunpack.c.l.s4 1983009808
    %v256 = vunpack.c.0.s8 %v255
    %v257 = vlaneseq
    %v258 = vshrl.u32 %v257, 7
    %v259 = vsub.s32 %v256, %v258
    %v260 = vrot.slane %v253, %v259
    %v261 = vcombine.low %v251, %v260
    %v262 = vcombine.low %v139, %v209
    %v264 = vunpack.c.l.s4 1983009808
    %v265 = vunpack.c.0.s8 %v264
    %v266 = vlaneseq
    %v267 = vshrl.u32 %v266, 7
    %v268 = vsub.s32 %v265, %v267
    %v269 = vrot.slane %v262, %v268
    %v270 = vcombine.low %v260, %v269
    %v271 = vcombine.low %v141, %v181
    %v272 = vcombine.low %v142, %v188
    %v274 = vunpack.c.l.s4 1983009808
    %v275 = vunpack.c.0.s8 %v274
    %v276 = vlaneseq
    %v277 = vshrl.u32 %v276, 7
    %v278 = vsub.s32 %v275, %v277
    %v279 = vrot.slane %v271, %v278
    %v281 = vunpack.c.l.s4 1983009808
    %v282 = vunpack.c.0.s8 %v281
    %v283 = vlaneseq
    %v284 = vshrl.u32 %v283, 7
    %v285 = vsub.s32 %v282, %v284
    %v286 = vrot.slane %v272, %v285
    %v287 = vcombine.low %v279, %v286
    %v288 = vcombine.low %v143, %v195
    %v290 = vunpack.c.l.s4 1983009808
    %v291 = vunpack.c.0.s8 %v290
    %v292 = vlaneseq
    %v293 = vshrl.u32 %v292, 7
    %v294 = vsub.s32 %v291, %v293
    %v295 = vrot.slane %v288, %v294
    %v296 = vcombine.low %v286, %v295
    %v297 = vcombine.low %v144, %v202
    %v299 = vunpack.c.l.s4 1983009808
    %v300 = vunpack.c.0.s8 %v299
    %v301 = vlaneseq
    %v302 = vshrl.u32 %v301, 7
    %v303 = vsub.s32 %v300, %v302
    %v304 = vrot.slane %v297, %v303
    %v305 = vcombine.low %v295, %v304
    %v306 = vcombine.low %v145, %v216
    %v308 = vunpack.c.l.s4 1983009808
    %v309 = vunpack.c.0.s8 %v308
    %v310 = vlaneseq
    %v311 = vshrl.u32 %v310, 7
    %v312 = vsub.s32 %v309, %v311
    %v313 = vrot.slane %v306, %v312
    %v314 = vcombine.low %v304, %v313
    %v315 = vld [vmem:[#allocation2] sm:$0xf]
    %v316 = vld [vmem:[#allocation2 + $0x4] sm:$0xf]
    %v317 = vld [vmem:[#allocation2 + $0x8] sm:$0xf]
    %v318 = vld [vmem:[#allocation2 + $0xc] sm:$0xf]
    %v319 = vld [vmem:[#allocation2 + $0x10] sm:$0xf]
    %v320 = vld [vmem:[#allocation2 + $0x14] sm:$0xf]
    %v321 = vld [vmem:[#allocation2 + $0x18] sm:$0xf]
    %v322 = vld [vmem:[#allocation2 + $0x1c] sm:$0xf]
    %v323 = vld [vmem:[#allocation2 + $0x20] sm:$0xf]
    %v324 = vld [vmem:[#allocation2 + $0x24] sm:$0xf]
    %v325 = vld [vmem:[#allocation2 + $0x28] sm:$0xf]
    %v326 = vld [vmem:[#allocation2 + $0x2c] sm:$0xf]
    %v327 = vld [vmem:[#allocation2 + $0x30] sm:$0xf]
    %v328 = vld [vmem:[#allocation2 + $0x34] sm:$0xf]
    %v329 = vld [vmem:[#allocation2 + $0x38] sm:$0xf]
    %v330 = vld [vmem:[#allocation2 + $0x3c] sm:$0xf]
    %v331 = vld [vmem:[#allocation2 + $0x40] sm:$0xf]
    %v332 = vld [vmem:[#allocation2 + $0x44] sm:$0xf]
    %v333 = vld [vmem:[#allocation2 + $0x48] sm:$0xf]
    %v334 = vld [vmem:[#allocation2 + $0x4c] sm:$0xf]
    %v335 = vld [vmem:[#allocation2 + $0x50] sm:$0xf]
    %v336 = vld [vmem:[#allocation2 + $0x54] sm:$0xf]
    %v337 = vld [vmem:[#allocation2 + $0x58] sm:$0xf]
    %v338 = vld [vmem:[#allocation2 + $0x5c] sm:$0xf]
    %v339 = vld [vmem:[#allocation2 + $0x60] sm:$0xf]
    %v340 = vld [vmem:[#allocation2 + $0x64] sm:$0xf]
    %v341 = vld [vmem:[#allocation2 + $0x68] sm:$0xf]
    %v342 = vld [vmem:[#allocation2 + $0x6c] sm:$0xf]
    %v343 = vld [vmem:[#allocation2 + $0x70] sm:$0xf]
    %v344 = vld [vmem:[#allocation2 + $0x74] sm:$0xf]
    %v345 = vld [vmem:[#allocation2 + $0x78] sm:$0xf]
    %v346 = vld [vmem:[#allocation2 + $0x7c] sm:$0xf]
    %v347 = vld [vmem:[#allocation2 + $0x80] sm:$0xf]
    %v348 = vld [vmem:[#allocation2 + $0x84] sm:$0xf]
    %v349 = vld [vmem:[#allocation2 + $0x88] sm:$0xf]
    %v350 = vld [vmem:[#allocation2 + $0x8c] sm:$0xf]
    %v351 = vld [vmem:[#allocation2 + $0x90] sm:$0xf]
    %v352 = vld [vmem:[#allocation2 + $0x94] sm:$0xf]
    %v353 = vld [vmem:[#allocation2 + $0x98] sm:$0xf]
    %v354 = vld [vmem:[#allocation2 + $0x9c] sm:$0xf]
    %v355 = vld [vmem:[#allocation2 + $0xa0] sm:$0xf]
    %v356 = vld [vmem:[#allocation2 + $0xa4] sm:$0xf]
    %v357 = vld [vmem:[#allocation2 + $0xa8] sm:$0xf]
    %v358 = vld [vmem:[#allocation2 + $0xac] sm:$0xf]
    %v359 = vld [vmem:[#allocation2 + $0xb0] sm:$0xf]
    %v360 = vld [vmem:[#allocation2 + $0xb4] sm:$0xf]
    %v361 = vld [vmem:[#allocation2 + $0xb8] sm:$0xf]
    %v362 = vld [vmem:[#allocation2 + $0xbc] sm:$0xf]
    %v363 = vld [vmem:[#allocation2 + $0xc0] sm:$0xf]
    %v364 = vld [vmem:[#allocation2 + $0xc4] sm:$0xf]
    %v365 = vld [vmem:[#allocation2 + $0xc8] sm:$0xf]
    %v366 = vld [vmem:[#allocation2 + $0xcc] sm:$0xf]
    %v367 = vld [vmem:[#allocation2 + $0xd0] sm:$0xf]
    %v368 = vld [vmem:[#allocation2 + $0xd4] sm:$0xf]
    %v369 = vld [vmem:[#allocation2 + $0xd8] sm:$0xf]
    %v370 = vld [vmem:[#allocation2 + $0xdc] sm:$0xf]
    %v371 = vld [vmem:[#allocation2 + $0xe0] sm:$0xf]
    %v372 = vld [vmem:[#allocation2 + $0xe4] sm:$0xf]
    %v373 = vld [vmem:[#allocation2 + $0xe8] sm:$0xf]
    %v374 = vld [vmem:[#allocation2 + $0xec] sm:$0xf]
    %v375 = vld [vmem:[#allocation2 + $0xf0] sm:$0xf]
    %v376 = vld [vmem:[#allocation2 + $0xf4] sm:$0xf]
    %v377 = vld [vmem:[#allocation2 + $0xf8] sm:$0xf]
    %v378 = vld [vmem:[#allocation2 + $0xfc] sm:$0xf]
    %v379 = vld [vmem:[%s3] sm:$0x1]
    %v381 = vlaneseq
    %v382 = vshrl.u32 %v381, 7
    %v383 = vsub.s32 0, %v382
    %v384 = vrot.slane %v379, %v383
    %v386 = vcombine.low %v243, %v252
    %v387 = vcombine.high %v243, %v252
    %v388 = vcombine.low %v261, %v270
    %v389 = vcombine.high %v261, %v270
    %v391 = vunpack.c.l.s4 1983009808
    %v392 = vunpack.c.0.s8 %v391
    %v393 = vlaneseq
    %v394 = vshrl.u32 %v393, 7
    %v395 = vsub.s32 %v392, %v394
    %v396 = vrot.slane %v386, %v395
    %v398 = vunpack.c.l.s4 1983009808
    %v399 = vunpack.c.0.s8 %v398
    %v400 = vlaneseq
    %v401 = vshrl.u32 %v400, 7
    %v402 = vsub.s32 %v399, %v401
    %v403 = vrot.slane %v387, %v402
    %v405 = vunpack.c.l.s4 1983009808
    %v406 = vunpack.c.0.s8 %v405
    %v407 = vlaneseq
    %v408 = vshrl.u32 %v407, 7
    %v409 = vsub.s32 %v406, %v408
    %v410 = vrot.slane %v388, %v409
    %v412 = vunpack.c.l.s4 1983009808
    %v413 = vunpack.c.0.s8 %v412
    %v414 = vlaneseq
    %v415 = vshrl.u32 %v414, 7
    %v416 = vsub.s32 %v413, %v415
    %v417 = vrot.slane %v389, %v416
    %v418 = vcombine.low %v396, %v410
    %v419 = vcombine.high %v396, %v410
    %v420 = vcombine.low %v403, %v417
    %v421 = vcombine.high %v403, %v417
    %v422 = vcombine.low %v287, %v296
    %v423 = vcombine.high %v287, %v296
    %v424 = vcombine.low %v305, %v314
    %v425 = vcombine.high %v305, %v314
    %v427 = vunpack.c.l.s4 1983009808
    %v428 = vunpack.c.0.s8 %v427
    %v429 = vlaneseq
    %v430 = vshrl.u32 %v429, 7
    %v431 = vsub.s32 %v428, %v430
    %v432 = vrot.slane %v422, %v431
    %v434 = vunpack.c.l.s4 1983009808
    %v435 = vunpack.c.0.s8 %v434
    %v436 = vlaneseq
    %v437 = vshrl.u32 %v436, 7
    %v438 = vsub.s32 %v435, %v437
    %v439 = vrot.slane %v423, %v438
    %v441 = vunpack.c.l.s4 1983009808
    %v442 = vunpack.c.0.s8 %v441
    %v443 = vlaneseq
    %v444 = vshrl.u32 %v443, 7
    %v445 = vsub.s32 %v442, %v444
    %v446 = vrot.slane %v424, %v445
    %v448 = vunpack.c.l.s4 1983009808
    %v449 = vunpack.c.0.s8 %v448
    %v450 = vlaneseq
    %v451 = vshrl.u32 %v450, 7
    %v452 = vsub.s32 %v449, %v451
    %v453 = vrot.slane %v425, %v452
    %v454 = vcombine.low %v432, %v446
    %v455 = vcombine.high %v432, %v446
    %v456 = vcombine.low %v439, %v453
    %v457 = vcombine.high %v439, %v453
    %v530 = vunpack.c.l.b16 %v315
    %v531 = vunpack.c.l.b16 %v316
    %v532 = vunpack.c.l.b16 %v317
    %v533 = vunpack.c.l.b16 %v318
    %v534 = vunpack.c.l.b16 %v319
    %v535 = vunpack.c.l.b16 %v320
    %v536 = vunpack.c.l.b16 %v321
    %v537 = vunpack.c.l.b16 %v322
    %v538 = vunpack.c.l.b16 %v323
    %v539 = vunpack.c.l.b16 %v324
    %v540 = vunpack.c.l.b16 %v325
    %v541 = vunpack.c.l.b16 %v326
    %v542 = vunpack.c.l.b16 %v327
    %v543 = vunpack.c.l.b16 %v328
    %v544 = vunpack.c.l.b16 %v329
    %v545 = vunpack.c.l.b16 %v330
    %v546 = vunpack.c.l.b16 %v331
    %v547 = vunpack.c.l.b16 %v332
    %v548 = vunpack.c.l.b16 %v333
    %v549 = vunpack.c.l.b16 %v334
    %v550 = vunpack.c.l.b16 %v335
    %v551 = vunpack.c.l.b16 %v336
    %v552 = vunpack.c.l.b16 %v337
    %v553 = vunpack.c.l.b16 %v338
    %v554 = vunpack.c.l.b16 %v339
    %v555 = vunpack.c.l.b16 %v340
    %v556 = vunpack.c.l.b16 %v341
    %v557 = vunpack.c.l.b16 %v342
    %v558 = vunpack.c.l.b16 %v343
    %v559 = vunpack.c.l.b16 %v344
    %v560 = vunpack.c.l.b16 %v345
    %v561 = vunpack.c.l.b16 %v346
    %v562 = vunpack.c.l.b16 %v347
    %v563 = vunpack.c.l.b16 %v348
    %v564 = vunpack.c.l.b16 %v349
    %v565 = vunpack.c.l.b16 %v350
    %v566 = vunpack.c.l.b16 %v351
    %v567 = vunpack.c.l.b16 %v352
    %v568 = vunpack.c.l.b16 %v353
    %v569 = vunpack.c.l.b16 %v354
    %v570 = vunpack.c.l.b16 %v355
    %v571 = vunpack.c.l.b16 %v356
    %v572 = vunpack.c.l.b16 %v357
    %v573 = vunpack.c.l.b16 %v358
    %v574 = vunpack.c.l.b16 %v359
    %v575 = vunpack.c.l.b16 %v360
    %v576 = vunpack.c.l.b16 %v361
    %v577 = vunpack.c.l.b16 %v362
    %v578 = vunpack.c.l.b16 %v363
    %v579 = vunpack.c.l.b16 %v364
    %v580 = vunpack.c.l.b16 %v365
    %v581 = vunpack.c.l.b16 %v366
    %v582 = vunpack.c.l.b16 %v367
    %v583 = vunpack.c.l.b16 %v368
    %v584 = vunpack.c.l.b16 %v369
    %v585 = vunpack.c.l.b16 %v370
    %v586 = vunpack.c.l.b16 %v371
    %v587 = vunpack.c.l.b16 %v372
    %v588 = vunpack.c.l.b16 %v373
    %v589 = vunpack.c.l.b16 %v374
    %v590 = vunpack.c.l.b16 %v375
    %v591 = vunpack.c.l.b16 %v376
    %v592 = vunpack.c.l.b16 %v377
    %v593 = vunpack.c.l.b16 %v378
    %v594 = vpack.c.b16 %v531, %v530
    %v595 = vpack.c.b16 %v533, %v532
    %v596 = vpack.c.b16 %v535, %v534
    %v597 = vpack.c.b16 %v537, %v536
    %v598 = vpack.c.b16 %v539, %v538
    %v599 = vpack.c.b16 %v541, %v540
    %v600 = vpack.c.b16 %v543, %v542
    %v601 = vpack.c.b16 %v545, %v544
    %v602 = vpack.c.b16 %v547, %v546
    %v603 = vpack.c.b16 %v549, %v548
    %v604 = vpack.c.b16 %v551, %v550
    %v605 = vpack.c.b16 %v553, %v552
    %v606 = vpack.c.b16 %v555, %v554
    %v607 = vpack.c.b16 %v557, %v556
    %v608 = vpack.c.b16 %v559, %v558
    %v609 = vpack.c.b16 %v561, %v560
    %v610 = vpack.c.b16 %v563, %v562
    %v611 = vpack.c.b16 %v565, %v564
    %v612 = vpack.c.b16 %v567, %v566
    %v613 = vpack.c.b16 %v569, %v568
    %v614 = vpack.c.b16 %v571, %v570
    %v615 = vpack.c.b16 %v573, %v572
    %v616 = vpack.c.b16 %v575, %v574
    %v617 = vpack.c.b16 %v577, %v576
    %v618 = vpack.c.b16 %v579, %v578
    %v619 = vpack.c.b16 %v581, %v580
    %v620 = vpack.c.b16 %v583, %v582
    %v621 = vpack.c.b16 %v585, %v584
    %v622 = vpack.c.b16 %v587, %v586
    %v623 = vpack.c.b16 %v589, %v588
    %v624 = vpack.c.b16 %v591, %v590
    %v625 = vpack.c.b16 %v593, %v592
    %658 = vmatprep.subr.bf16.mxu0 0
    %659 = vmatpush1.bf16.msra.mxu0 %v601
    %660 = vmatprep.subr.bf16.mxu0 0
    %661 = vmatpush1.bf16.msra.mxu0 %v600
    %662 = vmatprep.subr.bf16.mxu0 0
    %663 = vmatpush1.bf16.msra.mxu0 %v599
    %664 = vmatprep.subr.bf16.mxu0 0
    %665 = vmatpush1.bf16.msra.mxu0 %v598
    %666 = vmatprep.subr.bf16.mxu0 0
    %667 = vmatpush1.bf16.msra.mxu0 %v597
    %668 = vmatprep.subr.bf16.mxu0 0
    %669 = vmatpush1.bf16.msra.mxu0 %v596
    %670 = vmatprep.subr.bf16.mxu0 0
    %671 = vmatpush1.bf16.msra.mxu0 %v595
    %672 = vmatprep.subr.bf16.mxu0 0
    %673 = vmatpush1.bf16.msra.mxu0 %v594
    %674 = vmatprep.subr.bf16.mxu0 0
    %675 = vmatpush2.bf16.msra.mxu0 %v609
    %676 = vmatprep.subr.bf16.mxu0 0
    %677 = vmatpush2.bf16.msra.mxu0 %v608
    %678 = vmatprep.subr.bf16.mxu0 0
    %679 = vmatpush2.bf16.msra.mxu0 %v607
    %680 = vmatprep.subr.bf16.mxu0 0
    %681 = vmatpush2.bf16.msra.mxu0 %v606
    %682 = vmatprep.subr.bf16.mxu0 0
    %683 = vmatpush2.bf16.msra.mxu0 %v605
    %684 = vmatprep.subr.bf16.mxu0 0
    %685 = vmatpush2.bf16.msra.mxu0 %v604
    %686 = vmatprep.subr.bf16.mxu0 0
    %687 = vmatpush2.bf16.msra.mxu0 %v603
    %688 = vmatprep.subr.bf16.mxu0 0
    %689 = vmatpush2.bf16.msra.mxu0 %v602
    %690 = vmatprep.mubr.bf16.mxu0 %v419
    %691 = vmatmul.mubr.bf16.gmra.mxu0 %v418
    %v692 = vpop.f32.mrf.mxu0
    %v693 = vadd.f32 %v384, %v692
    %v694 = vpop.f32.mrf.mxu0
    %v695 = vpop.f32.mrf.mxu0
    %v696 = vadd.f32 %v384, %v695
    %v697 = vpop.f32.mrf.mxu0
    %698 = vmatprep.mubr.bf16.mxu0 %v455
    %699 = vmatmul.mubr.bf16.gmra.mxu0 %v454
    %v700 = vpop.f32.mrf.mxu0
    %v701 = vadd.f32 %v384, %v700
    %v702 = vpop.f32.mrf.mxu0
    %v703 = vpop.f32.mrf.mxu0
    %v704 = vadd.f32 %v384, %v703
    %v705 = vpop.f32.mrf.mxu0
    %706 = vdwg.mxu0
    %707 = vmatprep.subr.bf16.mxu0 0
    %708 = vmatpush1.bf16.msra.mxu0 %v617
    %709 = vmatprep.subr.bf16.mxu0 0
    %710 = vmatpush1.bf16.msra.mxu0 %v616
    %711 = vmatprep.subr.bf16.mxu0 0
    %712 = vmatpush1.bf16.msra.mxu0 %v615
    %713 = vmatprep.subr.bf16.mxu0 0
    %714 = vmatpush1.bf16.msra.mxu0 %v614
    %715 = vmatprep.subr.bf16.mxu0 0
    %716 = vmatpush1.bf16.msra.mxu0 %v613
    %717 = vmatprep.subr.bf16.mxu0 0
    %718 = vmatpush1.bf16.msra.mxu0 %v612
    %719 = vmatprep.subr.bf16.mxu0 0
    %720 = vmatpush1.bf16.msra.mxu0 %v611
    %721 = vmatprep.subr.bf16.mxu0 0
    %722 = vmatpush1.bf16.msra.mxu0 %v610
    %723 = vmatprep.subr.bf16.mxu0 0
    %724 = vmatpush2.bf16.msra.mxu0 %v625
    %725 = vmatprep.subr.bf16.mxu0 0
    %726 = vmatpush2.bf16.msra.mxu0 %v624
    %727 = vmatprep.subr.bf16.mxu0 0
    %728 = vmatpush2.bf16.msra.mxu0 %v623
    %729 = vmatprep.subr.bf16.mxu0 0
    %730 = vmatpush2.bf16.msra.mxu0 %v622
    %731 = vmatprep.subr.bf16.mxu0 0
    %732 = vmatpush2.bf16.msra.mxu0 %v621
    %733 = vmatprep.subr.bf16.mxu0 0
    %734 = vmatpush2.bf16.msra.mxu0 %v620
    %735 = vmatprep.subr.bf16.mxu0 0
    %736 = vmatpush2.bf16.msra.mxu0 %v619
    %737 = vmatprep.subr.bf16.mxu0 0
    %738 = vmatpush2.bf16.msra.mxu0 %v618
    %739 = vmatprep.mubr.bf16.mxu0 %v421
    %740 = vmatmul.mubr.bf16.gmra.mxu0 %v420
    %v741 = vpop.f32.mrf.mxu0
    %v742 = vadd.f32 %v693, %v741
    %v743 = vpop.f32.mrf.mxu0
    %v744 = vpop.f32.mrf.mxu0
    %v745 = vadd.f32 %v696, %v744
    %v746 = vpop.f32.mrf.mxu0
    %747 = vmatprep.mubr.bf16.mxu0 %v457
    %748 = vmatmul.mubr.bf16.gmra.mxu0 %v456
    %v749 = vpop.f32.mrf.mxu0
    %v750 = vadd.f32 %v701, %v749
    %v751 = vpop.f32.mrf.mxu0
    %v752 = vpop.f32.mrf.mxu0
    %v753 = vadd.f32 %v704, %v752
    %v754 = vpop.f32.mrf.mxu0
    %755 = vdwg.mxu0
    %v756 = vadd.f32 %v742, %v745
    %v757 = vadd.f32 %v756, %v750
    %v758 = vadd.f32 %v757, %v753
    %v759 = vrot.slane %v758, 4
    %v760 = vadd.f32 %v758, %v759
    %v761 = vrot.slane %v760, 2
    %v762 = vadd.f32 %v760, %v761
    %v763 = vrot.slane %v762, 1
    %v764 = vadd.f32 %v762, %v763
    %v765 = vmul.f32 %v742, %v742
    %v766 = vmul.f32 %v745, %v745
    %v767 = vmul.f32 %v750, %v750
    %v768 = vmul.f32 %v753, %v753
    %v769 = vadd.f32 %v765, %v766
    %v770 = vadd.f32 %v769, %v767
    %v771 = vadd.f32 %v770, %v768
    %v772 = vrot.slane %v771, 4
    %v773 = vadd.f32 %v771, %v772
    %v774 = vrot.slane %v773, 2
    %v775 = vadd.f32 %v773, %v774
    %v776 = vrot.slane %v775, 1
    %v777 = vadd.f32 %v775, %v776
    %v778 = vpack.c.bf16 %v745, %v742
    %v779 = vpack.c.bf16 %v753, %v750
    %v780 = vcombine.high %v235, %v242
    %v781 = vcombine.high %v242, %v251
    %v782 = vcombine.high %v251, %v260
    %v783 = vcombine.high %v260, %v269
    %v784 = vcombine.high %v279, %v286
    %v785 = vcombine.high %v286, %v295
    %v786 = vcombine.high %v295, %v304
    %v787 = vcombine.high %v304, %v313
    %vm788 = vsmask.f32 1280
    %vm789 = vsmask.f32 3336
    %vm790 = vmor %vm788, %vm789
    %vm791 = vsmask.f32 5392
    %vm792 = vmor %vm790, %vm791
    %vm793 = vsmask.f32 7448
    %vm794 = vmor %vm792, %vm793
    %v796 = vshrl.u32 %v243, 16
    %v798 = vrot.slane %v796, 6
    %v799 = vshll.u32 %v243, 16
    %v801 = vrot.slane %v799, 7
    %v802 = vor.u32 %v798, %v801
    %v803 = vrot.slane %v802, 2
    %v805 = vshll.u32 %v780, 16
    %v807 = vrot.slane %v805, 7
    %v808 = vsel %vm794, %v803, %v807
    %v810 = vshrl.u32 %v252, 16
    %v812 = vrot.slane %v810, 6
    %v813 = vshll.u32 %v252, 16
    %v815 = vrot.slane %v813, 7
    %v816 = vor.u32 %v812, %v815
    %v817 = vrot.slane %v816, 2
    %v819 = vshll.u32 %v781, 16
    %v821 = vrot.slane %v819, 7
    %v822 = vsel %vm794, %v817, %v821
    %v824 = vshrl.u32 %v261, 16
    %v826 = vrot.slane %v824, 6
    %v827 = vshll.u32 %v261, 16
    %v829 = vrot.slane %v827, 7
    %v830 = vor.u32 %v826, %v829
    %v831 = vrot.slane %v830, 2
    %v833 = vshll.u32 %v782, 16
    %v835 = vrot.slane %v833, 7
    %v836 = vsel %vm794, %v831, %v835
    %v838 = vshrl.u32 %v270, 16
    %v840 = vrot.slane %v838, 6
    %v841 = vshll.u32 %v270, 16
    %v843 = vrot.slane %v841, 7
    %v844 = vor.u32 %v840, %v843
    %v845 = vrot.slane %v844, 2
    %v847 = vshll.u32 %v783, 16
    %v849 = vrot.slane %v847, 7
    %v850 = vsel %vm794, %v845, %v849
    %v852 = vshrl.u32 %v287, 16
    %v854 = vrot.slane %v852, 6
    %v855 = vshll.u32 %v287, 16
    %v857 = vrot.slane %v855, 7
    %v858 = vor.u32 %v854, %v857
    %v859 = vrot.slane %v858, 2
    %v861 = vshll.u32 %v784, 16
    %v863 = vrot.slane %v861, 7
    %v864 = vsel %vm794, %v859, %v863
    %v866 = vshrl.u32 %v296, 16
    %v868 = vrot.slane %v866, 6
    %v869 = vshll.u32 %v296, 16
    %v871 = vrot.slane %v869, 7
    %v872 = vor.u32 %v868, %v871
    %v873 = vrot.slane %v872, 2
    %v875 = vshll.u32 %v785, 16
    %v877 = vrot.slane %v875, 7
    %v878 = vsel %vm794, %v873, %v877
    %v880 = vshrl.u32 %v305, 16
    %v882 = vrot.slane %v880, 6
    %v883 = vshll.u32 %v305, 16
    %v885 = vrot.slane %v883, 7
    %v886 = vor.u32 %v882, %v885
    %v887 = vrot.slane %v886, 2
    %v889 = vshll.u32 %v786, 16
    %v891 = vrot.slane %v889, 7
    %v892 = vsel %vm794, %v887, %v891
    %v894 = vshrl.u32 %v314, 16
    %v896 = vrot.slane %v894, 6
    %v897 = vshll.u32 %v314, 16
    %v899 = vrot.slane %v897, 7
    %v900 = vor.u32 %v896, %v899
    %v901 = vrot.slane %v900, 2
    %v903 = vshll.u32 %v787, 16
    %v905 = vrot.slane %v903, 7
    %v906 = vsel %vm794, %v901, %v905
    %s907 = scalar_lea.vmem [#allocation2], 256
    %v908 = vld [vmem:[%s907] sm:$0xf]
    %v909 = vld [vmem:[%s907 + $0x4] sm:$0xf]
    %v910 = vld [vmem:[%s907 + $0x8] sm:$0xf]
    %v911 = vld [vmem:[%s907 + $0xc] sm:$0xf]
    %v912 = vld [vmem:[%s907 + $0x10] sm:$0xf]
    %v913 = vld [vmem:[%s907 + $0x14] sm:$0xf]
    %v914 = vld [vmem:[%s907 + $0x18] sm:$0xf]
    %v915 = vld [vmem:[%s907 + $0x1c] sm:$0xf]
    %v916 = vld [vmem:[%s907 + $0x20] sm:$0xf]
    %v917 = vld [vmem:[%s907 + $0x24] sm:$0xf]
    %v918 = vld [vmem:[%s907 + $0x28] sm:$0xf]
    %v919 = vld [vmem:[%s907 + $0x2c] sm:$0xf]
    %v920 = vld [vmem:[%s907 + $0x30] sm:$0xf]
    %v921 = vld [vmem:[%s907 + $0x34] sm:$0xf]
    %v922 = vld [vmem:[%s907 + $0x38] sm:$0xf]
    %v923 = vld [vmem:[%s907 + $0x3c] sm:$0xf]
    %v924 = vld [vmem:[%s907 + $0x40] sm:$0xf]
    %v925 = vld [vmem:[%s907 + $0x44] sm:$0xf]
    %v926 = vld [vmem:[%s907 + $0x48] sm:$0xf]
    %v927 = vld [vmem:[%s907 + $0x4c] sm:$0xf]
    %v928 = vld [vmem:[%s907 + $0x50] sm:$0xf]
    %v929 = vld [vmem:[%s907 + $0x54] sm:$0xf]
    %v930 = vld [vmem:[%s907 + $0x58] sm:$0xf]
    %v931 = vld [vmem:[%s907 + $0x5c] sm:$0xf]
    %v932 = vld [vmem:[%s907 + $0x60] sm:$0xf]
    %v933 = vld [vmem:[%s907 + $0x64] sm:$0xf]
    %v934 = vld [vmem:[%s907 + $0x68] sm:$0xf]
    %v935 = vld [vmem:[%s907 + $0x6c] sm:$0xf]
    %v936 = vld [vmem:[%s907 + $0x70] sm:$0xf]
    %v937 = vld [vmem:[%s907 + $0x74] sm:$0xf]
    %v938 = vld [vmem:[%s907 + $0x78] sm:$0xf]
    %v939 = vld [vmem:[%s907 + $0x7c] sm:$0xf]
    %v940 = vld [vmem:[%s907 + $0x80] sm:$0xf]
    %v941 = vld [vmem:[%s907 + $0x84] sm:$0xf]
    %v942 = vld [vmem:[%s907 + $0x88] sm:$0xf]
    %v943 = vld [vmem:[%s907 + $0x8c] sm:$0xf]
    %v944 = vld [vmem:[%s907 + $0x90] sm:$0xf]
    %v945 = vld [vmem:[%s907 + $0x94] sm:$0xf]
    %v946 = vld [vmem:[%s907 + $0x98] sm:$0xf]
    %v947 = vld [vmem:[%s907 + $0x9c] sm:$0xf]
    %v948 = vld [vmem:[%s907 + $0xa0] sm:$0xf]
    %v949 = vld [vmem:[%s907 + $0xa4] sm:$0xf]
    %v950 = vld [vmem:[%s907 + $0xa8] sm:$0xf]
    %v951 = vld [vmem:[%s907 + $0xac] sm:$0xf]
    %v952 = vld [vmem:[%s907 + $0xb0] sm:$0xf]
    %v953 = vld [vmem:[%s907 + $0xb4] sm:$0xf]
    %v954 = vld [vmem:[%s907 + $0xb8] sm:$0xf]
    %v955 = vld [vmem:[%s907 + $0xbc] sm:$0xf]
    %v956 = vld [vmem:[%s907 + $0xc0] sm:$0xf]
    %v957 = vld [vmem:[%s907 + $0xc4] sm:$0xf]
    %v958 = vld [vmem:[%s907 + $0xc8] sm:$0xf]
    %v959 = vld [vmem:[%s907 + $0xcc] sm:$0xf]
    %v960 = vld [vmem:[%s907 + $0xd0] sm:$0xf]
    %v961 = vld [vmem:[%s907 + $0xd4] sm:$0xf]
    %v962 = vld [vmem:[%s907 + $0xd8] sm:$0xf]
    %v963 = vld [vmem:[%s907 + $0xdc] sm:$0xf]
    %v964 = vld [vmem:[%s907 + $0xe0] sm:$0xf]
    %v965 = vld [vmem:[%s907 + $0xe4] sm:$0xf]
    %v966 = vld [vmem:[%s907 + $0xe8] sm:$0xf]
    %v967 = vld [vmem:[%s907 + $0xec] sm:$0xf]
    %v968 = vld [vmem:[%s907 + $0xf0] sm:$0xf]
    %v969 = vld [vmem:[%s907 + $0xf4] sm:$0xf]
    %v970 = vld [vmem:[%s907 + $0xf8] sm:$0xf]
    %v971 = vld [vmem:[%s907 + $0xfc] sm:$0xf]
    %v972 = vcombine.low %v808, %v822
    %v973 = vcombine.high %v808, %v822
    %v974 = vcombine.low %v836, %v850
    %v975 = vcombine.high %v836, %v850
    %v977 = vunpack.c.l.s4 1983009808
    %v978 = vunpack.c.0.s8 %v977
    %v979 = vlaneseq
    %v980 = vshrl.u32 %v979, 7
    %v981 = vsub.s32 %v978, %v980
    %v982 = vrot.slane %v972, %v981
    %v984 = vunpack.c.l.s4 1983009808
    %v985 = vunpack.c.0.s8 %v984
    %v986 = vlaneseq
    %v987 = vshrl.u32 %v986, 7
    %v988 = vsub.s32 %v985, %v987
    %v989 = vrot.slane %v973, %v988
    %v991 = vunpack.c.l.s4 1983009808
    %v992 = vunpack.c.0.s8 %v991
    %v993 = vlaneseq
    %v994 = vshrl.u32 %v993, 7
    %v995 = vsub.s32 %v992, %v994
    %v996 = vrot.slane %v974, %v995
    %v998 = vunpack.c.l.s4 1983009808
    %v999 = vunpack.c.0.s8 %v998
    %v1000 = vlaneseq
    %v1001 = vshrl.u32 %v1000, 7
    %v1002 = vsub.s32 %v999, %v1001
    %v1003 = vrot.slane %v975, %v1002
    %v1004 = vcombine.low %v982, %v996
    %v1005 = vcombine.high %v982, %v996
    %v1006 = vcombine.low %v989, %v1003
    %v1007 = vcombine.high %v989, %v1003
    %v1008 = vcombine.low %v864, %v878
    %v1009 = vcombine.high %v864, %v878
    %v1010 = vcombine.low %v892, %v906
    %v1011 = vcombine.high %v892, %v906
    %v1013 = vunpack.c.l.s4 1983009808
    %v1014 = vunpack.c.0.s8 %v1013
    %v1015 = vlaneseq
    %v1016 = vshrl.u32 %v1015, 7
    %v1017 = vsub.s32 %v1014, %v1016
    %v1018 = vrot.slane %v1008, %v1017
    %v1020 = vunpack.c.l.s4 1983009808
    %v1021 = vunpack.c.0.s8 %v1020
    %v1022 = vlaneseq
    %v1023 = vshrl.u32 %v1022, 7
    %v1024 = vsub.s32 %v1021, %v1023
    %v1025 = vrot.slane %v1009, %v1024
    %v1027 = vunpack.c.l.s4 1983009808
    %v1028 = vunpack.c.0.s8 %v1027
    %v1029 = vlaneseq
    %v1030 = vshrl.u32 %v1029, 7
    %v1031 = vsub.s32 %v1028, %v1030
    %v1032 = vrot.slane %v1010, %v1031
    %v1034 = vunpack.c.l.s4 1983009808
    %v1035 = vunpack.c.0.s8 %v1034
    %v1036 = vlaneseq
    %v1037 = vshrl.u32 %v1036, 7
    %v1038 = vsub.s32 %v1035, %v1037
    %v1039 = vrot.slane %v1011, %v1038
    %v1040 = vcombine.low %v1018, %v1032
    %v1041 = vcombine.high %v1018, %v1032
    %v1042 = vcombine.low %v1025, %v1039
    %v1043 = vcombine.high %v1025, %v1039
    %v1116 = vunpack.c.l.b16 %v908
    %v1117 = vunpack.c.l.b16 %v909
    %v1118 = vunpack.c.l.b16 %v910
    %v1119 = vunpack.c.l.b16 %v911
    %v1120 = vunpack.c.l.b16 %v912
    %v1121 = vunpack.c.l.b16 %v913
    %v1122 = vunpack.c.l.b16 %v914
    %v1123 = vunpack.c.l.b16 %v915
    %v1124 = vunpack.c.l.b16 %v916
    %v1125 = vunpack.c.l.b16 %v917
    %v1126 = vunpack.c.l.b16 %v918
    %v1127 = vunpack.c.l.b16 %v919
    %v1128 = vunpack.c.l.b16 %v920
    %v1129 = vunpack.c.l.b16 %v921
    %v1130 = vunpack.c.l.b16 %v922
    %v1131 = vunpack.c.l.b16 %v923
    %v1132 = vunpack.c.l.b16 %v924
    %v1133 = vunpack.c.l.b16 %v925
    %v1134 = vunpack.c.l.b16 %v926
    %v1135 = vunpack.c.l.b16 %v927
    %v1136 = vunpack.c.l.b16 %v928
    %v1137 = vunpack.c.l.b16 %v929
    %v1138 = vunpack.c.l.b16 %v930
    %v1139 = vunpack.c.l.b16 %v931
    %v1140 = vunpack.c.l.b16 %v932
    %v1141 = vunpack.c.l.b16 %v933
    %v1142 = vunpack.c.l.b16 %v934
    %v1143 = vunpack.c.l.b16 %v935
    %v1144 = vunpack.c.l.b16 %v936
    %v1145 = vunpack.c.l.b16 %v937
    %v1146 = vunpack.c.l.b16 %v938
    %v1147 = vunpack.c.l.b16 %v939
    %v1148 = vunpack.c.l.b16 %v940
    %v1149 = vunpack.c.l.b16 %v941
    %v1150 = vunpack.c.l.b16 %v942
    %v1151 = vunpack.c.l.b16 %v943
    %v1152 = vunpack.c.l.b16 %v944
    %v1153 = vunpack.c.l.b16 %v945
    %v1154 = vunpack.c.l.b16 %v946
    %v1155 = vunpack.c.l.b16 %v947
    %v1156 = vunpack.c.l.b16 %v948
    %v1157 = vunpack.c.l.b16 %v949
    %v1158 = vunpack.c.l.b16 %v950
    %v1159 = vunpack.c.l.b16 %v951
    %v1160 = vunpack.c.l.b16 %v952
    %v1161 = vunpack.c.l.b16 %v953
    %v1162 = vunpack.c.l.b16 %v954
    %v1163 = vunpack.c.l.b16 %v955
    %v1164 = vunpack.c.l.b16 %v956
    %v1165 = vunpack.c.l.b16 %v957
    %v1166 = vunpack.c.l.b16 %v958
    %v1167 = vunpack.c.l.b16 %v959
    %v1168 = vunpack.c.l.b16 %v960
    %v1169 = vunpack.c.l.b16 %v961
    %v1170 = vunpack.c.l.b16 %v962
    %v1171 = vunpack.c.l.b16 %v963
    %v1172 = vunpack.c.l.b16 %v964
    %v1173 = vunpack.c.l.b16 %v965
    %v1174 = vunpack.c.l.b16 %v966
    %v1175 = vunpack.c.l.b16 %v967
    %v1176 = vunpack.c.l.b16 %v968
    %v1177 = vunpack.c.l.b16 %v969
    %v1178 = vunpack.c.l.b16 %v970
    %v1179 = vunpack.c.l.b16 %v971
    %v1180 = vpack.c.b16 %v1117, %v1116
    %v1181 = vpack.c.b16 %v1119, %v1118
    %v1182 = vpack.c.b16 %v1121, %v1120
    %v1183 = vpack.c.b16 %v1123, %v1122
    %v1184 = vpack.c.b16 %v1125, %v1124
    %v1185 = vpack.c.b16 %v1127, %v1126
    %v1186 = vpack.c.b16 %v1129, %v1128
    %v1187 = vpack.c.b16 %v1131, %v1130
    %v1188 = vpack.c.b16 %v1133, %v1132
    %v1189 = vpack.c.b16 %v1135, %v1134
    %v1190 = vpack.c.b16 %v1137, %v1136
    %v1191 = vpack.c.b16 %v1139, %v1138
    %v1192 = vpack.c.b16 %v1141, %v1140
    %v1193 = vpack.c.b16 %v1143, %v1142
    %v1194 = vpack.c.b16 %v1145, %v1144
    %v1195 = vpack.c.b16 %v1147, %v1146
    %v1196 = vpack.c.b16 %v1149, %v1148
    %v1197 = vpack.c.b16 %v1151, %v1150
    %v1198 = vpack.c.b16 %v1153, %v1152
    %v1199 = vpack.c.b16 %v1155, %v1154
    %v1200 = vpack.c.b16 %v1157, %v1156
    %v1201 = vpack.c.b16 %v1159, %v1158
    %v1202 = vpack.c.b16 %v1161, %v1160
    %v1203 = vpack.c.b16 %v1163, %v1162
    %v1204 = vpack.c.b16 %v1165, %v1164
    %v1205 = vpack.c.b16 %v1167, %v1166
    %v1206 = vpack.c.b16 %v1169, %v1168
    %v1207 = vpack.c.b16 %v1171, %v1170
    %v1208 = vpack.c.b16 %v1173, %v1172
    %v1209 = vpack.c.b16 %v1175, %v1174
    %v1210 = vpack.c.b16 %v1177, %v1176
    %v1211 = vpack.c.b16 %v1179, %v1178
    %1244 = vmatprep.subr.bf16.mxu0 0
    %1245 = vmatpush1.bf16.msra.mxu0 %v1187
    %1246 = vmatprep.subr.bf16.mxu0 0
    %1247 = vmatpush1.bf16.msra.mxu0 %v1186
    %1248 = vmatprep.subr.bf16.mxu0 0
    %1249 = vmatpush1.bf16.msra.mxu0 %v1185
    %1250 = vmatprep.subr.bf16.mxu0 0
    %1251 = vmatpush1.bf16.msra.mxu0 %v1184
    %1252 = vmatprep.subr.bf16.mxu0 0
    %1253 = vmatpush1.bf16.msra.mxu0 %v1183
    %1254 = vmatprep.subr.bf16.mxu0 0
    %1255 = vmatpush1.bf16.msra.mxu0 %v1182
    %1256 = vmatprep.subr.bf16.mxu0 0
    %1257 = vmatpush1.bf16.msra.mxu0 %v1181
    %1258 = vmatprep.subr.bf16.mxu0 0
    %1259 = vmatpush1.bf16.msra.mxu0 %v1180
    %1260 = vmatprep.subr.bf16.mxu0 0
    %1261 = vmatpush2.bf16.msra.mxu0 %v1195
    %1262 = vmatprep.subr.bf16.mxu0 0
    %1263 = vmatpush2.bf16.msra.mxu0 %v1194
    %1264 = vmatprep.subr.bf16.mxu0 0
    %1265 = vmatpush2.bf16.msra.mxu0 %v1193
    %1266 = vmatprep.subr.bf16.mxu0 0
    %1267 = vmatpush2.bf16.msra.mxu0 %v1192
    %1268 = vmatprep.subr.bf16.mxu0 0
    %1269 = vmatpush2.bf16.msra.mxu0 %v1191
    %1270 = vmatprep.subr.bf16.mxu0 0
    %1271 = vmatpush2.bf16.msra.mxu0 %v1190
    %1272 = vmatprep.subr.bf16.mxu0 0
    %1273 = vmatpush2.bf16.msra.mxu0 %v1189
    %1274 = vmatprep.subr.bf16.mxu0 0
    %1275 = vmatpush2.bf16.msra.mxu0 %v1188
    %1276 = vmatprep.mubr.bf16.mxu0 %v1005
    %1277 = vmatmul.mubr.bf16.gmra.mxu0 %v1004
    %v1278 = vpop.f32.mrf.mxu0
    %v1279 = vadd.f32 %v384, %v1278
    %v1280 = vpop.f32.mrf.mxu0
    %v1281 = vpop.f32.mrf.mxu0
    %v1282 = vadd.f32 %v384, %v1281
    %v1283 = vpop.f32.mrf.mxu0
    %1284 = vmatprep.mubr.bf16.mxu0 %v1041
    %1285 = vmatmul.mubr.bf16.gmra.mxu0 %v1040
    %v1286 = vpop.f32.mrf.mxu0
    %v1287 = vadd.f32 %v384, %v1286
    %v1288 = vpop.f32.mrf.mxu0
    %v1289 = vpop.f32.mrf.mxu0
    %v1290 = vadd.f32 %v384, %v1289
    %v1291 = vpop.f32.mrf.mxu0
    %1292 = vdwg.mxu0
    %1293 = vmatprep.subr.bf16.mxu0 0
    %1294 = vmatpush1.bf16.msra.mxu0 %v1203
    %1295 = vmatprep.subr.bf16.mxu0 0
    %1296 = vmatpush1.bf16.msra.mxu0 %v1202
    %1297 = vmatprep.subr.bf16.mxu0 0
    %1298 = vmatpush1.bf16.msra.mxu0 %v1201
    %1299 = vmatprep.subr.bf16.mxu0 0
    %1300 = vmatpush1.bf16.msra.mxu0 %v1200
    %1301 = vmatprep.subr.bf16.mxu0 0
    %1302 = vmatpush1.bf16.msra.mxu0 %v1199
    %1303 = vmatprep.subr.bf16.mxu0 0
    %1304 = vmatpush1.bf16.msra.mxu0 %v1198
    %1305 = vmatprep.subr.bf16.mxu0 0
    %1306 = vmatpush1.bf16.msra.mxu0 %v1197
    %1307 = vmatprep.subr.bf16.mxu0 0
    %1308 = vmatpush1.bf16.msra.mxu0 %v1196
    %1309 = vmatprep.subr.bf16.mxu0 0
    %1310 = vmatpush2.bf16.msra.mxu0 %v1211
    %1311 = vmatprep.subr.bf16.mxu0 0
    %1312 = vmatpush2.bf16.msra.mxu0 %v1210
    %1313 = vmatprep.subr.bf16.mxu0 0
    %1314 = vmatpush2.bf16.msra.mxu0 %v1209
    %1315 = vmatprep.subr.bf16.mxu0 0
    %1316 = vmatpush2.bf16.msra.mxu0 %v1208
    %1317 = vmatprep.subr.bf16.mxu0 0
    %1318 = vmatpush2.bf16.msra.mxu0 %v1207
    %1319 = vmatprep.subr.bf16.mxu0 0
    %1320 = vmatpush2.bf16.msra.mxu0 %v1206
    %1321 = vmatprep.subr.bf16.mxu0 0
    %1322 = vmatpush2.bf16.msra.mxu0 %v1205
    %1323 = vmatprep.subr.bf16.mxu0 0
    %1324 = vmatpush2.bf16.msra.mxu0 %v1204
    %1325 = vmatprep.mubr.bf16.mxu0 %v1007
    %1326 = vmatmul.mubr.bf16.gmra.mxu0 %v1006
    %v1327 = vpop.f32.mrf.mxu0
    %v1328 = vadd.f32 %v1279, %v1327
    %v1329 = vpop.f32.mrf.mxu0
    %v1330 = vpop.f32.mrf.mxu0
    %v1331 = vadd.f32 %v1282, %v1330
    %v1332 = vpop.f32.mrf.mxu0
    %1333 = vmatprep.mubr.bf16.mxu0 %v1043
    %1334 = vmatmul.mubr.bf16.gmra.mxu0 %v1042
    %v1335 = vpop.f32.mrf.mxu0
    %v1336 = vadd.f32 %v1287, %v1335
    %v1337 = vpop.f32.mrf.mxu0
    %v1338 = vpop.f32.mrf.mxu0
    %v1339 = vadd.f32 %v1290, %v1338
    %v1340 = vpop.f32.mrf.mxu0
    %1341 = vdwg.mxu0
    %v1342 = vadd.f32 %v1328, %v1331
    %v1343 = vadd.f32 %v1342, %v1336
    %v1344 = vadd.f32 %v1343, %v1339
    %v1345 = vrot.slane %v1344, 4
    %v1346 = vadd.f32 %v1344, %v1345
    %v1347 = vrot.slane %v1346, 2
    %v1348 = vadd.f32 %v1346, %v1347
    %v1349 = vrot.slane %v1348, 1
    %v1350 = vadd.f32 %v1348, %v1349
    %v1351 = vmul.f32 %v1328, %v1328
    %v1352 = vmul.f32 %v1331, %v1331
    %v1353 = vmul.f32 %v1336, %v1336
    %v1354 = vmul.f32 %v1339, %v1339
    %v1355 = vadd.f32 %v1351, %v1352
    %v1356 = vadd.f32 %v1355, %v1353
    %v1357 = vadd.f32 %v1356, %v1354
    %v1358 = vrot.slane %v1357, 4
    %v1359 = vadd.f32 %v1357, %v1358
    %v1360 = vrot.slane %v1359, 2
    %v1361 = vadd.f32 %v1359, %v1360
    %v1362 = vrot.slane %v1361, 1
    %v1363 = vadd.f32 %v1361, %v1362
    %v1364 = vadd.f32 %v764, %v1350
    %v1365 = vadd.f32 %v777, %v1363
    %v1366 = vpack.c.bf16 %v1331, %v1328
    %v1367 = vpack.c.bf16 %v1339, %v1336
    %v1372 = vcombine.low %v778, %v1366
    %v1373 = vcombine.high %v778, %v1366
    %v1375 = vunpack.c.l.s4 1983009808
    %v1376 = vunpack.c.0.s8 %v1375
    %v1377 = vlaneseq
    %v1378 = vshrl.u32 %v1377, 7
    %v1379 = vsub.s32 %v1376, %v1378
    %v1380 = vrot.slane %v1372, %v1379
    %v1382 = vunpack.c.l.s4 1983009808
    %v1383 = vunpack.c.0.s8 %v1382
    %v1384 = vlaneseq
    %v1385 = vshrl.u32 %v1384, 7
    %v1386 = vsub.s32 %v1383, %v1385
    %v1387 = vrot.slane %v1373, %v1386
    %v1388 = vcombine.high %v1380, %v1380
    %v1389 = vcombine.high %v1387, %v1387
    %v1390 = vcombine.low %v779, %v1367
    %v1391 = vcombine.high %v779, %v1367
    %v1393 = vunpack.c.l.s4 1983009808
    %v1394 = vunpack.c.0.s8 %v1393
    %v1395 = vlaneseq
    %v1396 = vshrl.u32 %v1395, 7
    %v1397 = vsub.s32 %v1394, %v1396
    %v1398 = vrot.slane %v1390, %v1397
    %v1400 = vunpack.c.l.s4 1983009808
    %v1401 = vunpack.c.0.s8 %v1400
    %v1402 = vlaneseq
    %v1403 = vshrl.u32 %v1402, 7
    %v1404 = vsub.s32 %v1401, %v1403
    %v1405 = vrot.slane %v1391, %v1404
    %v1406 = vcombine.high %v1398, %v1398
    %v1407 = vcombine.high %v1405, %v1405
    %1416 = vst [vmem:[%s4] sm:$0xf] %v1380
    %1417 = vst [vmem:[%s4 + $0x8] sm:$0xf] %v1388
    %1418 = vst [vmem:[%s4 + $0x10] sm:$0xf] %v1387
    %1419 = vst [vmem:[%s4 + $0x18] sm:$0xf] %v1389
    %1420 = vst [vmem:[%s4 + $0x20] sm:$0xf] %v1398
    %1421 = vst [vmem:[%s4 + $0x28] sm:$0xf] %v1406
    %1422 = vst [vmem:[%s4 + $0x30] sm:$0xf] %v1405
    %1423 = vst [vmem:[%s4 + $0x38] sm:$0xf] %v1407
    %v1425 = vshrl.u32 %v140, 16
    %v1427 = vshll.u32 %v140, 16
    %v1429 = vrot.slane %v1427, 1
    %v1430 = vor.u32 %v1425, %v1429
    %v1432 = vshrl.u32 %v146, 16
    %v1434 = vshll.u32 %v146, 16
    %v1436 = vrot.slane %v1434, 1
    %v1437 = vor.u32 %v1432, %v1436
    %v1440 = vcombine.low %v140, %v1430
    %v1442 = vunpack.c.l.s4 1983009808
    %v1443 = vunpack.c.0.s8 %v1442
    %v1444 = vlaneseq
    %v1445 = vshrl.u32 %v1444, 7
    %v1446 = vsub.s32 %v1443, %v1445
    %v1447 = vrot.slane %v1440, %v1446
    %v1448 = vcombine.low %v269, %v1447
    %v1449 = vcombine.low %v146, %v1437
    %v1451 = vunpack.c.l.s4 1983009808
    %v1452 = vunpack.c.0.s8 %v1451
    %v1453 = vlaneseq
    %v1454 = vshrl.u32 %v1453, 7
    %v1455 = vsub.s32 %v1452, %v1454
    %v1456 = vrot.slane %v1449, %v1455
    %v1457 = vcombine.low %v313, %v1456
    %s1458 = scalar_lea.vmem [#allocation2], 512
    %v1459 = vld [vmem:[%s1458] sm:$0xf]
    %v1460 = vld [vmem:[%s1458 + $0x4] sm:$0xf]
    %v1461 = vld [vmem:[%s1458 + $0x8] sm:$0xf]
    %v1462 = vld [vmem:[%s1458 + $0xc] sm:$0xf]
    %v1463 = vld [vmem:[%s1458 + $0x10] sm:$0xf]
    %v1464 = vld [vmem:[%s1458 + $0x14] sm:$0xf]
    %v1465 = vld [vmem:[%s1458 + $0x18] sm:$0xf]
    %v1466 = vld [vmem:[%s1458 + $0x1c] sm:$0xf]
    %v1467 = vld [vmem:[%s1458 + $0x20] sm:$0xf]
    %v1468 = vld [vmem:[%s1458 + $0x24] sm:$0xf]
    %v1469 = vld [vmem:[%s1458 + $0x28] sm:$0xf]
    %v1470 = vld [vmem:[%s1458 + $0x2c] sm:$0xf]
    %v1471 = vld [vmem:[%s1458 + $0x30] sm:$0xf]
    %v1472 = vld [vmem:[%s1458 + $0x34] sm:$0xf]
    %v1473 = vld [vmem:[%s1458 + $0x38] sm:$0xf]
    %v1474 = vld [vmem:[%s1458 + $0x3c] sm:$0xf]
    %v1475 = vld [vmem:[%s1458 + $0x40] sm:$0xf]
    %v1476 = vld [vmem:[%s1458 + $0x44] sm:$0xf]
    %v1477 = vld [vmem:[%s1458 + $0x48] sm:$0xf]
    %v1478 = vld [vmem:[%s1458 + $0x4c] sm:$0xf]
    %v1479 = vld [vmem:[%s1458 + $0x50] sm:$0xf]
    %v1480 = vld [vmem:[%s1458 + $0x54] sm:$0xf]
    %v1481 = vld [vmem:[%s1458 + $0x58] sm:$0xf]
    %v1482 = vld [vmem:[%s1458 + $0x5c] sm:$0xf]
    %v1483 = vld [vmem:[%s1458 + $0x60] sm:$0xf]
    %v1484 = vld [vmem:[%s1458 + $0x64] sm:$0xf]
    %v1485 = vld [vmem:[%s1458 + $0x68] sm:$0xf]
    %v1486 = vld [vmem:[%s1458 + $0x6c] sm:$0xf]
    %v1487 = vld [vmem:[%s1458 + $0x70] sm:$0xf]
    %v1488 = vld [vmem:[%s1458 + $0x74] sm:$0xf]
    %v1489 = vld [vmem:[%s1458 + $0x78] sm:$0xf]
    %v1490 = vld [vmem:[%s1458 + $0x7c] sm:$0xf]
    %v1491 = vld [vmem:[%s1458 + $0x80] sm:$0xf]
    %v1492 = vld [vmem:[%s1458 + $0x84] sm:$0xf]
    %v1493 = vld [vmem:[%s1458 + $0x88] sm:$0xf]
    %v1494 = vld [vmem:[%s1458 + $0x8c] sm:$0xf]
    %v1495 = vld [vmem:[%s1458 + $0x90] sm:$0xf]
    %v1496 = vld [vmem:[%s1458 + $0x94] sm:$0xf]
    %v1497 = vld [vmem:[%s1458 + $0x98] sm:$0xf]
    %v1498 = vld [vmem:[%s1458 + $0x9c] sm:$0xf]
    %v1499 = vld [vmem:[%s1458 + $0xa0] sm:$0xf]
    %v1500 = vld [vmem:[%s1458 + $0xa4] sm:$0xf]
    %v1501 = vld [vmem:[%s1458 + $0xa8] sm:$0xf]
    %v1502 = vld [vmem:[%s1458 + $0xac] sm:$0xf]
    %v1503 = vld [vmem:[%s1458 + $0xb0] sm:$0xf]
    %v1504 = vld [vmem:[%s1458 + $0xb4] sm:$0xf]
    %v1505 = vld [vmem:[%s1458 + $0xb8] sm:$0xf]
    %v1506 = vld [vmem:[%s1458 + $0xbc] sm:$0xf]
    %v1507 = vld [vmem:[%s1458 + $0xc0] sm:$0xf]
    %v1508 = vld [vmem:[%s1458 + $0xc4] sm:$0xf]
    %v1509 = vld [vmem:[%s1458 + $0xc8] sm:$0xf]
    %v1510 = vld [vmem:[%s1458 + $0xcc] sm:$0xf]
    %v1511 = vld [vmem:[%s1458 + $0xd0] sm:$0xf]
    %v1512 = vld [vmem:[%s1458 + $0xd4] sm:$0xf]
    %v1513 = vld [vmem:[%s1458 + $0xd8] sm:$0xf]
    %v1514 = vld [vmem:[%s1458 + $0xdc] sm:$0xf]
    %v1515 = vld [vmem:[%s1458 + $0xe0] sm:$0xf]
    %v1516 = vld [vmem:[%s1458 + $0xe4] sm:$0xf]
    %v1517 = vld [vmem:[%s1458 + $0xe8] sm:$0xf]
    %v1518 = vld [vmem:[%s1458 + $0xec] sm:$0xf]
    %v1519 = vld [vmem:[%s1458 + $0xf0] sm:$0xf]
    %v1520 = vld [vmem:[%s1458 + $0xf4] sm:$0xf]
    %v1521 = vld [vmem:[%s1458 + $0xf8] sm:$0xf]
    %v1522 = vld [vmem:[%s1458 + $0xfc] sm:$0xf]
    %v1523 = vld [vmem:[%s3] sm:$0x1]
    %v1525 = vlaneseq
    %v1526 = vshrl.u32 %v1525, 7
    %v1527 = vsub.s32 0, %v1526
    %v1528 = vrot.slane %v1523, %v1527
    %v1530 = vcombine.low %v252, %v261
    %v1531 = vcombine.high %v252, %v261
    %v1532 = vcombine.low %v270, %v1448
    %v1533 = vcombine.high %v270, %v1448
    %v1535 = vunpack.c.l.s4 1983009808
    %v1536 = vunpack.c.0.s8 %v1535
    %v1537 = vlaneseq
    %v1538 = vshrl.u32 %v1537, 7
    %v1539 = vsub.s32 %v1536, %v1538
    %v1540 = vrot.slane %v1530, %v1539
    %v1542 = vunpack.c.l.s4 1983009808
    %v1543 = vunpack.c.0.s8 %v1542
    %v1544 = vlaneseq
    %v1545 = vshrl.u32 %v1544, 7
    %v1546 = vsub.s32 %v1543, %v1545
    %v1547 = vrot.slane %v1531, %v1546
    %v1549 = vunpack.c.l.s4 1983009808
    %v1550 = vunpack.c.0.s8 %v1549
    %v1551 = vlaneseq
    %v1552 = vshrl.u32 %v1551, 7
    %v1553 = vsub.s32 %v1550, %v1552
    %v1554 = vrot.slane %v1532, %v1553
    %v1556 = vunpack.c.l.s4 1983009808
    %v1557 = vunpack.c.0.s8 %v1556
    %v1558 = vlaneseq
    %v1559 = vshrl.u32 %v1558, 7
    %v1560 = vsub.s32 %v1557, %v1559
    %v1561 = vrot.slane %v1533, %v1560
    %v1562 = vcombine.low %v1540, %v1554
    %v1563 = vcombine.high %v1540, %v1554
    %v1564 = vcombine.low %v1547, %v1561
    %v1565 = vcombine.high %v1547, %v1561
    %v1566 = vcombine.low %v296, %v305
    %v1567 = vcombine.high %v296, %v305
    %v1568 = vcombine.low %v314, %v1457
    %v1569 = vcombine.high %v314, %v1457
    %v1571 = vunpack.c.l.s4 1983009808
    %v1572 = vunpack.c.0.s8 %v1571
    %v1573 = vlaneseq
    %v1574 = vshrl.u32 %v1573, 7
    %v1575 = vsub.s32 %v1572, %v1574
    %v1576 = vrot.slane %v1566, %v1575
    %v1578 = vunpack.c.l.s4 1983009808
    %v1579 = vunpack.c.0.s8 %v1578
    %v1580 = vlaneseq
    %v1581 = vshrl.u32 %v1580, 7
    %v1582 = vsub.s32 %v1579, %v1581
    %v1583 = vrot.slane %v1567, %v1582
    %v1585 = vunpack.c.l.s4 1983009808
    %v1586 = vunpack.c.0.s8 %v1585
    %v1587 = vlaneseq
    %v1588 = vshrl.u32 %v1587, 7
    %v1589 = vsub.s32 %v1586, %v1588
    %v1590 = vrot.slane %v1568, %v1589
    %v1592 = vunpack.c.l.s4 1983009808
    %v1593 = vunpack.c.0.s8 %v1592
    %v1594 = vlaneseq
    %v1595 = vshrl.u32 %v1594, 7
    %v1596 = vsub.s32 %v1593, %v1595
    %v1597 = vrot.slane %v1569, %v1596
    %v1598 = vcombine.low %v1576, %v1590
    %v1599 = vcombine.high %v1576, %v1590
    %v1600 = vcombine.low %v1583, %v1597
    %v1601 = vcombine.high %v1583, %v1597
    %v1674 = vunpack.c.l.b16 %v1459
    %v1675 = vunpack.c.l.b16 %v1460
    %v1676 = vunpack.c.l.b16 %v1461
    %v1677 = vunpack.c.l.b16 %v1462
    %v1678 = vunpack.c.l.b16 %v1463
    %v1679 = vunpack.c.l.b16 %v1464
    %v1680 = vunpack.c.l.b16 %v1465
    %v1681 = vunpack.c.l.b16 %v1466
    %v1682 = vunpack.c.l.b16 %v1467
    %v1683 = vunpack.c.l.b16 %v1468
    %v1684 = vunpack.c.l.b16 %v1469
    %v1685 = vunpack.c.l.b16 %v1470
    %v1686 = vunpack.c.l.b16 %v1471
    %v1687 = vunpack.c.l.b16 %v1472
    %v1688 = vunpack.c.l.b16 %v1473
    %v1689 = vunpack.c.l.b16 %v1474
    %v1690 = vunpack.c.l.b16 %v1475
    %v1691 = vunpack.c.l.b16 %v1476
    %v1692 = vunpack.c.l.b16 %v1477
    %v1693 = vunpack.c.l.b16 %v1478
    %v1694 = vunpack.c.l.b16 %v1479
    %v1695 = vunpack.c.l.b16 %v1480
    %v1696 = vunpack.c.l.b16 %v1481
    %v1697 = vunpack.c.l.b16 %v1482
    %v1698 = vunpack.c.l.b16 %v1483
    %v1699 = vunpack.c.l.b16 %v1484
    %v1700 = vunpack.c.l.b16 %v1485
    %v1701 = vunpack.c.l.b16 %v1486
    %v1702 = vunpack.c.l.b16 %v1487
    %v1703 = vunpack.c.l.b16 %v1488
    %v1704 = vunpack.c.l.b16 %v1489
    %v1705 = vunpack.c.l.b16 %v1490
    %v1706 = vunpack.c.l.b16 %v1491
    %v1707 = vunpack.c.l.b16 %v1492
    %v1708 = vunpack.c.l.b16 %v1493
    %v1709 = vunpack.c.l.b16 %v1494
    %v1710 = vunpack.c.l.b16 %v1495
    %v1711 = vunpack.c.l.b16 %v1496
    %v1712 = vunpack.c.l.b16 %v1497
    %v1713 = vunpack.c.l.b16 %v1498
    %v1714 = vunpack.c.l.b16 %v1499
    %v1715 = vunpack.c.l.b16 %v1500
    %v1716 = vunpack.c.l.b16 %v1501
    %v1717 = vunpack.c.l.b16 %v1502
    %v1718 = vunpack.c.l.b16 %v1503
    %v1719 = vunpack.c.l.b16 %v1504
    %v1720 = vunpack.c.l.b16 %v1505
    %v1721 = vunpack.c.l.b16 %v1506
    %v1722 = vunpack.c.l.b16 %v1507
    %v1723 = vunpack.c.l.b16 %v1508
    %v1724 = vunpack.c.l.b16 %v1509
    %v1725 = vunpack.c.l.b16 %v1510
    %v1726 = vunpack.c.l.b16 %v1511
    %v1727 = vunpack.c.l.b16 %v1512
    %v1728 = vunpack.c.l.b16 %v1513
    %v1729 = vunpack.c.l.b16 %v1514
    %v1730 = vunpack.c.l.b16 %v1515
    %v1731 = vunpack.c.l.b16 %v1516
    %v1732 = vunpack.c.l.b16 %v1517
    %v1733 = vunpack.c.l.b16 %v1518
    %v1734 = vunpack.c.l.b16 %v1519
    %v1735 = vunpack.c.l.b16 %v1520
    %v1736 = vunpack.c.l.b16 %v1521
    %v1737 = vunpack.c.l.b16 %v1522
    %v1738 = vpack.c.b16 %v1675, %v1674
    %v1739 = vpack.c.b16 %v1677, %v1676
    %v1740 = vpack.c.b16 %v1679, %v1678
    %v1741 = vpack.c.b16 %v1681, %v1680
    %v1742 = vpack.c.b16 %v1683, %v1682
    %v1743 = vpack.c.b16 %v1685, %v1684
    %v1744 = vpack.c.b16 %v1687, %v1686
    %v1745 = vpack.c.b16 %v1689, %v1688
    %v1746 = vpack.c.b16 %v1691, %v1690
    %v1747 = vpack.c.b16 %v1693, %v1692
    %v1748 = vpack.c.b16 %v1695, %v1694
    %v1749 = vpack.c.b16 %v1697, %v1696
    %v1750 = vpack.c.b16 %v1699, %v1698
    %v1751 = vpack.c.b16 %v1701, %v1700
    %v1752 = vpack.c.b16 %v1703, %v1702
    %v1753 = vpack.c.b16 %v1705, %v1704
    %v1754 = vpack.c.b16 %v1707, %v1706
    %v1755 = vpack.c.b16 %v1709, %v1708
    %v1756 = vpack.c.b16 %v1711, %v1710
    %v1757 = vpack.c.b16 %v1713, %v1712
    %v1758 = vpack.c.b16 %v1715, %v1714
    %v1759 = vpack.c.b16 %v1717, %v1716
    %v1760 = vpack.c.b16 %v1719, %v1718
    %v1761 = vpack.c.b16 %v1721, %v1720
    %v1762 = vpack.c.b16 %v1723, %v1722
    %v1763 = vpack.c.b16 %v1725, %v1724
    %v1764 = vpack.c.b16 %v1727, %v1726
    %v1765 = vpack.c.b16 %v1729, %v1728
    %v1766 = vpack.c.b16 %v1731, %v1730
    %v1767 = vpack.c.b16 %v1733, %v1732
    %v1768 = vpack.c.b16 %v1735, %v1734
    %v1769 = vpack.c.b16 %v1737, %v1736
    %1802 = vmatprep.subr.bf16.mxu0 0
    %1803 = vmatpush1.bf16.msra.mxu0 %v1745
    %1804 = vmatprep.subr.bf16.mxu0 0
    %1805 = vmatpush1.bf16.msra.mxu0 %v1744
    %1806 = vmatprep.subr.bf16.mxu0 0
    %1807 = vmatpush1.bf16.msra.mxu0 %v1743
    %1808 = vmatprep.subr.bf16.mxu0 0
    %1809 = vmatpush1.bf16.msra.mxu0 %v1742
    %1810 = vmatprep.subr.bf16.mxu0 0
    %1811 = vmatpush1.bf16.msra.mxu0 %v1741
    %1812 = vmatprep.subr.bf16.mxu0 0
    %1813 = vmatpush1.bf16.msra.mxu0 %v1740
    %1814 = vmatprep.subr.bf16.mxu0 0
    %1815 = vmatpush1.bf16.msra.mxu0 %v1739
    %1816 = vmatprep.subr.bf16.mxu0 0
    %1817 = vmatpush1.bf16.msra.mxu0 %v1738
    %1818 = vmatprep.subr.bf16.mxu0 0
    %1819 = vmatpush2.bf16.msra.mxu0 %v1753
    %1820 = vmatprep.subr.bf16.mxu0 0
    %1821 = vmatpush2.bf16.msra.mxu0 %v1752
    %1822 = vmatprep.subr.bf16.mxu0 0
    %1823 = vmatpush2.bf16.msra.mxu0 %v1751
    %1824 = vmatprep.subr.bf16.mxu0 0
    %1825 = vmatpush2.bf16.msra.mxu0 %v1750
    %1826 = vmatprep.subr.bf16.mxu0 0
    %1827 = vmatpush2.bf16.msra.mxu0 %v1749
    %1828 = vmatprep.subr.bf16.mxu0 0
    %1829 = vmatpush2.bf16.msra.mxu0 %v1748
    %1830 = vmatprep.subr.bf16.mxu0 0
    %1831 = vmatpush2.bf16.msra.mxu0 %v1747
    %1832 = vmatprep.subr.bf16.mxu0 0
    %1833 = vmatpush2.bf16.msra.mxu0 %v1746
    %1834 = vmatprep.mubr.bf16.mxu0 %v1563
    %1835 = vmatmul.mubr.bf16.gmra.mxu0 %v1562
    %v1836 = vpop.f32.mrf.mxu0
    %v1837 = vadd.f32 %v1528, %v1836
    %v1838 = vpop.f32.mrf.mxu0
    %v1839 = vpop.f32.mrf.mxu0
    %v1840 = vadd.f32 %v1528, %v1839
    %v1841 = vpop.f32.mrf.mxu0
    %1842 = vmatprep.mubr.bf16.mxu0 %v1599
    %1843 = vmatmul.mubr.bf16.gmra.mxu0 %v1598
    %v1844 = vpop.f32.mrf.mxu0
    %v1845 = vadd.f32 %v1528, %v1844
    %v1846 = vpop.f32.mrf.mxu0
    %v1847 = vpop.f32.mrf.mxu0
    %v1848 = vadd.f32 %v1528, %v1847
    %v1849 = vpop.f32.mrf.mxu0
    %1850 = vdwg.mxu0
    %1851 = vmatprep.subr.bf16.mxu0 0
    %1852 = vmatpush1.bf16.msra.mxu0 %v1761
    %1853 = vmatprep.subr.bf16.mxu0 0
    %1854 = vmatpush1.bf16.msra.mxu0 %v1760
    %1855 = vmatprep.subr.bf16.mxu0 0
    %1856 = vmatpush1.bf16.msra.mxu0 %v1759
    %1857 = vmatprep.subr.bf16.mxu0 0
    %1858 = vmatpush1.bf16.msra.mxu0 %v1758
    %1859 = vmatprep.subr.bf16.mxu0 0
    %1860 = vmatpush1.bf16.msra.mxu0 %v1757
    %1861 = vmatprep.subr.bf16.mxu0 0
    %1862 = vmatpush1.bf16.msra.mxu0 %v1756
    %1863 = vmatprep.subr.bf16.mxu0 0
    %1864 = vmatpush1.bf16.msra.mxu0 %v1755
    %1865 = vmatprep.subr.bf16.mxu0 0
    %1866 = vmatpush1.bf16.msra.mxu0 %v1754
    %1867 = vmatprep.subr.bf16.mxu0 0
    %1868 = vmatpush2.bf16.msra.mxu0 %v1769
    %1869 = vmatprep.subr.bf16.mxu0 0
    %1870 = vmatpush2.bf16.msra.mxu0 %v1768
    %1871 = vmatprep.subr.bf16.mxu0 0
    %1872 = vmatpush2.bf16.msra.mxu0 %v1767
    %1873 = vmatprep.subr.bf16.mxu0 0
    %1874 = vmatpush2.bf16.msra.mxu0 %v1766
    %1875 = vmatprep.subr.bf16.mxu0 0
    %1876 = vmatpush2.bf16.msra.mxu0 %v1765
    %1877 = vmatprep.subr.bf16.mxu0 0
    %1878 = vmatpush2.bf16.msra.mxu0 %v1764
    %1879 = vmatprep.subr.bf16.mxu0 0
    %1880 = vmatpush2.bf16.msra.mxu0 %v1763
    %1881 = vmatprep.subr.bf16.mxu0 0
    %1882 = vmatpush2.bf16.msra.mxu0 %v1762
    %1883 = vmatprep.mubr.bf16.mxu0 %v1565
    %1884 = vmatmul.mubr.bf16.gmra.mxu0 %v1564
    %v1885 = vpop.f32.mrf.mxu0
    %v1886 = vadd.f32 %v1837, %v1885
    %v1887 = vpop.f32.mrf.mxu0
    %v1888 = vpop.f32.mrf.mxu0
    %v1889 = vadd.f32 %v1840, %v1888
    %v1890 = vpop.f32.mrf.mxu0
    %1891 = vmatprep.mubr.bf16.mxu0 %v1601
    %1892 = vmatmul.mubr.bf16.gmra.mxu0 %v1600
    %v1893 = vpop.f32.mrf.mxu0
    %v1894 = vadd.f32 %v1845, %v1893
    %v1895 = vpop.f32.mrf.mxu0
    %v1896 = vpop.f32.mrf.mxu0
    %v1897 = vadd.f32 %v1848, %v1896
    %v1898 = vpop.f32.mrf.mxu0
    %1899 = vdwg.mxu0
    %v1900 = vadd.f32 %v1886, %v1889
    %v1901 = vadd.f32 %v1900, %v1894
    %v1902 = vadd.f32 %v1901, %v1897
    %v1903 = vrot.slane %v1902, 4
    %v1904 = vadd.f32 %v1902, %v1903
    %v1905 = vrot.slane %v1904, 2
    %v1906 = vadd.f32 %v1904, %v1905
    %v1907 = vrot.slane %v1906, 1
    %v1908 = vadd.f32 %v1906, %v1907
    %v1909 = vmul.f32 %v1886, %v1886
    %v1910 = vmul.f32 %v1889, %v1889
    %v1911 = vmul.f32 %v1894, %v1894
    %v1912 = vmul.f32 %v1897, %v1897
    %v1913 = vadd.f32 %v1909, %v1910
    %v1914 = vadd.f32 %v1913, %v1911
    %v1915 = vadd.f32 %v1914, %v1912
    %v1916 = vrot.slane %v1915, 4
    %v1917 = vadd.f32 %v1915, %v1916
    %v1918 = vrot.slane %v1917, 2
    %v1919 = vadd.f32 %v1917, %v1918
    %v1920 = vrot.slane %v1919, 1
    %v1921 = vadd.f32 %v1919, %v1920
    %v1922 = vadd.f32 %v1364, %v1908
    %v1923 = vadd.f32 %v1365, %v1921
    %v1924 = vpack.c.bf16 %v1889, %v1886
    %v1925 = vpack.c.bf16 %v1897, %v1894
    %v1926 = vcombine.high %v269, %v1447
    %v1927 = vcombine.high %v313, %v1456
    %v1929 = vshrl.u32 %v1448, 16
    %v1931 = vrot.slane %v1929, 6
    %v1932 = vshll.u32 %v1448, 16
    %v1934 = vrot.slane %v1932, 7
    %v1935 = vor.u32 %v1931, %v1934
    %v1936 = vrot.slane %v1935, 2
    %v1938 = vshll.u32 %v1926, 16
    %v1940 = vrot.slane %v1938, 7
    %v1941 = vsel %vm794, %v1936, %v1940
    %v1943 = vshrl.u32 %v1457, 16
    %v1945 = vrot.slane %v1943, 6
    %v1946 = vshll.u32 %v1457, 16
    %v1948 = vrot.slane %v1946, 7
    %v1949 = vor.u32 %v1945, %v1948
    %v1950 = vrot.slane %v1949, 2
    %v1952 = vshll.u32 %v1927, 16
    %v1954 = vrot.slane %v1952, 7
    %v1955 = vsel %vm794, %v1950, %v1954
    %s1956 = scalar_lea.vmem [#allocation2], 768
    %v1957 = vld [vmem:[%s1956] sm:$0xf]
    %v1958 = vld [vmem:[%s1956 + $0x4] sm:$0xf]
    %v1959 = vld [vmem:[%s1956 + $0x8] sm:$0xf]
    %v1960 = vld [vmem:[%s1956 + $0xc] sm:$0xf]
    %v1961 = vld [vmem:[%s1956 + $0x10] sm:$0xf]
    %v1962 = vld [vmem:[%s1956 + $0x14] sm:$0xf]
    %v1963 = vld [vmem:[%s1956 + $0x18] sm:$0xf]
    %v1964 = vld [vmem:[%s1956 + $0x1c] sm:$0xf]
    %v1965 = vld [vmem:[%s1956 + $0x20] sm:$0xf]
    %v1966 = vld [vmem:[%s1956 + $0x24] sm:$0xf]
    %v1967 = vld [vmem:[%s1956 + $0x28] sm:$0xf]
    %v1968 = vld [vmem:[%s1956 + $0x2c] sm:$0xf]
    %v1969 = vld [vmem:[%s1956 + $0x30] sm:$0xf]
    %v1970 = vld [vmem:[%s1956 + $0x34] sm:$0xf]
    %v1971 = vld [vmem:[%s1956 + $0x38] sm:$0xf]
    %v1972 = vld [vmem:[%s1956 + $0x3c] sm:$0xf]
    %v1973 = vld [vmem:[%s1956 + $0x40] sm:$0xf]
    %v1974 = vld [vmem:[%s1956 + $0x44] sm:$0xf]
    %v1975 = vld [vmem:[%s1956 + $0x48] sm:$0xf]
    %v1976 = vld [vmem:[%s1956 + $0x4c] sm:$0xf]
    %v1977 = vld [vmem:[%s1956 + $0x50] sm:$0xf]
    %v1978 = vld [vmem:[%s1956 + $0x54] sm:$0xf]
    %v1979 = vld [vmem:[%s1956 + $0x58] sm:$0xf]
    %v1980 = vld [vmem:[%s1956 + $0x5c] sm:$0xf]
    %v1981 = vld [vmem:[%s1956 + $0x60] sm:$0xf]
    %v1982 = vld [vmem:[%s1956 + $0x64] sm:$0xf]
    %v1983 = vld [vmem:[%s1956 + $0x68] sm:$0xf]
    %v1984 = vld [vmem:[%s1956 + $0x6c] sm:$0xf]
    %v1985 = vld [vmem:[%s1956 + $0x70] sm:$0xf]
    %v1986 = vld [vmem:[%s1956 + $0x74] sm:$0xf]
    %v1987 = vld [vmem:[%s1956 + $0x78] sm:$0xf]
    %v1988 = vld [vmem:[%s1956 + $0x7c] sm:$0xf]
    %v1989 = vld [vmem:[%s1956 + $0x80] sm:$0xf]
    %v1990 = vld [vmem:[%s1956 + $0x84] sm:$0xf]
    %v1991 = vld [vmem:[%s1956 + $0x88] sm:$0xf]
    %v1992 = vld [vmem:[%s1956 + $0x8c] sm:$0xf]
    %v1993 = vld [vmem:[%s1956 + $0x90] sm:$0xf]
    %v1994 = vld [vmem:[%s1956 + $0x94] sm:$0xf]
    %v1995 = vld [vmem:[%s1956 + $0x98] sm:$0xf]
    %v1996 = vld [vmem:[%s1956 + $0x9c] sm:$0xf]
    %v1997 = vld [vmem:[%s1956 + $0xa0] sm:$0xf]
    %v1998 = vld [vmem:[%s1956 + $0xa4] sm:$0xf]
    %v1999 = vld [vmem:[%s1956 + $0xa8] sm:$0xf]
    %v2000 = vld [vmem:[%s1956 + $0xac] sm:$0xf]
    %v2001 = vld [vmem:[%s1956 + $0xb0] sm:$0xf]
    %v2002 = vld [vmem:[%s1956 + $0xb4] sm:$0xf]
    %v2003 = vld [vmem:[%s1956 + $0xb8] sm:$0xf]
    %v2004 = vld [vmem:[%s1956 + $0xbc] sm:$0xf]
    %v2005 = vld [vmem:[%s1956 + $0xc0] sm:$0xf]
    %v2006 = vld [vmem:[%s1956 + $0xc4] sm:$0xf]
    %v2007 = vld [vmem:[%s1956 + $0xc8] sm:$0xf]
    %v2008 = vld [vmem:[%s1956 + $0xcc] sm:$0xf]
    %v2009 = vld [vmem:[%s1956 + $0xd0] sm:$0xf]
    %v2010 = vld [vmem:[%s1956 + $0xd4] sm:$0xf]
    %v2011 = vld [vmem:[%s1956 + $0xd8] sm:$0xf]
    %v2012 = vld [vmem:[%s1956 + $0xdc] sm:$0xf]
    %v2013 = vld [vmem:[%s1956 + $0xe0] sm:$0xf]
    %v2014 = vld [vmem:[%s1956 + $0xe4] sm:$0xf]
    %v2015 = vld [vmem:[%s1956 + $0xe8] sm:$0xf]
    %v2016 = vld [vmem:[%s1956 + $0xec] sm:$0xf]
    %v2017 = vld [vmem:[%s1956 + $0xf0] sm:$0xf]
    %v2018 = vld [vmem:[%s1956 + $0xf4] sm:$0xf]
    %v2019 = vld [vmem:[%s1956 + $0xf8] sm:$0xf]
    %v2020 = vld [vmem:[%s1956 + $0xfc] sm:$0xf]
    %v2021 = vcombine.low %v822, %v836
    %v2022 = vcombine.high %v822, %v836
    %v2023 = vcombine.low %v850, %v1941
    %v2024 = vcombine.high %v850, %v1941
    %v2026 = vunpack.c.l.s4 1983009808
    %v2027 = vunpack.c.0.s8 %v2026
    %v2028 = vlaneseq
    %v2029 = vshrl.u32 %v2028, 7
    %v2030 = vsub.s32 %v2027, %v2029
    %v2031 = vrot.slane %v2021, %v2030
    %v2033 = vunpack.c.l.s4 1983009808
    %v2034 = vunpack.c.0.s8 %v2033
    %v2035 = vlaneseq
    %v2036 = vshrl.u32 %v2035, 7
    %v2037 = vsub.s32 %v2034, %v2036
    %v2038 = vrot.slane %v2022, %v2037
    %v2040 = vunpack.c.l.s4 1983009808
    %v2041 = vunpack.c.0.s8 %v2040
    %v2042 = vlaneseq
    %v2043 = vshrl.u32 %v2042, 7
    %v2044 = vsub.s32 %v2041, %v2043
    %v2045 = vrot.slane %v2023, %v2044
    %v2047 = vunpack.c.l.s4 1983009808
    %v2048 = vunpack.c.0.s8 %v2047
    %v2049 = vlaneseq
    %v2050 = vshrl.u32 %v2049, 7
    %v2051 = vsub.s32 %v2048, %v2050
    %v2052 = vrot.slane %v2024, %v2051
    %v2053 = vcombine.low %v2031, %v2045
    %v2054 = vcombine.high %v2031, %v2045
    %v2055 = vcombine.low %v2038, %v2052
    %v2056 = vcombine.high %v2038, %v2052
    %v2057 = vcombine.low %v878, %v892
    %v2058 = vcombine.high %v878, %v892
    %v2059 = vcombine.low %v906, %v1955
    %v2060 = vcombine.high %v906, %v1955
    %v2062 = vunpack.c.l.s4 1983009808
    %v2063 = vunpack.c.0.s8 %v2062
    %v2064 = vlaneseq
    %v2065 = vshrl.u32 %v2064, 7
    %v2066 = vsub.s32 %v2063, %v2065
    %v2067 = vrot.slane %v2057, %v2066
    %v2069 = vunpack.c.l.s4 1983009808
    %v2070 = vunpack.c.0.s8 %v2069
    %v2071 = vlaneseq
    %v2072 = vshrl.u32 %v2071, 7
    %v2073 = vsub.s32 %v2070, %v2072
    %v2074 = vrot.slane %v2058, %v2073
    %v2076 = vunpack.c.l.s4 1983009808
    %v2077 = vunpack.c.0.s8 %v2076
    %v2078 = vlaneseq
    %v2079 = vshrl.u32 %v2078, 7
    %v2080 = vsub.s32 %v2077, %v2079
    %v2081 = vrot.slane %v2059, %v2080
    %v2083 = vunpack.c.l.s4 1983009808
    %v2084 = vunpack.c.0.s8 %v2083
    %v2085 = vlaneseq
    %v2086 = vshrl.u32 %v2085, 7
    %v2087 = vsub.s32 %v2084, %v2086
    %v2088 = vrot.slane %v2060, %v2087
    %v2089 = vcombine.low %v2067, %v2081
    %v2090 = vcombine.high %v2067, %v2081
    %v2091 = vcombine.low %v2074, %v2088
    %v2092 = vcombine.high %v2074, %v2088
    %v2165 = vunpack.c.l.b16 %v1957
    %v2166 = vunpack.c.l.b16 %v1958
    %v2167 = vunpack.c.l.b16 %v1959
    %v2168 = vunpack.c.l.b16 %v1960
    %v2169 = vunpack.c.l.b16 %v1961
    %v2170 = vunpack.c.l.b16 %v1962
    %v2171 = vunpack.c.l.b16 %v1963
    %v2172 = vunpack.c.l.b16 %v1964
    %v2173 = vunpack.c.l.b16 %v1965
    %v2174 = vunpack.c.l.b16 %v1966
    %v2175 = vunpack.c.l.b16 %v1967
    %v2176 = vunpack.c.l.b16 %v1968
    %v2177 = vunpack.c.l.b16 %v1969
    %v2178 = vunpack.c.l.b16 %v1970
    %v2179 = vunpack.c.l.b16 %v1971
    %v2180 = vunpack.c.l.b16 %v1972
    %v2181 = vunpack.c.l.b16 %v1973
    %v2182 = vunpack.c.l.b16 %v1974
    %v2183 = vunpack.c.l.b16 %v1975
    %v2184 = vunpack.c.l.b16 %v1976
    %v2185 = vunpack.c.l.b16 %v1977
    %v2186 = vunpack.c.l.b16 %v1978
    %v2187 = vunpack.c.l.b16 %v1979
    %v2188 = vunpack.c.l.b16 %v1980
    %v2189 = vunpack.c.l.b16 %v1981
    %v2190 = vunpack.c.l.b16 %v1982
    %v2191 = vunpack.c.l.b16 %v1983
    %v2192 = vunpack.c.l.b16 %v1984
    %v2193 = vunpack.c.l.b16 %v1985
    %v2194 = vunpack.c.l.b16 %v1986
    %v2195 = vunpack.c.l.b16 %v1987
    %v2196 = vunpack.c.l.b16 %v1988
    %v2197 = vunpack.c.l.b16 %v1989
    %v2198 = vunpack.c.l.b16 %v1990
    %v2199 = vunpack.c.l.b16 %v1991
    %v2200 = vunpack.c.l.b16 %v1992
    %v2201 = vunpack.c.l.b16 %v1993
    %v2202 = vunpack.c.l.b16 %v1994
    %v2203 = vunpack.c.l.b16 %v1995
    %v2204 = vunpack.c.l.b16 %v1996
    %v2205 = vunpack.c.l.b16 %v1997
    %v2206 = vunpack.c.l.b16 %v1998
    %v2207 = vunpack.c.l.b16 %v1999
    %v2208 = vunpack.c.l.b16 %v2000
    %v2209 = vunpack.c.l.b16 %v2001
    %v2210 = vunpack.c.l.b16 %v2002
    %v2211 = vunpack.c.l.b16 %v2003
    %v2212 = vunpack.c.l.b16 %v2004
    %v2213 = vunpack.c.l.b16 %v2005
    %v2214 = vunpack.c.l.b16 %v2006
    %v2215 = vunpack.c.l.b16 %v2007
    %v2216 = vunpack.c.l.b16 %v2008
    %v2217 = vunpack.c.l.b16 %v2009
    %v2218 = vunpack.c.l.b16 %v2010
    %v2219 = vunpack.c.l.b16 %v2011
    %v2220 = vunpack.c.l.b16 %v2012
    %v2221 = vunpack.c.l.b16 %v2013
    %v2222 = vunpack.c.l.b16 %v2014
    %v2223 = vunpack.c.l.b16 %v2015
    %v2224 = vunpack.c.l.b16 %v2016
    %v2225 = vunpack.c.l.b16 %v2017
    %v2226 = vunpack.c.l.b16 %v2018
    %v2227 = vunpack.c.l.b16 %v2019
    %v2228 = vunpack.c.l.b16 %v2020
    %v2229 = vpack.c.b16 %v2166, %v2165
    %v2230 = vpack.c.b16 %v2168, %v2167
    %v2231 = vpack.c.b16 %v2170, %v2169
    %v2232 = vpack.c.b16 %v2172, %v2171
    %v2233 = vpack.c.b16 %v2174, %v2173
    %v2234 = vpack.c.b16 %v2176, %v2175
    %v2235 = vpack.c.b16 %v2178, %v2177
    %v2236 = vpack.c.b16 %v2180, %v2179
    %v2237 = vpack.c.b16 %v2182, %v2181
    %v2238 = vpack.c.b16 %v2184, %v2183
    %v2239 = vpack.c.b16 %v2186, %v2185
    %v2240 = vpack.c.b16 %v2188, %v2187
    %v2241 = vpack.c.b16 %v2190, %v2189
    %v2242 = vpack.c.b16 %v2192, %v2191
    %v2243 = vpack.c.b16 %v2194, %v2193
    %v2244 = vpack.c.b16 %v2196, %v2195
    %v2245 = vpack.c.b16 %v2198, %v2197
    %v2246 = vpack.c.b16 %v2200, %v2199
    %v2247 = vpack.c.b16 %v2202, %v2201
    %v2248 = vpack.c.b16 %v2204, %v2203
    %v2249 = vpack.c.b16 %v2206, %v2205
    %v2250 = vpack.c.b16 %v2208, %v2207
    %v2251 = vpack.c.b16 %v2210, %v2209
    %v2252 = vpack.c.b16 %v2212, %v2211
    %v2253 = vpack.c.b16 %v2214, %v2213
    %v2254 = vpack.c.b16 %v2216, %v2215
    %v2255 = vpack.c.b16 %v2218, %v2217
    %v2256 = vpack.c.b16 %v2220, %v2219
    %v2257 = vpack.c.b16 %v2222, %v2221
    %v2258 = vpack.c.b16 %v2224, %v2223
    %v2259 = vpack.c.b16 %v2226, %v2225
    %v2260 = vpack.c.b16 %v2228, %v2227
    %2293 = vmatprep.subr.bf16.mxu0 0
    %2294 = vmatpush1.bf16.msra.mxu0 %v2236
    %2295 = vmatprep.subr.bf16.mxu0 0
    %2296 = vmatpush1.bf16.msra.mxu0 %v2235
    %2297 = vmatprep.subr.bf16.mxu0 0
    %2298 = vmatpush1.bf16.msra.mxu0 %v2234
    %2299 = vmatprep.subr.bf16.mxu0 0
    %2300 = vmatpush1.bf16.msra.mxu0 %v2233
    %2301 = vmatprep.subr.bf16.mxu0 0
    %2302 = vmatpush1.bf16.msra.mxu0 %v2232
    %2303 = vmatprep.subr.bf16.mxu0 0
    %2304 = vmatpush1.bf16.msra.mxu0 %v2231
    %2305 = vmatprep.subr.bf16.mxu0 0
    %2306 = vmatpush1.bf16.msra.mxu0 %v2230
    %2307 = vmatprep.subr.bf16.mxu0 0
    %2308 = vmatpush1.bf16.msra.mxu0 %v2229
    %2309 = vmatprep.subr.bf16.mxu0 0
    %2310 = vmatpush2.bf16.msra.mxu0 %v2244
    %2311 = vmatprep.subr.bf16.mxu0 0
    %2312 = vmatpush2.bf16.msra.mxu0 %v2243
    %2313 = vmatprep.subr.bf16.mxu0 0
    %2314 = vmatpush2.bf16.msra.mxu0 %v2242
    %2315 = vmatprep.subr.bf16.mxu0 0
    %2316 = vmatpush2.bf16.msra.mxu0 %v2241
    %2317 = vmatprep.subr.bf16.mxu0 0
    %2318 = vmatpush2.bf16.msra.mxu0 %v2240
    %2319 = vmatprep.subr.bf16.mxu0 0
    %2320 = vmatpush2.bf16.msra.mxu0 %v2239
    %2321 = vmatprep.subr.bf16.mxu0 0
    %2322 = vmatpush2.bf16.msra.mxu0 %v2238
    %2323 = vmatprep.subr.bf16.mxu0 0
    %2324 = vmatpush2.bf16.msra.mxu0 %v2237
    %2325 = vmatprep.mubr.bf16.mxu0 %v2054
    %2326 = vmatmul.mubr.bf16.gmra.mxu0 %v2053
    %v2327 = vpop.f32.mrf.mxu0
    %v2328 = vadd.f32 %v1528, %v2327
    %v2329 = vpop.f32.mrf.mxu0
    %v2330 = vpop.f32.mrf.mxu0
    %v2331 = vadd.f32 %v1528, %v2330
    %v2332 = vpop.f32.mrf.mxu0
    %2333 = vmatprep.mubr.bf16.mxu0 %v2090
    %2334 = vmatmul.mubr.bf16.gmra.mxu0 %v2089
    %v2335 = vpop.f32.mrf.mxu0
    %v2336 = vadd.f32 %v1528, %v2335
    %v2337 = vpop.f32.mrf.mxu0
    %v2338 = vpop.f32.mrf.mxu0
    %v2339 = vadd.f32 %v1528, %v2338
    %v2340 = vpop.f32.mrf.mxu0
    %2341 = vdwg.mxu0
    %2342 = vmatprep.subr.bf16.mxu0 0
    %2343 = vmatpush1.bf16.msra.mxu0 %v2252
    %2344 = vmatprep.subr.bf16.mxu0 0
    %2345 = vmatpush1.bf16.msra.mxu0 %v2251
    %2346 = vmatprep.subr.bf16.mxu0 0
    %2347 = vmatpush1.bf16.msra.mxu0 %v2250
    %2348 = vmatprep.subr.bf16.mxu0 0
    %2349 = vmatpush1.bf16.msra.mxu0 %v2249
    %2350 = vmatprep.subr.bf16.mxu0 0
    %2351 = vmatpush1.bf16.msra.mxu0 %v2248
    %2352 = vmatprep.subr.bf16.mxu0 0
    %2353 = vmatpush1.bf16.msra.mxu0 %v2247
    %2354 = vmatprep.subr.bf16.mxu0 0
    %2355 = vmatpush1.bf16.msra.mxu0 %v2246
    %2356 = vmatprep.subr.bf16.mxu0 0
    %2357 = vmatpush1.bf16.msra.mxu0 %v2245
    %2358 = vmatprep.subr.bf16.mxu0 0
    %2359 = vmatpush2.bf16.msra.mxu0 %v2260
    %2360 = vmatprep.subr.bf16.mxu0 0
    %2361 = vmatpush2.bf16.msra.mxu0 %v2259
    %2362 = vmatprep.subr.bf16.mxu0 0
    %2363 = vmatpush2.bf16.msra.mxu0 %v2258
    %2364 = vmatprep.subr.bf16.mxu0 0
    %2365 = vmatpush2.bf16.msra.mxu0 %v2257
    %2366 = vmatprep.subr.bf16.mxu0 0
    %2367 = vmatpush2.bf16.msra.mxu0 %v2256
    %2368 = vmatprep.subr.bf16.mxu0 0
    %2369 = vmatpush2.bf16.msra.mxu0 %v2255
    %2370 = vmatprep.subr.bf16.mxu0 0
    %2371 = vmatpush2.bf16.msra.mxu0 %v2254
    %2372 = vmatprep.subr.bf16.mxu0 0
    %2373 = vmatpush2.bf16.msra.mxu0 %v2253
    %2374 = vmatprep.mubr.bf16.mxu0 %v2056
    %2375 = vmatmul.mubr.bf16.gmra.mxu0 %v2055
    %v2376 = vpop.f32.mrf.mxu0
    %v2377 = vadd.f32 %v2328, %v2376
    %v2378 = vpop.f32.mrf.mxu0
    %v2379 = vpop.f32.mrf.mxu0
    %v2380 = vadd.f32 %v2331, %v2379
    %v2381 = vpop.f32.mrf.mxu0
    %2382 = vmatprep.mubr.bf16.mxu0 %v2092
    %2383 = vmatmul.mubr.bf16.gmra.mxu0 %v2091
    %v2384 = vpop.f32.mrf.mxu0
    %v2385 = vadd.f32 %v2336, %v2384
    %v2386 = vpop.f32.mrf.mxu0
    %v2387 = vpop.f32.mrf.mxu0
    %v2388 = vadd.f32 %v2339, %v2387
    %v2389 = vpop.f32.mrf.mxu0
    %2390 = vdwg.mxu0
    %v2391 = vadd.f32 %v2377, %v2380
    %v2392 = vadd.f32 %v2391, %v2385
    %v2393 = vadd.f32 %v2392, %v2388
    %v2394 = vrot.slane %v2393, 4
    %v2395 = vadd.f32 %v2393, %v2394
    %v2396 = vrot.slane %v2395, 2
    %v2397 = vadd.f32 %v2395, %v2396
    %v2398 = vrot.slane %v2397, 1
    %v2399 = vadd.f32 %v2397, %v2398
    %v2400 = vmul.f32 %v2377, %v2377
    %v2401 = vmul.f32 %v2380, %v2380
    %v2402 = vmul.f32 %v2385, %v2385
    %v2403 = vmul.f32 %v2388, %v2388
    %v2404 = vadd.f32 %v2400, %v2401
    %v2405 = vadd.f32 %v2404, %v2402
    %v2406 = vadd.f32 %v2405, %v2403
    %v2407 = vrot.slane %v2406, 4
    %v2408 = vadd.f32 %v2406, %v2407
    %v2409 = vrot.slane %v2408, 2
    %v2410 = vadd.f32 %v2408, %v2409
    %v2411 = vrot.slane %v2410, 1
    %v2412 = vadd.f32 %v2410, %v2411
    %v2413 = vadd.f32 %v1922, %v2399
    %v2414 = vadd.f32 %v1923, %v2412
    %v2415 = vpack.c.bf16 %v2380, %v2377
    %v2416 = vpack.c.bf16 %v2388, %v2385
    %v2421 = vcombine.low %v1924, %v2415
    %v2422 = vcombine.high %v1924, %v2415
    %v2424 = vunpack.c.l.s4 1983009808
    %v2425 = vunpack.c.0.s8 %v2424
    %v2426 = vlaneseq
    %v2427 = vshrl.u32 %v2426, 7
    %v2428 = vsub.s32 %v2425, %v2427
    %v2429 = vrot.slane %v2421, %v2428
    %v2431 = vunpack.c.l.s4 1983009808
    %v2432 = vunpack.c.0.s8 %v2431
    %v2433 = vlaneseq
    %v2434 = vshrl.u32 %v2433, 7
    %v2435 = vsub.s32 %v2432, %v2434
    %v2436 = vrot.slane %v2422, %v2435
    %v2437 = vcombine.high %v2429, %v2429
    %v2438 = vcombine.high %v2436, %v2436
    %v2439 = vcombine.low %v1925, %v2416
    %v2440 = vcombine.high %v1925, %v2416
    %v2442 = vunpack.c.l.s4 1983009808
    %v2443 = vunpack.c.0.s8 %v2442
    %v2444 = vlaneseq
    %v2445 = vshrl.u32 %v2444, 7
    %v2446 = vsub.s32 %v2443, %v2445
    %v2447 = vrot.slane %v2439, %v2446
    %v2449 = vunpack.c.l.s4 1983009808
    %v2450 = vunpack.c.0.s8 %v2449
    %v2451 = vlaneseq
    %v2452 = vshrl.u32 %v2451, 7
    %v2453 = vsub.s32 %v2450, %v2452
    %v2454 = vrot.slane %v2440, %v2453
    %v2455 = vcombine.high %v2447, %v2447
    %v2456 = vcombine.high %v2454, %v2454
    %s2465 = scalar_lea.vmem %s4, 4
    %2466 = vst [vmem:[%s2465] sm:$0xf] %v2429
    %2467 = vst [vmem:[%s2465 + $0x8] sm:$0xf] %v2437
    %2468 = vst [vmem:[%s2465 + $0x10] sm:$0xf] %v2436
    %2469 = vst [vmem:[%s2465 + $0x18] sm:$0xf] %v2438
    %2470 = vst [vmem:[%s2465 + $0x20] sm:$0xf] %v2447
    %2471 = vst [vmem:[%s2465 + $0x28] sm:$0xf] %v2455
    %2472 = vst [vmem:[%s2465 + $0x30] sm:$0xf] %v2454
    %2473 = vst [vmem:[%s2465 + $0x38] sm:$0xf] %v2456
    %p2474 = scmp.eq.s32.totalorder 0, 0
    // Predicated region
    $region22: #{generator_forward_pallas.6} parent=1 // pred_check
      %p2475 = pneg %p2474
    $region23: #{generator_forward_pallas.6} parent=1 // pred_check_branch
      %2477 = sbr.rel (%p2475) target = $region25
    $region24: #{generator_forward_pallas.6} parent=1 // pred_region
      %2478 = vst [vmem:[%s5] sm:$0x3] 0.0
    $region25: #{generator_forward_pallas.6} parent=1 // pred_fallthru
      _
    %v2479 = vld [vmem:[%s5] sm:$0x3]
    %vm2480 = vcmask 1040384
    %v2481 = vsel %vm2480, %v2413, %v2414
    %v2482 = vadd.f32 %v2479, %v2481
    %2483 = vst [vmem:[%s5] sm:$0x3] %v2482
    // Predicated region
    $region26: #{generator_forward_pallas.6} parent=1 // pred_check
      _
    $region27: #{generator_forward_pallas.6} parent=1 // pred_check_branch
      %2485 = sbr.rel (0) target = $region29
    $region28: #{generator_forward_pallas.6} parent=1 // pred_region
      _
    $region29: #{generator_forward_pallas.6} parent=1 // pred_fallthru
      _
    // Predicated region
    $region30: #{generator_forward_pallas.6} parent=1 // pred_check
      _
    $region31: #{generator_forward_pallas.6} parent=1 // pred_check_branch
      %2487 = sbr.rel (0) target = $region33
    $region32: #{generator_forward_pallas.6} parent=1 // pred_region
      _
    $region33: #{generator_forward_pallas.6} parent=1 // pred_fallthru
      _
    // Predicated region
    $region34: #{generator_forward_pallas.6} parent=1 // pred_check
      _
    $region35: #{generator_forward_pallas.6} parent=1 // pred_check_branch
      %2489 = sbr.rel (0) target = $region37
    $region36: #{generator_forward_pallas.6} parent=1 // pred_region
      _
    $region37: #{generator_forward_pallas.6} parent=1 // pred_fallthru
      _
    // Predicated region
    $region38: #{generator_forward_pallas.6} parent=1 // pred_check
      _
    $region39: #{generator_forward_pallas.6} parent=1 // pred_check_branch
      %2491 = sbr.rel (0) target = $region41
    $region40: #{generator_forward_pallas.6} parent=1 // pred_region
      _
    $region41: #{generator_forward_pallas.6} parent=1 // pred_fallthru
      _
    %2492 = vsyncpa [#allocation3], 1

// kernel: generator_forward_pallas.7
$region0: #{generator_forward_pallas.7}
  #allocation0 [shape = 'u32[]', space=smem, size = 0x4, offset = 0x4, fixed_abs, tag = 'smem constant byte address 0x4 - core index']
  #allocation1 [shape = 'u32[144,128]{1,0:T(1,128)}', space=vmem, size = 0x12000, scoped, tag = 'internal scratch']
  %s0 = inlined_call_operand.vmem [shape: bf16[2,1,10,10,128], index: 0, kind: input, shape index: {}]
  %s1 = inlined_call_operand.vmem [shape: f32[2,128], index: 1, kind: input, shape index: {}]
  %s2 = inlined_call_operand.vmem [shape: bf16[4,512,8], index: 2, kind: input, shape index: {}]
  %s3 = inlined_call_operand.vmem [shape: f32[1,8], index: 3, kind: input, shape index: {}]
  %s4 = inlined_call_operand.vmem [shape: f32[2,8,2,8,16], index: 4, kind: output, shape index: {}]
  %s5 = sld [smem:[#allocation0]]
  $region26: #{generator_forward_pallas.7} parent=0
    _
  %s7 = ssub.s32 1, %s5
  %s8 = scalar_select 0, %s7, %s5
  // Predicated region
  $region2: #{generator_forward_pallas.7} parent=0 // pred_check
    _
  $region3: #{generator_forward_pallas.7} parent=0 // pred_check_branch
    %10 = sbr.rel (0) target = $region5
  $region4: #{generator_forward_pallas.7} parent=0 // pred_region
    _
  $region5: #{generator_forward_pallas.7} parent=0 // pred_fallthru
    _
  // Predicated region
  $region6: #{generator_forward_pallas.7} parent=0 // pred_check
    _
  $region7: #{generator_forward_pallas.7} parent=0 // pred_check_branch
    %12 = sbr.rel (0) target = $region9
  $region8: #{generator_forward_pallas.7} parent=0 // pred_region
    _
  $region9: #{generator_forward_pallas.7} parent=0 // pred_fallthru
    _
  // Predicated region
  $region10: #{generator_forward_pallas.7} parent=0 // pred_check
    _
  $region11: #{generator_forward_pallas.7} parent=0 // pred_check_branch
    %14 = sbr.rel (0) target = $region13
  $region12: #{generator_forward_pallas.7} parent=0 // pred_region
    _
  $region13: #{generator_forward_pallas.7} parent=0 // pred_fallthru
    _
  // Predicated region
  $region14: #{generator_forward_pallas.7} parent=0 // pred_check
    _
  $region15: #{generator_forward_pallas.7} parent=0 // pred_check_branch
    %16 = sbr.rel (0) target = $region17
  $region16: #{generator_forward_pallas.7} parent=0 // pred_region
    _
  $region17: #{generator_forward_pallas.7} parent=0 // pred_fallthru
    _
  %v18 = vld [vmem:[%s1] sm:$0x3]
  %v19 = vld [vmem:[%s0] sm:$0xf]
  %v20 = vld [vmem:[%s0 + $0x4] sm:$0x1]
  %v21 = vld [vmem:[%s0 + $0x8] sm:$0xf]
  %v22 = vld [vmem:[%s0 + $0xc] sm:$0x1]
  %v23 = vld [vmem:[%s0 + $0x10] sm:$0xf]
  %v24 = vld [vmem:[%s0 + $0x14] sm:$0x1]
  %v25 = vld [vmem:[%s0 + $0x18] sm:$0xf]
  %v26 = vld [vmem:[%s0 + $0x1c] sm:$0x1]
  %v27 = vld [vmem:[%s0 + $0x20] sm:$0xf]
  %v28 = vld [vmem:[%s0 + $0x24] sm:$0x1]
  %v29 = vld [vmem:[%s0 + $0x28] sm:$0xf]
  %v30 = vld [vmem:[%s0 + $0x2c] sm:$0x1]
  %v31 = vld [vmem:[%s0 + $0x30] sm:$0xf]
  %v32 = vld [vmem:[%s0 + $0x34] sm:$0x1]
  %v33 = vld [vmem:[%s0 + $0x38] sm:$0xf]
  %v34 = vld [vmem:[%s0 + $0x3c] sm:$0x1]
  %v35 = vld [vmem:[%s0 + $0x40] sm:$0xf]
  %v36 = vld [vmem:[%s0 + $0x44] sm:$0x1]
  %v37 = vld [vmem:[%s0 + $0x48] sm:$0xf]
  %v38 = vld [vmem:[%s0 + $0x4c] sm:$0x1]
  %v39 = vld [vmem:[%s0 + $0x50] sm:$0xf]
  %v40 = vld [vmem:[%s0 + $0x54] sm:$0x1]
  %v41 = vld [vmem:[%s0 + $0x58] sm:$0xf]
  %v42 = vld [vmem:[%s0 + $0x5c] sm:$0x1]
  %v43 = vld [vmem:[%s0 + $0x60] sm:$0xf]
  %v44 = vld [vmem:[%s0 + $0x64] sm:$0x1]
  %v45 = vld [vmem:[%s0 + $0x68] sm:$0xf]
  %v46 = vld [vmem:[%s0 + $0x6c] sm:$0x1]
  %v47 = vld [vmem:[%s0 + $0x70] sm:$0xf]
  %v48 = vld [vmem:[%s0 + $0x74] sm:$0x1]
  %v49 = vld [vmem:[%s0 + $0x78] sm:$0xf]
  %v50 = vld [vmem:[%s0 + $0x7c] sm:$0x1]
  %v51 = vld [vmem:[%s0 + $0x80] sm:$0xf]
  %v52 = vld [vmem:[%s0 + $0x84] sm:$0x1]
  %v53 = vld [vmem:[%s0 + $0x88] sm:$0xf]
  %v54 = vld [vmem:[%s0 + $0x8c] sm:$0x1]
  %v55 = vld [vmem:[%s0 + $0x90] sm:$0xf]
  %v56 = vld [vmem:[%s0 + $0x94] sm:$0x1]
  %v57 = vld [vmem:[%s0 + $0x98] sm:$0xf]
  %v58 = vld [vmem:[%s0 + $0x9c] sm:$0x1]
  %v59 = vunpack.c.l.bf16 %v19
  %v60 = vunpack.c.l.bf16 %v20
  %v61 = vunpack.c.l.bf16 %v21
  %v62 = vunpack.c.l.bf16 %v22
  %v63 = vunpack.c.l.bf16 %v23
  %v64 = vunpack.c.l.bf16 %v24
  %v65 = vunpack.c.l.bf16 %v25
  %v66 = vunpack.c.l.bf16 %v26
  %v67 = vunpack.c.l.bf16 %v27
  %v68 = vunpack.c.l.bf16 %v28
  %v69 = vunpack.c.l.bf16 %v29
  %v70 = vunpack.c.l.bf16 %v30
  %v71 = vunpack.c.l.bf16 %v31
  %v72 = vunpack.c.l.bf16 %v32
  %v73 = vunpack.c.l.bf16 %v33
  %v74 = vunpack.c.l.bf16 %v34
  %v75 = vunpack.c.l.bf16 %v35
  %v76 = vunpack.c.l.bf16 %v36
  %v77 = vunpack.c.l.bf16 %v37
  %v78 = vunpack.c.l.bf16 %v38
  %v79 = vunpack.c.l.bf16 %v39
  %v80 = vunpack.c.l.bf16 %v40
  %v81 = vunpack.c.l.bf16 %v41
  %v82 = vunpack.c.l.bf16 %v42
  %v83 = vunpack.c.l.bf16 %v43
  %v84 = vunpack.c.l.bf16 %v44
  %v85 = vunpack.c.l.bf16 %v45
  %v86 = vunpack.c.l.bf16 %v46
  %v87 = vunpack.c.l.bf16 %v47
  %v88 = vunpack.c.l.bf16 %v48
  %v89 = vunpack.c.l.bf16 %v49
  %v90 = vunpack.c.l.bf16 %v50
  %v91 = vunpack.c.l.bf16 %v51
  %v92 = vunpack.c.l.bf16 %v52
  %v93 = vunpack.c.l.bf16 %v53
  %v94 = vunpack.c.l.bf16 %v54
  %v95 = vunpack.c.l.bf16 %v55
  %v96 = vunpack.c.l.bf16 %v56
  %v97 = vunpack.c.l.bf16 %v57
  %v98 = vunpack.c.l.bf16 %v58
  %v99 = vlaneseq
  %v100 = vshrl.u32 %v99, 7
  %v101 = vsub.s32 0, %v100
  %v102 = vrot.slane %v18, %v101
  %v103 = vmul.f32 %v59, %v102
  %v104 = vmul.f32 %v60, %v102
  %v105 = vmul.f32 %v61, %v102
  %v106 = vmul.f32 %v62, %v102
  %v107 = vmul.f32 %v63, %v102
  %v108 = vmul.f32 %v64, %v102
  %v109 = vmul.f32 %v65, %v102
  %v110 = vmul.f32 %v66, %v102
  %v111 = vmul.f32 %v67, %v102
  %v112 = vmul.f32 %v68, %v102
  %v113 = vmul.f32 %v69, %v102
  %v114 = vmul.f32 %v70, %v102
  %v115 = vmul.f32 %v71, %v102
  %v116 = vmul.f32 %v72, %v102
  %v117 = vmul.f32 %v73, %v102
  %v118 = vmul.f32 %v74, %v102
  %v119 = vmul.f32 %v75, %v102
  %v120 = vmul.f32 %v76, %v102
  %v121 = vmul.f32 %v77, %v102
  %v122 = vmul.f32 %v78, %v102
  %v123 = vmul.f32 %v79, %v102
  %v124 = vmul.f32 %v80, %v102
  %v125 = vmul.f32 %v81, %v102
  %v126 = vmul.f32 %v82, %v102
  %v127 = vmul.f32 %v83, %v102
  %v128 = vmul.f32 %v84, %v102
  %v129 = vmul.f32 %v85, %v102
  %v130 = vmul.f32 %v86, %v102
  %v131 = vmul.f32 %v87, %v102
  %v132 = vmul.f32 %v88, %v102
  %v133 = vmul.f32 %v89, %v102
  %v134 = vmul.f32 %v90, %v102
  %v135 = vmul.f32 %v91, %v102
  %v136 = vmul.f32 %v92, %v102
  %v137 = vmul.f32 %v93, %v102
  %v138 = vmul.f32 %v94, %v102
  %v139 = vmul.f32 %v95, %v102
  %v140 = vmul.f32 %v96, %v102
  %v141 = vmul.f32 %v97, %v102
  %v142 = vmul.f32 %v98, %v102
  %v143 = vlaneseq
  %v144 = vshrl.u32 %v143, 7
  %v145 = vsub.s32 1, %v144
  %v146 = vrot.slane %v18, %v145
  %v147 = vadd.f32 %v103, %v146
  %v148 = vadd.f32 %v104, %v146
  %v149 = vadd.f32 %v105, %v146
  %v150 = vadd.f32 %v106, %v146
  %v151 = vadd.f32 %v107, %v146
  %v152 = vadd.f32 %v108, %v146
  %v153 = vadd.f32 %v109, %v146
  %v154 = vadd.f32 %v110, %v146
  %v155 = vadd.f32 %v111, %v146
  %v156 = vadd.f32 %v112, %v146
  %v157 = vadd.f32 %v113, %v146
  %v158 = vadd.f32 %v114, %v146
  %v159 = vadd.f32 %v115, %v146
  %v160 = vadd.f32 %v116, %v146
  %v161 = vadd.f32 %v117, %v146
  %v162 = vadd.f32 %v118, %v146
  %v163 = vadd.f32 %v119, %v146
  %v164 = vadd.f32 %v120, %v146
  %v165 = vadd.f32 %v121, %v146
  %v166 = vadd.f32 %v122, %v146
  %v167 = vadd.f32 %v123, %v146
  %v168 = vadd.f32 %v124, %v146
  %v169 = vadd.f32 %v125, %v146
  %v170 = vadd.f32 %v126, %v146
  %v171 = vadd.f32 %v127, %v146
  %v172 = vadd.f32 %v128, %v146
  %v173 = vadd.f32 %v129, %v146
  %v174 = vadd.f32 %v130, %v146
  %v175 = vadd.f32 %v131, %v146
  %v176 = vadd.f32 %v132, %v146
  %v177 = vadd.f32 %v133, %v146
  %v178 = vadd.f32 %v134, %v146
  %v179 = vadd.f32 %v135, %v146
  %v180 = vadd.f32 %v136, %v146
  %v181 = vadd.f32 %v137, %v146
  %v182 = vadd.f32 %v138, %v146
  %v183 = vadd.f32 %v139, %v146
  %v184 = vadd.f32 %v140, %v146
  %v185 = vadd.f32 %v141, %v146
  %v186 = vadd.f32 %v142, %v146
  %vm187 = vcmp.gt.f32.partialorder %v147, 0.0
  %vm188 = vcmp.gt.f32.partialorder %v148, 0.0
  %vm189 = vcmp.gt.f32.partialorder %v149, 0.0
  %vm190 = vcmp.gt.f32.partialorder %v150, 0.0
  %vm191 = vcmp.gt.f32.partialorder %v151, 0.0
  %vm192 = vcmp.gt.f32.partialorder %v152, 0.0
  %vm193 = vcmp.gt.f32.partialorder %v153, 0.0
  %vm194 = vcmp.gt.f32.partialorder %v154, 0.0
  %vm195 = vcmp.gt.f32.partialorder %v155, 0.0
  %vm196 = vcmp.gt.f32.partialorder %v156, 0.0
  %vm197 = vcmp.gt.f32.partialorder %v157, 0.0
  %vm198 = vcmp.gt.f32.partialorder %v158, 0.0
  %vm199 = vcmp.gt.f32.partialorder %v159, 0.0
  %vm200 = vcmp.gt.f32.partialorder %v160, 0.0
  %vm201 = vcmp.gt.f32.partialorder %v161, 0.0
  %vm202 = vcmp.gt.f32.partialorder %v162, 0.0
  %vm203 = vcmp.gt.f32.partialorder %v163, 0.0
  %vm204 = vcmp.gt.f32.partialorder %v164, 0.0
  %vm205 = vcmp.gt.f32.partialorder %v165, 0.0
  %vm206 = vcmp.gt.f32.partialorder %v166, 0.0
  %vm207 = vcmp.gt.f32.partialorder %v167, 0.0
  %vm208 = vcmp.gt.f32.partialorder %v168, 0.0
  %vm209 = vcmp.gt.f32.partialorder %v169, 0.0
  %vm210 = vcmp.gt.f32.partialorder %v170, 0.0
  %vm211 = vcmp.gt.f32.partialorder %v171, 0.0
  %vm212 = vcmp.gt.f32.partialorder %v172, 0.0
  %vm213 = vcmp.gt.f32.partialorder %v173, 0.0
  %vm214 = vcmp.gt.f32.partialorder %v174, 0.0
  %vm215 = vcmp.gt.f32.partialorder %v175, 0.0
  %vm216 = vcmp.gt.f32.partialorder %v176, 0.0
  %vm217 = vcmp.gt.f32.partialorder %v177, 0.0
  %vm218 = vcmp.gt.f32.partialorder %v178, 0.0
  %vm219 = vcmp.gt.f32.partialorder %v179, 0.0
  %vm220 = vcmp.gt.f32.partialorder %v180, 0.0
  %vm221 = vcmp.gt.f32.partialorder %v181, 0.0
  %vm222 = vcmp.gt.f32.partialorder %v182, 0.0
  %vm223 = vcmp.gt.f32.partialorder %v183, 0.0
  %vm224 = vcmp.gt.f32.partialorder %v184, 0.0
  %vm225 = vcmp.gt.f32.partialorder %v185, 0.0
  %vm226 = vcmp.gt.f32.partialorder %v186, 0.0
  %v227 = vmul.f32 %v147, 0.2
  %v228 = vmul.f32 %v148, 0.2
  %v229 = vmul.f32 %v149, 0.2
  %v230 = vmul.f32 %v150, 0.2
  %v231 = vmul.f32 %v151, 0.2
  %v232 = vmul.f32 %v152, 0.2
  %v233 = vmul.f32 %v153, 0.2
  %v234 = vmul.f32 %v154, 0.2
  %v235 = vmul.f32 %v155, 0.2
  %v236 = vmul.f32 %v156, 0.2
  %v237 = vmul.f32 %v157, 0.2
  %v238 = vmul.f32 %v158, 0.2
  %v239 = vmul.f32 %v159, 0.2
  %v240 = vmul.f32 %v160, 0.2
  %v241 = vmul.f32 %v161, 0.2
  %v242 = vmul.f32 %v162, 0.2
  %v243 = vmul.f32 %v163, 0.2
  %v244 = vmul.f32 %v164, 0.2
  %v245 = vmul.f32 %v165, 0.2
  %v246 = vmul.f32 %v166, 0.2
  %v247 = vmul.f32 %v167, 0.2
  %v248 = vmul.f32 %v168, 0.2
  %v249 = vmul.f32 %v169, 0.2
  %v250 = vmul.f32 %v170, 0.2
  %v251 = vmul.f32 %v171, 0.2
  %v252 = vmul.f32 %v172, 0.2
  %v253 = vmul.f32 %v173, 0.2
  %v254 = vmul.f32 %v174, 0.2
  %v255 = vmul.f32 %v175, 0.2
  %v256 = vmul.f32 %v176, 0.2
  %v257 = vmul.f32 %v177, 0.2
  %v258 = vmul.f32 %v178, 0.2
  %v259 = vmul.f32 %v179, 0.2
  %v260 = vmul.f32 %v180, 0.2
  %v261 = vmul.f32 %v181, 0.2
  %v262 = vmul.f32 %v182, 0.2
  %v263 = vmul.f32 %v183, 0.2
  %v264 = vmul.f32 %v184, 0.2
  %v265 = vmul.f32 %v185, 0.2
  %v266 = vmul.f32 %v186, 0.2
  %v267 = vsel %vm187, %v147, %v227
  %v268 = vsel %vm188, %v148, %v228
  %v269 = vsel %vm189, %v149, %v229
  %v270 = vsel %vm190, %v150, %v230
  %v271 = vsel %vm191, %v151, %v231
  %v272 = vsel %vm192, %v152, %v232
  %v273 = vsel %vm193, %v153, %v233
  %v274 = vsel %vm194, %v154, %v234
  %v275 = vsel %vm195, %v155, %v235
  %v276 = vsel %vm196, %v156, %v236
  %v277 = vsel %vm197, %v157, %v237
  %v278 = vsel %vm198, %v158, %v238
  %v279 = vsel %vm199, %v159, %v239
  %v280 = vsel %vm200, %v160, %v240
  %v281 = vsel %vm201, %v161, %v241
  %v282 = vsel %vm202, %v162, %v242
  %v283 = vsel %vm203, %v163, %v243
  %v284 = vsel %vm204, %v164, %v244
  %v285 = vsel %vm205, %v165, %v245
  %v286 = vsel %vm206, %v166, %v246
  %v287 = vsel %vm207, %v167, %v247
  %v288 = vsel %vm208, %v168, %v248
  %v289 = vsel %vm209, %v169, %v249
  %v290 = vsel %vm210, %v170, %v250
  %v291 = vsel %vm211, %v171, %v251
  %v292 = vsel %vm212, %v172, %v252
  %v293 = vsel %vm213, %v173, %v253
  %v294 = vsel %vm214, %v174, %v254
  %v295 = vsel %vm215, %v175, %v255
  %v296 = vsel %vm216, %v176, %v256
  %v297 = vsel %vm217, %v177, %v257
  %v298 = vsel %vm218, %v178, %v258
  %v299 = vsel %vm219, %v179, %v259
  %v300 = vsel %vm220, %v180, %v260
  %v301 = vsel %vm221, %v181, %v261
  %v302 = vsel %vm222, %v182, %v262
  %v303 = vsel %vm223, %v183, %v263
  %v304 = vsel %vm224, %v184, %v264
  %v305 = vsel %vm225, %v185, %v265
  %v306 = vsel %vm226, %v186, %v266
  %v307 = vlaneseq
  %v308 = vshrl.u32 %v307, 7
  %v309 = vadd.s32 %v308, 8
  %p310 = scmp.gt.s32.totalorder 0, 0
  %s311 = scalar_select %p310, 1, 0
  %v312 = vstv %s311
  %vm313 = vcmp.eq.s32.totalorder %v312, 1
  %p314 = scmp.lt.s32.totalorder 0, 0
  %s315 = scalar_select %p314, 1, 0
  %v316 = vstv %s315
  %vm317 = vcmp.eq.s32.totalorder %v316, 1
  %vm318 = vcmp.ge.s32.totalorder %v308, 1
  %vm319 = vcmp.ge.s32.totalorder %v309, 1
  %v320 = vsel %vm313, 1, 0
  %v321 = vsel %vm317, 1, 0
  %vm322 = vcmp.eq.s32.totalorder %v320, 1
  %vm323 = vcmp.eq.s32.totalorder %v321, 1
  %v324 = vsel %vm318, 1, 0
  %v325 = vsel %vm319, 1, 0
  %vm326 = vcmp.eq.s32.totalorder %v324, 1
  %vm327 = vcmp.eq.s32.totalorder %v325, 1
  %vm328 = vmand %vm322, %vm326
  %vm329 = vmand %vm322, %vm327
  %vm330 = vmand 1, %vm326
  %vm331 = vmand 1, %vm327
  %vm332 = vmand %vm323, %vm326
  %vm333 = vmand %vm323, %vm327
  %vm334 = vcmp.le.s32.totalorder %v308, 8
  %vm335 = vcmp.le.s32.totalorder %v309, 8
  %v336 = vsel %vm334, 1, 0
  %v337 = vsel %vm335, 1, 0
  %vm338 = vcmp.eq.s32.totalorder %v336, 1
  %vm339 = vcmp.eq.s32.totalorder %v337, 1
  %vm340 = vmand %vm328, %vm338
  %vm341 = vmand %vm329, %vm339
  %vm342 = vmand %vm330, %vm338
  %vm343 = vmand %vm331, %vm339
  %vm344 = vmand %vm332, %vm338
  %vm345 = vmand %vm333, %vm339
  %v346 = vsel %vm340, 1, 0
  %v347 = vsel %vm341, 1, 0
  %v348 = vsel %vm342, 1, 0
  %v349 = vsel %vm343, 1, 0
  %v350 = vsel %vm344, 1, 0
  %v351 = vsel %vm345, 1, 0
  %vm352 = vcmp.eq.s32.totalorder %v346, 1
  %vm353 = vcmp.eq.s32.totalorder %v347, 1
  %vm354 = vcmp.eq.s32.totalorder %v348, 1
  %vm355 = vcmp.eq.s32.totalorder %v349, 1
  %vm356 = vcmp.eq.s32.totalorder %v350, 1
  %vm357 = vcmp.eq.s32.totalorder %v351, 1
  %v358 = vsel %vm352, %v267, 0.0
  %v359 = vsel %vm353, %v268, 0.0
  %v360 = vsel %vm354, %v269, 0.0
  %v361 = vsel %vm355, %v270, 0.0
  %v362 = vsel %vm354, %v271, 0.0
  %v363 = vsel %vm355, %v272, 0.0
  %v364 = vsel %vm354, %v273, 0.0
  %v365 = vsel %vm355, %v274, 0.0
  %v366 = vsel %vm354, %v275, 0.0
  %v367 = vsel %vm355, %v276, 0.0
  %v368 = vsel %vm354, %v277, 0.0
  %v369 = vsel %vm355, %v278, 0.0
  %v370 = vsel %vm354, %v279, 0.0
  %v371 = vsel %vm355, %v280, 0.0
  %v372 = vsel %vm354, %v281, 0.0
  %v373 = vsel %vm355, %v282, 0.0
  %v374 = vsel %vm354, %v283, 0.0
  %v375 = vsel %vm355, %v284, 0.0
  %v376 = vsel %vm356, %v285, 0.0
  %v377 = vsel %vm357, %v286, 0.0
  %v378 = vsel %vm352, %v287, 0.0
  %v379 = vsel %vm353, %v288, 0.0
  %v380 = vsel %vm354, %v289, 0.0
  %v381 = vsel %vm355, %v290, 0.0
  %v382 = vsel %vm354, %v291, 0.0
  %v383 = vsel %vm355, %v292, 0.0
  %v384 = vsel %vm354, %v293, 0.0
  %v385 = vsel %vm355, %v294, 0.0
  %v386 = vsel %vm354, %v295, 0.0
  %v387 = vsel %vm355, %v296, 0.0
  %v388 = vsel %vm354, %v297, 0.0
  %v389 = vsel %vm355, %v298, 0.0
  %v390 = vsel %vm354, %v299, 0.0
  %v391 = vsel %vm355, %v300, 0.0
  %v392 = vsel %vm354, %v301, 0.0
  %v393 = vsel %vm355, %v302, 0.0
  %v394 = vsel %vm354, %v303, 0.0
  %v395 = vsel %vm355, %v304, 0.0
  %v396 = vsel %vm356, %v305, 0.0
  %v397 = vsel %vm357, %v306, 0.0
  %v398 = vpack.c.bf16 %v359, %v358
  %v399 = vpack.c.bf16 %v361, %v360
  %v400 = vpack.c.bf16 %v363, %v362
  %v401 = vpack.c.bf16 %v365, %v364
  %v402 = vpack.c.bf16 %v367, %v366
  %v403 = vpack.c.bf16 %v369, %v368
  %v404 = vpack.c.bf16 %v371, %v370
  %v405 = vpack.c.bf16 %v373, %v372
  %v406 = vpack.c.bf16 %v375, %v374
  %v407 = vpack.c.bf16 %v377, %v376
  %v408 = vpack.c.bf16 %v379, %v378
  %v409 = vpack.c.bf16 %v381, %v380
  %v410 = vpack.c.bf16 %v383, %v382
  %v411 = vpack.c.bf16 %v385, %v384
  %v412 = vpack.c.bf16 %v387, %v386
  %v413 = vpack.c.bf16 %v389, %v388
  %v414 = vpack.c.bf16 %v391, %v390
  %v415 = vpack.c.bf16 %v393, %v392
  %v416 = vpack.c.bf16 %v395, %v394
  %v417 = vpack.c.bf16 %v397, %v396
  %v419 = vshrl.u32 %v398, 16
  %v421 = vshll.u32 %v398, 16
  %v423 = vrot.slane %v421, 1
  %v424 = vor.u32 %v419, %v423
  %v426 = vshrl.u32 %v399, 16
  %v428 = vshll.u32 %v399, 16
  %v430 = vrot.slane %v428, 1
  %v431 = vor.u32 %v426, %v430
  %v433 = vshrl.u32 %v400, 16
  %v435 = vshll.u32 %v400, 16
  %v437 = vrot.slane %v435, 1
  %v438 = vor.u32 %v433, %v437
  %v440 = vshrl.u32 %v401, 16
  %v442 = vshll.u32 %v401, 16
  %v444 = vrot.slane %v442, 1
  %v445 = vor.u32 %v440, %v444
  %v447 = vshrl.u32 %v402, 16
  %v449 = vshll.u32 %v402, 16
  %v451 = vrot.slane %v449, 1
  %v452 = vor.u32 %v447, %v451
  %v454 = vshrl.u32 %v403, 16
  %v456 = vshll.u32 %v403, 16
  %v458 = vrot.slane %v456, 1
  %v459 = vor.u32 %v454, %v458
  %v461 = vshrl.u32 %v404, 16
  %v463 = vshll.u32 %v404, 16
  %v465 = vrot.slane %v463, 1
  %v466 = vor.u32 %v461, %v465
  %v468 = vshrl.u32 %v405, 16
  %v470 = vshll.u32 %v405, 16
  %v472 = vrot.slane %v470, 1
  %v473 = vor.u32 %v468, %v472
  %v475 = vshrl.u32 %v408, 16
  %v477 = vshll.u32 %v408, 16
  %v479 = vrot.slane %v477, 1
  %v480 = vor.u32 %v475, %v479
  %v482 = vshrl.u32 %v409, 16
  %v484 = vshll.u32 %v409, 16
  %v486 = vrot.slane %v484, 1
  %v487 = vor.u32 %v482, %v486
  %v489 = vshrl.u32 %v410, 16
  %v491 = vshll.u32 %v410, 16
  %v493 = vrot.slane %v491, 1
  %v494 = vor.u32 %v489, %v493
  %v496 = vshrl.u32 %v411, 16
  %v498 = vshll.u32 %v411, 16
  %v500 = vrot.slane %v498, 1
  %v501 = vor.u32 %v496, %v500
  %v503 = vshrl.u32 %v412, 16
  %v505 = vshll.u32 %v412, 16
  %v507 = vrot.slane %v505, 1
  %v508 = vor.u32 %v503, %v507
  %v510 = vshrl.u32 %v413, 16
  %v512 = vshll.u32 %v413, 16
  %v514 = vrot.slane %v512, 1
  %v515 = vor.u32 %v510, %v514
  %v517 = vshrl.u32 %v414, 16
  %v519 = vshll.u32 %v414, 16
  %v521 = vrot.slane %v519, 1
  %v522 = vor.u32 %v517, %v521
  %v524 = vshrl.u32 %v415, 16
  %v526 = vshll.u32 %v415, 16
  %v528 = vrot.slane %v526, 1
  %v529 = vor.u32 %v524, %v528
  %v531 = vshrl.u32 %v406, 16
  %v533 = vshll.u32 %v406, 16
  %v535 = vrot.slane %v533, 1
  %v536 = vor.u32 %v531, %v535
  %v538 = vshrl.u32 %v416, 16
  %v540 = vshll.u32 %v416, 16
  %v542 = vrot.slane %v540, 1
  %v543 = vor.u32 %v538, %v542
  %v562 = vunpack.c.l.b16 %v398
  %v563 = vunpack.c.l.b16 %v424
  %v564 = vunpack.c.l.b16 %v399
  %v565 = vunpack.c.l.b16 %v431
  %v566 = vunpack.c.l.b16 %v400
  %v567 = vunpack.c.l.b16 %v438
  %v568 = vunpack.c.l.b16 %v401
  %v569 = vunpack.c.l.b16 %v445
  %v570 = vunpack.c.l.b16 %v402
  %v571 = vunpack.c.l.b16 %v452
  %v572 = vunpack.c.l.b16 %v403
  %v573 = vunpack.c.l.b16 %v459
  %v574 = vunpack.c.l.b16 %v404
  %v575 = vunpack.c.l.b16 %v466
  %v576 = vunpack.c.l.b16 %v405
  %v577 = vunpack.c.l.b16 %v473
  %v578 = vunpack.c.l.b16 %v406
  %v579 = vunpack.c.l.b16 %v536
  %v580 = vunpack.c.l.b16 %v408
  %v581 = vunpack.c.l.b16 %v480
  %v582 = vunpack.c.l.b16 %v409
  %v583 = vunpack.c.l.b16 %v487
  %v584 = vunpack.c.l.b16 %v410
  %v585 = vunpack.c.l.b16 %v494
  %v586 = vunpack.c.l.b16 %v411
  %v587 = vunpack.c.l.b16 %v501
  %v588 = vunpack.c.l.b16 %v412
  %v589 = vunpack.c.l.b16 %v508
  %v590 = vunpack.c.l.b16 %v413
  %v591 = vunpack.c.l.b16 %v515
  %v592 = vunpack.c.l.b16 %v414
  %v593 = vunpack.c.l.b16 %v522
  %v594 = vunpack.c.l.b16 %v415
  %v595 = vunpack.c.l.b16 %v529
  %v596 = vunpack.c.l.b16 %v416
  %v597 = vunpack.c.l.b16 %v543
  %v598 = vld [vmem:[%s2] sm:$0xf]
  %v599 = vld [vmem:[%s2 + $0x4] sm:$0xf]
  %v600 = vld [vmem:[%s2 + $0x8] sm:$0xf]
  %v601 = vld [vmem:[%s2 + $0xc] sm:$0xf]
  %v602 = vld [vmem:[%s2 + $0x10] sm:$0xf]
  %v603 = vld [vmem:[%s2 + $0x14] sm:$0xf]
  %v604 = vld [vmem:[%s2 + $0x18] sm:$0xf]
  %v605 = vld [vmem:[%s2 + $0x1c] sm:$0xf]
  %v606 = vld [vmem:[%s2 + $0x20] sm:$0xf]
  %v607 = vld [vmem:[%s2 + $0x24] sm:$0xf]
  %v608 = vld [vmem:[%s2 + $0x28] sm:$0xf]
  %v609 = vld [vmem:[%s2 + $0x2c] sm:$0xf]
  %v610 = vld [vmem:[%s2 + $0x30] sm:$0xf]
  %v611 = vld [vmem:[%s2 + $0x34] sm:$0xf]
  %v612 = vld [vmem:[%s2 + $0x38] sm:$0xf]
  %v613 = vld [vmem:[%s2 + $0x3c] sm:$0xf]
  %v614 = vld [vmem:[%s2 + $0x40] sm:$0xf]
  %v615 = vld [vmem:[%s2 + $0x44] sm:$0xf]
  %v616 = vld [vmem:[%s2 + $0x48] sm:$0xf]
  %v617 = vld [vmem:[%s2 + $0x4c] sm:$0xf]
  %v618 = vld [vmem:[%s2 + $0x50] sm:$0xf]
  %v619 = vld [vmem:[%s2 + $0x54] sm:$0xf]
  %v620 = vld [vmem:[%s2 + $0x58] sm:$0xf]
  %v621 = vld [vmem:[%s2 + $0x5c] sm:$0xf]
  %v622 = vld [vmem:[%s2 + $0x60] sm:$0xf]
  %v623 = vld [vmem:[%s2 + $0x64] sm:$0xf]
  %v624 = vld [vmem:[%s2 + $0x68] sm:$0xf]
  %v625 = vld [vmem:[%s2 + $0x6c] sm:$0xf]
  %v626 = vld [vmem:[%s2 + $0x70] sm:$0xf]
  %v627 = vld [vmem:[%s2 + $0x74] sm:$0xf]
  %v628 = vld [vmem:[%s2 + $0x78] sm:$0xf]
  %v629 = vld [vmem:[%s2 + $0x7c] sm:$0xf]
  %v630 = vld [vmem:[%s2 + $0x80] sm:$0xf]
  %v631 = vld [vmem:[%s2 + $0x84] sm:$0xf]
  %v632 = vld [vmem:[%s2 + $0x88] sm:$0xf]
  %v633 = vld [vmem:[%s2 + $0x8c] sm:$0xf]
  %v634 = vld [vmem:[%s2 + $0x90] sm:$0xf]
  %v635 = vld [vmem:[%s2 + $0x94] sm:$0xf]
  %v636 = vld [vmem:[%s2 + $0x98] sm:$0xf]
  %v637 = vld [vmem:[%s2 + $0x9c] sm:$0xf]
  %v638 = vld [vmem:[%s2 + $0xa0] sm:$0xf]
  %v639 = vld [vmem:[%s2 + $0xa4] sm:$0xf]
  %v640 = vld [vmem:[%s2 + $0xa8] sm:$0xf]
  %v641 = vld [vmem:[%s2 + $0xac] sm:$0xf]
  %v642 = vld [vmem:[%s2 + $0xb0] sm:$0xf]
  %v643 = vld [vmem:[%s2 + $0xb4] sm:$0xf]
  %v644 = vld [vmem:[%s2 + $0xb8] sm:$0xf]
  %v645 = vld [vmem:[%s2 + $0xbc] sm:$0xf]
  %v646 = vld [vmem:[%s2 + $0xc0] sm:$0xf]
  %v647 = vld [vmem:[%s2 + $0xc4] sm:$0xf]
  %v648 = vld [vmem:[%s2 + $0xc8] sm:$0xf]
  %v649 = vld [vmem:[%s2 + $0xcc] sm:$0xf]
  %v650 = vld [vmem:[%s2 + $0xd0] sm:$0xf]
  %v651 = vld [vmem:[%s2 + $0xd4] sm:$0xf]
  %v652 = vld [vmem:[%s2 + $0xd8] sm:$0xf]
  %v653 = vld [vmem:[%s2 + $0xdc] sm:$0xf]
  %v654 = vld [vmem:[%s2 + $0xe0] sm:$0xf]
  %v655 = vld [vmem:[%s2 + $0xe4] sm:$0xf]
  %v656 = vld [vmem:[%s2 + $0xe8] sm:$0xf]
  %v657 = vld [vmem:[%s2 + $0xec] sm:$0xf]
  %v658 = vld [vmem:[%s2 + $0xf0] sm:$0xf]
  %v659 = vld [vmem:[%s2 + $0xf4] sm:$0xf]
  %v660 = vld [vmem:[%s2 + $0xf8] sm:$0xf]
  %v661 = vld [vmem:[%s2 + $0xfc] sm:$0xf]
  %v662 = vld [vmem:[%s3] sm:$0x1]
  %v664 = vlaneseq
  %v665 = vshrl.u32 %v664, 7
  %v666 = vsub.s32 0, %v665
  %v667 = vrot.slane %v662, %v666
  %v669 = vpack.c.b16 %v564, %v562
  %v670 = vpack.c.b16 %v565, %v563
  %v671 = vpack.c.b16 %v566, %v564
  %v672 = vpack.c.b16 %v567, %v565
  %v673 = vpack.c.b16 %v568, %v566
  %v674 = vpack.c.b16 %v569, %v567
  %v675 = vpack.c.b16 %v570, %v568
  %v676 = vpack.c.b16 %v571, %v569
  %v677 = vpack.c.b16 %v572, %v570
  %v678 = vpack.c.b16 %v573, %v571
  %v679 = vpack.c.b16 %v574, %v572
  %v680 = vpack.c.b16 %v575, %v573
  %v681 = vpack.c.b16 %v576, %v574
  %v682 = vpack.c.b16 %v577, %v575
  %v683 = vpack.c.b16 %v578, %v576
  %v684 = vpack.c.b16 %v579, %v577
  %v685 = vpack.c.b16 %v582, %v580
  %v686 = vpack.c.b16 %v583, %v581
  %v687 = vpack.c.b16 %v584, %v582
  %v688 = vpack.c.b16 %v585, %v583
  %v689 = vpack.c.b16 %v586, %v584
  %v690 = vpack.c.b16 %v587, %v585
  %v691 = vpack.c.b16 %v588, %v586
  %v692 = vpack.c.b16 %v589, %v587
  %v693 = vpack.c.b16 %v590, %v588
  %v694 = vpack.c.b16 %v591, %v589
  %v695 = vpack.c.b16 %v592, %v590
  %v696 = vpack.c.b16 %v593, %v591
  %v697 = vpack.c.b16 %v594, %v592
  %v698 = vpack.c.b16 %v595, %v593
  %v699 = vpack.c.b16 %v596, %v594
  %v700 = vpack.c.b16 %v597, %v595
  %v797 = vunpack.c.l.b16 %v598
  %v798 = vunpack.c.l.b16 %v599
  %v799 = vunpack.c.l.b16 %v600
  %v800 = vunpack.c.l.b16 %v601
  %v801 = vunpack.c.l.b16 %v602
  %v802 = vunpack.c.l.b16 %v603
  %v803 = vunpack.c.l.b16 %v604
  %v804 = vunpack.c.l.b16 %v605
  %v805 = vunpack.c.l.b16 %v606
  %v806 = vunpack.c.l.b16 %v607
  %v807 = vunpack.c.l.b16 %v608
  %v808 = vunpack.c.l.b16 %v609
  %v809 = vunpack.c.l.b16 %v610
  %v810 = vunpack.c.l.b16 %v611
  %v811 = vunpack.c.l.b16 %v612
  %v812 = vunpack.c.l.b16 %v613
  %v813 = vunpack.c.l.b16 %v614
  %v814 = vunpack.c.l.b16 %v615
  %v815 = vunpack.c.l.b16 %v616
  %v816 = vunpack.c.l.b16 %v617
  %v817 = vunpack.c.l.b16 %v618
  %v818 = vunpack.c.l.b16 %v619
  %v819 = vunpack.c.l.b16 %v620
  %v820 = vunpack.c.l.b16 %v621
  %v821 = vunpack.c.l.b16 %v622
  %v822 = vunpack.c.l.b16 %v623
  %v823 = vunpack.c.l.b16 %v624
  %v824 = vunpack.c.l.b16 %v625
  %v825 = vunpack.c.l.b16 %v626
  %v826 = vunpack.c.l.b16 %v627
  %v827 = vunpack.c.l.b16 %v628
  %v828 = vunpack.c.l.b16 %v629
  %v829 = vunpack.c.l.b16 %v630
  %v830 = vunpack.c.l.b16 %v631
  %v831 = vunpack.c.l.b16 %v632
  %v832 = vunpack.c.l.b16 %v633
  %v833 = vunpack.c.l.b16 %v634
  %v834 = vunpack.c.l.b16 %v635
  %v835 = vunpack.c.l.b16 %v636
  %v836 = vunpack.c.l.b16 %v637
  %v837 = vunpack.c.l.b16 %v638
  %v838 = vunpack.c.l.b16 %v639
  %v839 = vunpack.c.l.b16 %v640
  %v840 = vunpack.c.l.b16 %v641
  %v841 = vunpack.c.l.b16 %v642
  %v842 = vunpack.c.l.b16 %v643
  %v843 = vunpack.c.l.b16 %v644
  %v844 = vunpack.c.l.b16 %v645
  %v845 = vunpack.c.l.b16 %v646
  %v846 = vunpack.c.l.b16 %v647
  %v847 = vunpack.c.l.b16 %v648
  %v848 = vunpack.c.l.b16 %v649
  %v849 = vunpack.c.l.b16 %v650
  %v850 = vunpack.c.l.b16 %v651
  %v851 = vunpack.c.l.b16 %v652
  %v852 = vunpack.c.l.b16 %v653
  %v853 = vunpack.c.l.b16 %v654
  %v854 = vunpack.c.l.b16 %v655
  %v855 = vunpack.c.l.b16 %v656
  %v856 = vunpack.c.l.b16 %v657
  %v857 = vunpack.c.l.b16 %v658
  %v858 = vunpack.c.l.b16 %v659
  %v859 = vunpack.c.l.b16 %v660
  %v860 = vunpack.c.l.b16 %v661
  %v861 = vpack.c.b16 %v798, %v797
  %v862 = vpack.c.b16 %v800, %v799
  %v863 = vpack.c.b16 %v802, %v801
  %v864 = vpack.c.b16 %v804, %v803
  %v865 = vpack.c.b16 %v806, %v805
  %v866 = vpack.c.b16 %v808, %v807
  %v867 = vpack.c.b16 %v810, %v809
  %v868 = vpack.c.b16 %v812, %v811
  %v869 = vpack.c.b16 %v814, %v813
  %v870 = vpack.c.b16 %v816, %v815
  %v871 = vpack.c.b16 %v818, %v817
  %v872 = vpack.c.b16 %v820, %v819
  %v873 = vpack.c.b16 %v822, %v821
  %v874 = vpack.c.b16 %v824, %v823
  %v875 = vpack.c.b16 %v826, %v825
  %v876 = vpack.c.b16 %v828, %v827
  %v877 = vpack.c.b16 %v830, %v829
  %v878 = vpack.c.b16 %v832, %v831
  %v879 = vpack.c.b16 %v834, %v833
  %v880 = vpack.c.b16 %v836, %v835
  %v881 = vpack.c.b16 %v838, %v837
  %v882 = vpack.c.b16 %v840, %v839
  %v883 = vpack.c.b16 %v842, %v841
  %v884 = vpack.c.b16 %v844, %v843
  %v885 = vpack.c.b16 %v846, %v845
  %v886 = vpack.c.b16 %v848, %v847
  %v887 = vpack.c.b16 %v850, %v849
  %v888 = vpack.c.b16 %v852, %v851
  %v889 = vpack.c.b16 %v854, %v853
  %v890 = vpack.c.b16 %v856, %v855
  %v891 = vpack.c.b16 %v858, %v857
  %v892 = vpack.c.b16 %v860, %v859
  %925 = vmatprep.subr.bf16.mxu0 0
  %926 = vmatpush1.bf16.msra.mxu0 %v868
  %927 = vmatprep.subr.bf16.mxu0 0
  %928 = vmatpush1.bf16.msra.mxu0 %v867
  %929 = vmatprep.subr.bf16.mxu0 0
  %930 = vmatpush1.bf16.msra.mxu0 %v866
  %931 = vmatprep.subr.bf16.mxu0 0
  %932 = vmatpush1.bf16.msra.mxu0 %v865
  %933 = vmatprep.subr.bf16.mxu0 0
  %934 = vmatpush1.bf16.msra.mxu0 %v864
  %935 = vmatprep.subr.bf16.mxu0 0
  %936 = vmatpush1.bf16.msra.mxu0 %v863
  %937 = vmatprep.subr.bf16.mxu0 0
  %938 = vmatpush1.bf16.msra.mxu0 %v862
  %939 = vmatprep.subr.bf16.mxu0 0
  %940 = vmatpush1.bf16.msra.mxu0 %v861
  %941 = vmatprep.subr.bf16.mxu0 0
  %942 = vmatpush2.bf16.msra.mxu0 %v876
  %943 = vmatprep.subr.bf16.mxu0 0
  %944 = vmatpush2.bf16.msra.mxu0 %v875
  %945 = vmatprep.subr.bf16.mxu0 0
  %946 = vmatpush2.bf16.msra.mxu0 %v874
  %947 = vmatprep.subr.bf16.mxu0 0
  %948 = vmatpush2.bf16.msra.mxu0 %v873
  %949 = vmatprep.subr.bf16.mxu0 0
  %950 = vmatpush2.bf16.msra.mxu0 %v872
  %951 = vmatprep.subr.bf16.mxu0 0
  %952 = vmatpush2.bf16.msra.mxu0 %v871
  %953 = vmatprep.subr.bf16.mxu0 0
  %954 = vmatpush2.bf16.msra.mxu0 %v870
  %955 = vmatprep.subr.bf16.mxu0 0
  %956 = vmatpush2.bf16.msra.mxu0 %v869
  %957 = vmatprep.mubr.bf16.mxu0 %v670
  %958 = vmatmul.mubr.bf16.gmra.mxu0 %v669
  %v959 = vpop.f32.mrf.mxu0
  %v960 = vadd.f32 %v667, %v959
  %v961 = vpop.f32.mrf.mxu0
  %v962 = vpop.f32.mrf.mxu0
  %v963 = vadd.f32 %v667, %v962
  %v964 = vpop.f32.mrf.mxu0
  %965 = vmatprep.mubr.bf16.mxu0 %v674
  %966 = vmatmul.mubr.bf16.gmra.mxu0 %v673
  %v967 = vpop.f32.mrf.mxu0
  %v968 = vadd.f32 %v667, %v967
  %v969 = vpop.f32.mrf.mxu0
  %v970 = vpop.f32.mrf.mxu0
  %v971 = vadd.f32 %v667, %v970
  %v972 = vpop.f32.mrf.mxu0
  %973 = vmatprep.mubr.bf16.mxu0 %v678
  %974 = vmatmul.mubr.bf16.gmra.mxu0 %v677
  %v975 = vpop.f32.mrf.mxu0
  %v976 = vadd.f32 %v667, %v975
  %v977 = vpop.f32.mrf.mxu0
  %v978 = vpop.f32.mrf.mxu0
  %v979 = vadd.f32 %v667, %v978
  %v980 = vpop.f32.mrf.mxu0
  %981 = vmatprep.mubr.bf16.mxu0 %v682
  %982 = vmatmul.mubr.bf16.gmra.mxu0 %v681
  %v983 = vpop.f32.mrf.mxu0
  %v984 = vadd.f32 %v667, %v983
  %v985 = vpop.f32.mrf.mxu0
  %v986 = vpop.f32.mrf.mxu0
  %v987 = vadd.f32 %v667, %v986
  %v988 = vpop.f32.mrf.mxu0
  %989 = vmatprep.mubr.bf16.mxu0 %v686
  %990 = vmatmul.mubr.bf16.gmra.mxu0 %v685
  %v991 = vpop.f32.mrf.mxu0
  %v992 = vadd.f32 %v667, %v991
  %v993 = vpop.f32.mrf.mxu0
  %v994 = vpop.f32.mrf.mxu0
  %v995 = vadd.f32 %v667, %v994
  %v996 = vpop.f32.mrf.mxu0
  %997 = vmatprep.mubr.bf16.mxu0 %v690
  %998 = vmatmul.mubr.bf16.gmra.mxu0 %v689
  %v999 = vpop.f32.mrf.mxu0
  %v1000 = vadd.f32 %v667, %v999
  %v1001 = vpop.f32.mrf.mxu0
  %v1002 = vpop.f32.mrf.mxu0
  %v1003 = vadd.f32 %v667, %v1002
  %v1004 = vpop.f32.mrf.mxu0
  %1005 = vmatprep.mubr.bf16.mxu0 %v694
  %1006 = vmatmul.mubr.bf16.gmra.mxu0 %v693
  %v1007 = vpop.f32.mrf.mxu0
  %v1008 = vadd.f32 %v667, %v1007
  %v1009 = vpop.f32.mrf.mxu0
  %v1010 = vpop.f32.mrf.mxu0
  %v1011 = vadd.f32 %v667, %v1010
  %v1012 = vpop.f32.mrf.mxu0
  %1013 = vmatprep.mubr.bf16.mxu0 %v698
  %1014 = vmatmul.mubr.bf16.gmra.mxu0 %v697
  %v1015 = vpop.f32.mrf.mxu0
  %v1016 = vadd.f32 %v667, %v1015
  %v1017 = vpop.f32.mrf.mxu0
  %v1018 = vpop.f32.mrf.mxu0
  %v1019 = vadd.f32 %v667, %v1018
  %v1020 = vpop.f32.mrf.mxu0
  %1021 = vdwg.mxu0
  %1022 = vmatprep.subr.bf16.mxu0 0
  %1023 = vmatpush1.bf16.msra.mxu0 %v884
  %1024 = vmatprep.subr.bf16.mxu0 0
  %1025 = vmatpush1.bf16.msra.mxu0 %v883
  %1026 = vmatprep.subr.bf16.mxu0 0
  %1027 = vmatpush1.bf16.msra.mxu0 %v882
  %1028 = vmatprep.subr.bf16.mxu0 0
  %1029 = vmatpush1.bf16.msra.mxu0 %v881
  %1030 = vmatprep.subr.bf16.mxu0 0
  %1031 = vmatpush1.bf16.msra.mxu0 %v880
  %1032 = vmatprep.subr.bf16.mxu0 0
  %1033 = vmatpush1.bf16.msra.mxu0 %v879
  %1034 = vmatprep.subr.bf16.mxu0 0
  %1035 = vmatpush1.bf16.msra.mxu0 %v878
  %1036 = vmatprep.subr.bf16.mxu0 0
  %1037 = vmatpush1.bf16.msra.mxu0 %v877
  %1038 = vmatprep.subr.bf16.mxu0 0
  %1039 = vmatpush2.bf16.msra.mxu0 %v892
  %1040 = vmatprep.subr.bf16.mxu0 0
  %1041 = vmatpush2.bf16.msra.mxu0 %v891
  %1042 = vmatprep.subr.bf16.mxu0 0
  %1043 = vmatpush2.bf16.msra.mxu0 %v890
  %1044 = vmatprep.subr.bf16.mxu0 0
  %1045 = vmatpush2.bf16.msra.mxu0 %v889
  %1046 = vmatprep.subr.bf16.mxu0 0
  %1047 = vmatpush2.bf16.msra.mxu0 %v888
  %1048 = vmatprep.subr.bf16.mxu0 0
  %1049 = vmatpush2.bf16.msra.mxu0 %v887
  %1050 = vmatprep.subr.bf16.mxu0 0
  %1051 = vmatpush2.bf16.msra.mxu0 %v886
  %1052 = vmatprep.subr.bf16.mxu0 0
  %1053 = vmatpush2.bf16.msra.mxu0 %v885
  %1054 = vmatprep.mubr.bf16.mxu0 %v672
  %1055 = vmatmul.mubr.bf16.gmra.mxu0 %v671
  %v1056 = vpop.f32.mrf.mxu0
  %v1057 = vadd.f32 %v960, %v1056
  %v1058 = vpop.f32.mrf.mxu0
  %v1059 = vpop.f32.mrf.mxu0
  %v1060 = vadd.f32 %v963, %v1059
  %v1061 = vpop.f32.mrf.mxu0
  %1062 = vmatprep.mubr.bf16.mxu0 %v676
  %1063 = vmatmul.mubr.bf16.gmra.mxu0 %v675
  %v1064 = vpop.f32.mrf.mxu0
  %v1065 = vadd.f32 %v968, %v1064
  %v1066 = vpop.f32.mrf.mxu0
  %v1067 = vpop.f32.mrf.mxu0
  %v1068 = vadd.f32 %v971, %v1067
  %v1069 = vpop.f32.mrf.mxu0
  %1070 = vmatprep.mubr.bf16.mxu0 %v680
  %1071 = vmatmul.mubr.bf16.gmra.mxu0 %v679
  %v1072 = vpop.f32.mrf.mxu0
  %v1073 = vadd.f32 %v976, %v1072
  %v1074 = vpop.f32.mrf.mxu0
  %v1075 = vpop.f32.mrf.mxu0
  %v1076 = vadd.f32 %v979, %v1075
  %v1077 = vpop.f32.mrf.mxu0
  %1078 = vmatprep.mubr.bf16.mxu0 %v684
  %1079 = vmatmul.mubr.bf16.gmra.mxu0 %v683
  %v1080 = vpop.f32.mrf.mxu0
  %v1081 = vadd.f32 %v984, %v1080
  %v1082 = vpop.f32.mrf.mxu0
  %v1083 = vpop.f32.mrf.mxu0
  %v1084 = vadd.f32 %v987, %v1083
  %v1085 = vpop.f32.mrf.mxu0
  %1086 = vmatprep.mubr.bf16.mxu0 %v688
  %1087 = vmatmul.mubr.bf16.gmra.mxu0 %v687
  %v1088 = vpop.f32.mrf.mxu0
  %v1089 = vadd.f32 %v992, %v1088
  %v1090 = vpop.f32.mrf.mxu0
  %v1091 = vpop.f32.mrf.mxu0
  %v1092 = vadd.f32 %v995, %v1091
  %v1093 = vpop.f32.mrf.mxu0
  %1094 = vmatprep.mubr.bf16.mxu0 %v692
  %1095 = vmatmul.mubr.bf16.gmra.mxu0 %v691
  %v1096 = vpop.f32.mrf.mxu0
  %v1097 = vadd.f32 %v1000, %v1096
  %v1098 = vpop.f32.mrf.mxu0
  %v1099 = vpop.f32.mrf.mxu0
  %v1100 = vadd.f32 %v1003, %v1099
  %v1101 = vpop.f32.mrf.mxu0
  %1102 = vmatprep.mubr.bf16.mxu0 %v696
  %1103 = vmatmul.mubr.bf16.gmra.mxu0 %v695
  %v1104 = vpop.f32.mrf.mxu0
  %v1105 = vadd.f32 %v1008, %v1104
  %v1106 = vpop.f32.mrf.mxu0
  %v1107 = vpop.f32.mrf.mxu0
  %v1108 = vadd.f32 %v1011, %v1107
  %v1109 = vpop.f32.mrf.mxu0
  %1110 = vmatprep.mubr.bf16.mxu0 %v700
  %1111 = vmatmul.mubr.bf16.gmra.mxu0 %v699
  %v1112 = vpop.f32.mrf.mxu0
  %v1113 = vadd.f32 %v1016, %v1112
  %v1114 = vpop.f32.mrf.mxu0
  %v1115 = vpop.f32.mrf.mxu0
  %v1116 = vadd.f32 %v1019, %v1115
  %v1117 = vpop.f32.mrf.mxu0
  %1118 = vdwg.mxu0
  %v1119 = vtanh.pop %v1057
  %v1120 = vtanh.pop %v1060
  %v1121 = vtanh.pop %v1065
  %v1122 = vtanh.pop %v1068
  %v1123 = vtanh.pop %v1073
  %v1124 = vtanh.pop %v1076
  %v1125 = vtanh.pop %v1081
  %v1126 = vtanh.pop %v1084
  %v1127 = vtanh.pop %v1089
  %v1128 = vtanh.pop %v1092
  %v1129 = vtanh.pop %v1097
  %v1130 = vtanh.pop %v1100
  %v1131 = vtanh.pop %v1105
  %v1132 = vtanh.pop %v1108
  %v1133 = vtanh.pop %v1113
  %v1134 = vtanh.pop %v1116
  %v1135 = vunpack.c.h.b16 %v398
  %v1136 = vunpack.c.h.b16 %v424
  %v1137 = vunpack.c.h.b16 %v399
  %v1138 = vunpack.c.h.b16 %v431
  %v1139 = vunpack.c.h.b16 %v400
  %v1140 = vunpack.c.h.b16 %v438
  %v1141 = vunpack.c.h.b16 %v401
  %v1142 = vunpack.c.h.b16 %v445
  %v1143 = vunpack.c.h.b16 %v402
  %v1144 = vunpack.c.h.b16 %v452
  %v1145 = vunpack.c.h.b16 %v403
  %v1146 = vunpack.c.h.b16 %v459
  %v1147 = vunpack.c.h.b16 %v404
  %v1148 = vunpack.c.h.b16 %v466
  %v1149 = vunpack.c.h.b16 %v405
  %v1150 = vunpack.c.h.b16 %v473
  %v1151 = vunpack.c.h.b16 %v406
  %v1152 = vunpack.c.h.b16 %v536
  %v1153 = vunpack.c.h.b16 %v408
  %v1154 = vunpack.c.h.b16 %v480
  %v1155 = vunpack.c.h.b16 %v409
  %v1156 = vunpack.c.h.b16 %v487
  %v1157 = vunpack.c.h.b16 %v410
  %v1158 = vunpack.c.h.b16 %v494
  %v1159 = vunpack.c.h.b16 %v411
  %v1160 = vunpack.c.h.b16 %v501
  %v1161 = vunpack.c.h.b16 %v412
  %v1162 = vunpack.c.h.b16 %v508
  %v1163 = vunpack.c.h.b16 %v413
  %v1164 = vunpack.c.h.b16 %v515
  %v1165 = vunpack.c.h.b16 %v414
  %v1166 = vunpack.c.h.b16 %v522
  %v1167 = vunpack.c.h.b16 %v415
  %v1168 = vunpack.c.h.b16 %v529
  %v1169 = vunpack.c.h.b16 %v416
  %v1170 = vunpack.c.h.b16 %v543
  %v1171 = vpack.c.b16 %v563, %v562
  %v1172 = vpack.c.b16 %v565, %v564
  %v1173 = vpack.c.b16 %v1136, %v1135
  %v1174 = vpack.c.b16 %v1138, %v1137
  %v1175 = vpack.c.b16 %v567, %v566
  %v1176 = vpack.c.b16 %v1140, %v1139
  %v1177 = vpack.c.b16 %v569, %v568
  %v1178 = vpack.c.b16 %v1142, %v1141
  %v1179 = vpack.c.b16 %v571, %v570
  %v1180 = vpack.c.b16 %v1144, %v1143
  %v1181 = vpack.c.b16 %v573, %v572
  %v1182 = vpack.c.b16 %v1146, %v1145
  %v1183 = vpack.c.b16 %v575, %v574
  %v1184 = vpack.c.b16 %v1148, %v1147
  %v1185 = vpack.c.b16 %v577, %v576
  %v1186 = vpack.c.b16 %v1150, %v1149
  %v1187 = vpack.c.b16 %v579, %v578
  %v1188 = vpack.c.b16 %v1152, %v1151
  %v1189 = vpack.c.b16 %v581, %v580
  %v1190 = vpack.c.b16 %v583, %v582
  %v1191 = vpack.c.b16 %v1154, %v1153
  %v1192 = vpack.c.b16 %v1156, %v1155
  %v1193 = vpack.c.b16 %v585, %v584
  %v1194 = vpack.c.b16 %v1158, %v1157
  %v1195 = vpack.c.b16 %v587, %v586
  %v1196 = vpack.c.b16 %v1160, %v1159
  %v1197 = vpack.c.b16 %v589, %v588
  %v1198 = vpack.c.b16 %v1162, %v1161
  %v1199 = vpack.c.b16 %v591, %v590
  %v1200 = vpack.c.b16 %v1164, %v1163
  %v1201 = vpack.c.b16 %v593, %v592
  %v1202 = vpack.c.b16 %v1166, %v1165
  %v1203 = vpack.c.b16 %v595, %v594
  %v1204 = vpack.c.b16 %v1168, %v1167
  %v1205 = vpack.c.b16 %v597, %v596
  %v1206 = vpack.c.b16 %v1170, %v1169
  %vm1207 = vsmask.f32 3328
  %vm1208 = vsmask.f32 7440
  %vm1209 = vmor %vm1207, %vm1208
  %v1211 = vshrl.u32 %v1171, 16
  %v1213 = vrot.slane %v1211, 4
  %v1214 = vshll.u32 %v1171, 16
  %v1216 = vrot.slane %v1214, 5
  %v1217 = vor.u32 %v1213, %v1216
  %v1218 = vrot.slane %v1217, 4
  %v1220 = vshll.u32 %v1173, 16
  %v1222 = vrot.slane %v1220, 5
  %v1223 = vsel %vm1209, %v1218, %v1222
  %v1225 = vshrl.u32 %v1172, 16
  %v1227 = vrot.slane %v1225, 4
  %v1228 = vshll.u32 %v1172, 16
  %v1230 = vrot.slane %v1228, 5
  %v1231 = vor.u32 %v1227, %v1230
  %v1232 = vrot.slane %v1231, 4
  %v1234 = vshll.u32 %v1174, 16
  %v1236 = vrot.slane %v1234, 5
  %v1237 = vsel %vm1209, %v1232, %v1236
  %v1239 = vshrl.u32 %v1175, 16
  %v1241 = vrot.slane %v1239, 4
  %v1242 = vshll.u32 %v1175, 16
  %v1244 = vrot.slane %v1242, 5
  %v1245 = vor.u32 %v1241, %v1244
  %v1246 = vrot.slane %v1245, 4
  %v1248 = vshll.u32 %v1176, 16
  %v1250 = vrot.slane %v1248, 5
  %v1251 = vsel %vm1209, %v1246, %v1250
  %v1253 = vshrl.u32 %v1177, 16
  %v1255 = vrot.slane %v1253, 4
  %v1256 = vshll.u32 %v1177, 16
  %v1258 = vrot.slane %v1256, 5
  %v1259 = vor.u32 %v1255, %v1258
  %v1260 = vrot.slane %v1259, 4
  %v1262 = vshll.u32 %v1178, 16
  %v1264 = vrot.slane %v1262, 5
  %v1265 = vsel %vm1209, %v1260, %v1264
  %v1267 = vshrl.u32 %v1179, 16
  %v1269 = vrot.slane %v1267, 4
  %v1270 = vshll.u32 %v1179, 16
  %v1272 = vrot.slane %v1270, 5
  %v1273 = vor.u32 %v1269, %v1272
  %v1274 = vrot.slane %v1273, 4
  %v1276 = vshll.u32 %v1180, 16
  %v1278 = vrot.slane %v1276, 5
  %v1279 = vsel %vm1209, %v1274, %v1278
  %v1281 = vshrl.u32 %v1181, 16
  %v1283 = vrot.slane %v1281, 4
  %v1284 = vshll.u32 %v1181, 16
  %v1286 = vrot.slane %v1284, 5
  %v1287 = vor.u32 %v1283, %v1286
  %v1288 = vrot.slane %v1287, 4
  %v1290 = vshll.u32 %v1182, 16
  %v1292 = vrot.slane %v1290, 5
  %v1293 = vsel %vm1209, %v1288, %v1292
  %v1295 = vshrl.u32 %v1183, 16
  %v1297 = vrot.slane %v1295, 4
  %v1298 = vshll.u32 %v1183, 16
  %v1300 = vrot.slane %v1298, 5
  %v1301 = vor.u32 %v1297, %v1300
  %v1302 = vrot.slane %v1301, 4
  %v1304 = vshll.u32 %v1184, 16
  %v1306 = vrot.slane %v1304, 5
  %v1307 = vsel %vm1209, %v1302, %v1306
  %v1309 = vshrl.u32 %v1185, 16
  %v1311 = vrot.slane %v1309, 4
  %v1312 = vshll.u32 %v1185, 16
  %v1314 = vrot.slane %v1312, 5
  %v1315 = vor.u32 %v1311, %v1314
  %v1316 = vrot.slane %v1315, 4
  %v1318 = vshll.u32 %v1186, 16
  %v1320 = vrot.slane %v1318, 5
  %v1321 = vsel %vm1209, %v1316, %v1320
  %v1323 = vshrl.u32 %v1187, 16
  %v1325 = vrot.slane %v1323, 4
  %v1326 = vshll.u32 %v1187, 16
  %v1328 = vrot.slane %v1326, 5
  %v1329 = vor.u32 %v1325, %v1328
  %v1330 = vrot.slane %v1329, 4
  %v1332 = vshll.u32 %v1188, 16
  %v1334 = vrot.slane %v1332, 5
  %v1335 = vsel %vm1209, %v1330, %v1334
  %v1337 = vshrl.u32 %v1189, 16
  %v1339 = vrot.slane %v1337, 4
  %v1340 = vshll.u32 %v1189, 16
  %v1342 = vrot.slane %v1340, 5
  %v1343 = vor.u32 %v1339, %v1342
  %v1344 = vrot.slane %v1343, 4
  %v1346 = vshll.u32 %v1191, 16
  %v1348 = vrot.slane %v1346, 5
  %v1349 = vsel %vm1209, %v1344, %v1348
  %v1351 = vshrl.u32 %v1190, 16
  %v1353 = vrot.slane %v1351, 4
  %v1354 = vshll.u32 %v1190, 16
  %v1356 = vrot.slane %v1354, 5
  %v1357 = vor.u32 %v1353, %v1356
  %v1358 = vrot.slane %v1357, 4
  %v1360 = vshll.u32 %v1192, 16
  %v1362 = vrot.slane %v1360, 5
  %v1363 = vsel %vm1209, %v1358, %v1362
  %v1365 = vshrl.u32 %v1193, 16
  %v1367 = vrot.slane %v1365, 4
  %v1368 = vshll.u32 %v1193, 16
  %v1370 = vrot.slane %v1368, 5
  %v1371 = vor.u32 %v1367, %v1370
  %v1372 = vrot.slane %v1371, 4
  %v1374 = vshll.u32 %v1194, 16
  %v1376 = vrot.slane %v1374, 5
  %v1377 = vsel %vm1209, %v1372, %v1376
  %v1379 = vshrl.u32 %v1195, 16
  %v1381 = vrot.slane %v1379, 4
  %v1382 = vshll.u32 %v1195, 16
  %v1384 = vrot.slane %v1382, 5
  %v1385 = vor.u32 %v1381, %v1384
  %v1386 = vrot.slane %v1385, 4
  %v1388 = vshll.u32 %v1196, 16
  %v1390 = vrot.slane %v1388, 5
  %v1391 = vsel %vm1209, %v1386, %v1390
  %v1393 = vshrl.u32 %v1197, 16
  %v1395 = vrot.slane %v1393, 4
  %v1396 = vshll.u32 %v1197, 16
  %v1398 = vrot.slane %v1396, 5
  %v1399 = vor.u32 %v1395, %v1398
  %v1400 = vrot.slane %v1399, 4
  %v1402 = vshll.u32 %v1198, 16
  %v1404 = vrot.slane %v1402, 5
  %v1405 = vsel %vm1209, %v1400, %v1404
  %v1407 = vshrl.u32 %v1199, 16
  %v1409 = vrot.slane %v1407, 4
  %v1410 = vshll.u32 %v1199, 16
  %v1412 = vrot.slane %v1410, 5
  %v1413 = vor.u32 %v1409, %v1412
  %v1414 = vrot.slane %v1413, 4
  %v1416 = vshll.u32 %v1200, 16
  %v1418 = vrot.slane %v1416, 5
  %v1419 = vsel %vm1209, %v1414, %v1418
  %v1421 = vshrl.u32 %v1201, 16
  %v1423 = vrot.slane %v1421, 4
  %v1424 = vshll.u32 %v1201, 16
  %v1426 = vrot.slane %v1424, 5
  %v1427 = vor.u32 %v1423, %v1426
  %v1428 = vrot.slane %v1427, 4
  %v1430 = vshll.u32 %v1202, 16
  %v1432 = vrot.slane %v1430, 5
  %v1433 = vsel %vm1209, %v1428, %v1432
  %v1435 = vshrl.u32 %v1203, 16
  %v1437 = vrot.slane %v1435, 4
  %v1438 = vshll.u32 %v1203, 16
  %v1440 = vrot.slane %v1438, 5
  %v1441 = vor.u32 %v1437, %v1440
  %v1442 = vrot.slane %v1441, 4
  %v1444 = vshll.u32 %v1204, 16
  %v1446 = vrot.slane %v1444, 5
  %v1447 = vsel %vm1209, %v1442, %v1446
  %v1449 = vshrl.u32 %v1205, 16
  %v1451 = vrot.slane %v1449, 4
  %v1452 = vshll.u32 %v1205, 16
  %v1454 = vrot.slane %v1452, 5
  %v1455 = vor.u32 %v1451, %v1454
  %v1456 = vrot.slane %v1455, 4
  %v1458 = vshll.u32 %v1206, 16
  %v1460 = vrot.slane %v1458, 5
  %v1461 = vsel %vm1209, %v1456, %v1460
  %s1462 = scalar_lea.vmem %s2, 256
  %v1463 = vld [vmem:[%s1462] sm:$0xf]
  %v1464 = vld [vmem:[%s1462 + $0x4] sm:$0xf]
  %v1465 = vld [vmem:[%s1462 + $0x8] sm:$0xf]
  %v1466 = vld [vmem:[%s1462 + $0xc] sm:$0xf]
  %v1467 = vld [vmem:[%s1462 + $0x10] sm:$0xf]
  %v1468 = vld [vmem:[%s1462 + $0x14] sm:$0xf]
  %v1469 = vld [vmem:[%s1462 + $0x18] sm:$0xf]
  %v1470 = vld [vmem:[%s1462 + $0x1c] sm:$0xf]
  %v1471 = vld [vmem:[%s1462 + $0x20] sm:$0xf]
  %v1472 = vld [vmem:[%s1462 + $0x24] sm:$0xf]
  %v1473 = vld [vmem:[%s1462 + $0x28] sm:$0xf]
  %v1474 = vld [vmem:[%s1462 + $0x2c] sm:$0xf]
  %v1475 = vld [vmem:[%s1462 + $0x30] sm:$0xf]
  %v1476 = vld [vmem:[%s1462 + $0x34] sm:$0xf]
  %v1477 = vld [vmem:[%s1462 + $0x38] sm:$0xf]
  %v1478 = vld [vmem:[%s1462 + $0x3c] sm:$0xf]
  %v1479 = vld [vmem:[%s1462 + $0x40] sm:$0xf]
  %v1480 = vld [vmem:[%s1462 + $0x44] sm:$0xf]
  %v1481 = vld [vmem:[%s1462 + $0x48] sm:$0xf]
  %v1482 = vld [vmem:[%s1462 + $0x4c] sm:$0xf]
  %v1483 = vld [vmem:[%s1462 + $0x50] sm:$0xf]
  %v1484 = vld [vmem:[%s1462 + $0x54] sm:$0xf]
  %v1485 = vld [vmem:[%s1462 + $0x58] sm:$0xf]
  %v1486 = vld [vmem:[%s1462 + $0x5c] sm:$0xf]
  %v1487 = vld [vmem:[%s1462 + $0x60] sm:$0xf]
  %v1488 = vld [vmem:[%s1462 + $0x64] sm:$0xf]
  %v1489 = vld [vmem:[%s1462 + $0x68] sm:$0xf]
  %v1490 = vld [vmem:[%s1462 + $0x6c] sm:$0xf]
  %v1491 = vld [vmem:[%s1462 + $0x70] sm:$0xf]
  %v1492 = vld [vmem:[%s1462 + $0x74] sm:$0xf]
  %v1493 = vld [vmem:[%s1462 + $0x78] sm:$0xf]
  %v1494 = vld [vmem:[%s1462 + $0x7c] sm:$0xf]
  %v1495 = vld [vmem:[%s1462 + $0x80] sm:$0xf]
  %v1496 = vld [vmem:[%s1462 + $0x84] sm:$0xf]
  %v1497 = vld [vmem:[%s1462 + $0x88] sm:$0xf]
  %v1498 = vld [vmem:[%s1462 + $0x8c] sm:$0xf]
  %v1499 = vld [vmem:[%s1462 + $0x90] sm:$0xf]
  %v1500 = vld [vmem:[%s1462 + $0x94] sm:$0xf]
  %v1501 = vld [vmem:[%s1462 + $0x98] sm:$0xf]
  %v1502 = vld [vmem:[%s1462 + $0x9c] sm:$0xf]
  %v1503 = vld [vmem:[%s1462 + $0xa0] sm:$0xf]
  %v1504 = vld [vmem:[%s1462 + $0xa4] sm:$0xf]
  %v1505 = vld [vmem:[%s1462 + $0xa8] sm:$0xf]
  %v1506 = vld [vmem:[%s1462 + $0xac] sm:$0xf]
  %v1507 = vld [vmem:[%s1462 + $0xb0] sm:$0xf]
  %v1508 = vld [vmem:[%s1462 + $0xb4] sm:$0xf]
  %v1509 = vld [vmem:[%s1462 + $0xb8] sm:$0xf]
  %v1510 = vld [vmem:[%s1462 + $0xbc] sm:$0xf]
  %v1511 = vld [vmem:[%s1462 + $0xc0] sm:$0xf]
  %v1512 = vld [vmem:[%s1462 + $0xc4] sm:$0xf]
  %v1513 = vld [vmem:[%s1462 + $0xc8] sm:$0xf]
  %v1514 = vld [vmem:[%s1462 + $0xcc] sm:$0xf]
  %v1515 = vld [vmem:[%s1462 + $0xd0] sm:$0xf]
  %v1516 = vld [vmem:[%s1462 + $0xd4] sm:$0xf]
  %v1517 = vld [vmem:[%s1462 + $0xd8] sm:$0xf]
  %v1518 = vld [vmem:[%s1462 + $0xdc] sm:$0xf]
  %v1519 = vld [vmem:[%s1462 + $0xe0] sm:$0xf]
  %v1520 = vld [vmem:[%s1462 + $0xe4] sm:$0xf]
  %v1521 = vld [vmem:[%s1462 + $0xe8] sm:$0xf]
  %v1522 = vld [vmem:[%s1462 + $0xec] sm:$0xf]
  %v1523 = vld [vmem:[%s1462 + $0xf0] sm:$0xf]
  %v1524 = vld [vmem:[%s1462 + $0xf4] sm:$0xf]
  %v1525 = vld [vmem:[%s1462 + $0xf8] sm:$0xf]
  %v1526 = vld [vmem:[%s1462 + $0xfc] sm:$0xf]
  %v1527 = vunpack.c.l.b16 %v1223
  %v1528 = vunpack.c.h.b16 %v1223
  %v1529 = vunpack.c.l.b16 %v1237
  %v1530 = vunpack.c.h.b16 %v1237
  %v1531 = vunpack.c.l.b16 %v1251
  %v1532 = vunpack.c.h.b16 %v1251
  %v1533 = vunpack.c.l.b16 %v1265
  %v1534 = vunpack.c.h.b16 %v1265
  %v1535 = vunpack.c.l.b16 %v1279
  %v1536 = vunpack.c.h.b16 %v1279
  %v1537 = vunpack.c.l.b16 %v1293
  %v1538 = vunpack.c.h.b16 %v1293
  %v1539 = vunpack.c.l.b16 %v1307
  %v1540 = vunpack.c.h.b16 %v1307
  %v1541 = vunpack.c.l.b16 %v1321
  %v1542 = vunpack.c.h.b16 %v1321
  %v1543 = vunpack.c.l.b16 %v1335
  %v1544 = vunpack.c.h.b16 %v1335
  %v1545 = vunpack.c.l.b16 %v1349
  %v1546 = vunpack.c.h.b16 %v1349
  %v1547 = vunpack.c.l.b16 %v1363
  %v1548 = vunpack.c.h.b16 %v1363
  %v1549 = vunpack.c.l.b16 %v1377
  %v1550 = vunpack.c.h.b16 %v1377
  %v1551 = vunpack.c.l.b16 %v1391
  %v1552 = vunpack.c.h.b16 %v1391
  %v1553 = vunpack.c.l.b16 %v1405
  %v1554 = vunpack.c.h.b16 %v1405
  %v1555 = vunpack.c.l.b16 %v1419
  %v1556 = vunpack.c.h.b16 %v1419
  %v1557 = vunpack.c.l.b16 %v1433
  %v1558 = vunpack.c.h.b16 %v1433
  %v1559 = vunpack.c.l.b16 %v1447
  %v1560 = vunpack.c.h.b16 %v1447
  %v1561 = vunpack.c.l.b16 %v1461
  %v1562 = vunpack.c.h.b16 %v1461
  %v1563 = vpack.c.b16 %v1529, %v1527
  %v1564 = vpack.c.b16 %v1530, %v1528
  %v1565 = vpack.c.b16 %v1531, %v1529
  %v1566 = vpack.c.b16 %v1532, %v1530
  %v1567 = vpack.c.b16 %v1533, %v1531
  %v1568 = vpack.c.b16 %v1534, %v1532
  %v1569 = vpack.c.b16 %v1535, %v1533
  %v1570 = vpack.c.b16 %v1536, %v1534
  %v1571 = vpack.c.b16 %v1537, %v1535
  %v1572 = vpack.c.b16 %v1538, %v1536
  %v1573 = vpack.c.b16 %v1539, %v1537
  %v1574 = vpack.c.b16 %v1540, %v1538
  %v1575 = vpack.c.b16 %v1541, %v1539
  %v1576 = vpack.c.b16 %v1542, %v1540
  %v1577 = vpack.c.b16 %v1543, %v1541
  %v1578 = vpack.c.b16 %v1544, %v1542
  %v1579 = vpack.c.b16 %v1547, %v1545
  %v1580 = vpack.c.b16 %v1548, %v1546
  %v1581 = vpack.c.b16 %v1549, %v1547
  %v1582 = vpack.c.b16 %v1550, %v1548
  %v1583 = vpack.c.b16 %v1551, %v1549
  %v1584 = vpack.c.b16 %v1552, %v1550
  %v1585 = vpack.c.b16 %v1553, %v1551
  %v1586 = vpack.c.b16 %v1554, %v1552
  %v1587 = vpack.c.b16 %v1555, %v1553
  %v1588 = vpack.c.b16 %v1556, %v1554
  %v1589 = vpack.c.b16 %v1557, %v1555
  %v1590 = vpack.c.b16 %v1558, %v1556
  %v1591 = vpack.c.b16 %v1559, %v1557
  %v1592 = vpack.c.b16 %v1560, %v1558
  %v1593 = vpack.c.b16 %v1561, %v1559
  %v1594 = vpack.c.b16 %v1562, %v1560
  %v1691 = vunpack.c.l.b16 %v1463
  %v1692 = vunpack.c.l.b16 %v1464
  %v1693 = vunpack.c.l.b16 %v1465
  %v1694 = vunpack.c.l.b16 %v1466
  %v1695 = vunpack.c.l.b16 %v1467
  %v1696 = vunpack.c.l.b16 %v1468
  %v1697 = vunpack.c.l.b16 %v1469
  %v1698 = vunpack.c.l.b16 %v1470
  %v1699 = vunpack.c.l.b16 %v1471
  %v1700 = vunpack.c.l.b16 %v1472
  %v1701 = vunpack.c.l.b16 %v1473
  %v1702 = vunpack.c.l.b16 %v1474
  %v1703 = vunpack.c.l.b16 %v1475
  %v1704 = vunpack.c.l.b16 %v1476
  %v1705 = vunpack.c.l.b16 %v1477
  %v1706 = vunpack.c.l.b16 %v1478
  %v1707 = vunpack.c.l.b16 %v1479
  %v1708 = vunpack.c.l.b16 %v1480
  %v1709 = vunpack.c.l.b16 %v1481
  %v1710 = vunpack.c.l.b16 %v1482
  %v1711 = vunpack.c.l.b16 %v1483
  %v1712 = vunpack.c.l.b16 %v1484
  %v1713 = vunpack.c.l.b16 %v1485
  %v1714 = vunpack.c.l.b16 %v1486
  %v1715 = vunpack.c.l.b16 %v1487
  %v1716 = vunpack.c.l.b16 %v1488
  %v1717 = vunpack.c.l.b16 %v1489
  %v1718 = vunpack.c.l.b16 %v1490
  %v1719 = vunpack.c.l.b16 %v1491
  %v1720 = vunpack.c.l.b16 %v1492
  %v1721 = vunpack.c.l.b16 %v1493
  %v1722 = vunpack.c.l.b16 %v1494
  %v1723 = vunpack.c.l.b16 %v1495
  %v1724 = vunpack.c.l.b16 %v1496
  %v1725 = vunpack.c.l.b16 %v1497
  %v1726 = vunpack.c.l.b16 %v1498
  %v1727 = vunpack.c.l.b16 %v1499
  %v1728 = vunpack.c.l.b16 %v1500
  %v1729 = vunpack.c.l.b16 %v1501
  %v1730 = vunpack.c.l.b16 %v1502
  %v1731 = vunpack.c.l.b16 %v1503
  %v1732 = vunpack.c.l.b16 %v1504
  %v1733 = vunpack.c.l.b16 %v1505
  %v1734 = vunpack.c.l.b16 %v1506
  %v1735 = vunpack.c.l.b16 %v1507
  %v1736 = vunpack.c.l.b16 %v1508
  %v1737 = vunpack.c.l.b16 %v1509
  %v1738 = vunpack.c.l.b16 %v1510
  %v1739 = vunpack.c.l.b16 %v1511
  %v1740 = vunpack.c.l.b16 %v1512
  %v1741 = vunpack.c.l.b16 %v1513
  %v1742 = vunpack.c.l.b16 %v1514
  %v1743 = vunpack.c.l.b16 %v1515
  %v1744 = vunpack.c.l.b16 %v1516
  %v1745 = vunpack.c.l.b16 %v1517
  %v1746 = vunpack.c.l.b16 %v1518
  %v1747 = vunpack.c.l.b16 %v1519
  %v1748 = vunpack.c.l.b16 %v1520
  %v1749 = vunpack.c.l.b16 %v1521
  %v1750 = vunpack.c.l.b16 %v1522
  %v1751 = vunpack.c.l.b16 %v1523
  %v1752 = vunpack.c.l.b16 %v1524
  %v1753 = vunpack.c.l.b16 %v1525
  %v1754 = vunpack.c.l.b16 %v1526
  %v1755 = vpack.c.b16 %v1692, %v1691
  %v1756 = vpack.c.b16 %v1694, %v1693
  %v1757 = vpack.c.b16 %v1696, %v1695
  %v1758 = vpack.c.b16 %v1698, %v1697
  %v1759 = vpack.c.b16 %v1700, %v1699
  %v1760 = vpack.c.b16 %v1702, %v1701
  %v1761 = vpack.c.b16 %v1704, %v1703
  %v1762 = vpack.c.b16 %v1706, %v1705
  %v1763 = vpack.c.b16 %v1708, %v1707
  %v1764 = vpack.c.b16 %v1710, %v1709
  %v1765 = vpack.c.b16 %v1712, %v1711
  %v1766 = vpack.c.b16 %v1714, %v1713
  %v1767 = vpack.c.b16 %v1716, %v1715
  %v1768 = vpack.c.b16 %v1718, %v1717
  %v1769 = vpack.c.b16 %v1720, %v1719
  %v1770 = vpack.c.b16 %v1722, %v1721
  %v1771 = vpack.c.b16 %v1724, %v1723
  %v1772 = vpack.c.b16 %v1726, %v1725
  %v1773 = vpack.c.b16 %v1728, %v1727
  %v1774 = vpack.c.b16 %v1730, %v1729
  %v1775 = vpack.c.b16 %v1732, %v1731
  %v1776 = vpack.c.b16 %v1734, %v1733
  %v1777 = vpack.c.b16 %v1736, %v1735
  %v1778 = vpack.c.b16 %v1738, %v1737
  %v1779 = vpack.c.b16 %v1740, %v1739
  %v1780 = vpack.c.b16 %v1742, %v1741
  %v1781 = vpack.c.b16 %v1744, %v1743
  %v1782 = vpack.c.b16 %v1746, %v1745
  %v1783 = vpack.c.b16 %v1748, %v1747
  %v1784 = vpack.c.b16 %v1750, %v1749
  %v1785 = vpack.c.b16 %v1752, %v1751
  %v1786 = vpack.c.b16 %v1754, %v1753
  %1819 = vmatprep.subr.bf16.mxu0 0
  %1820 = vmatpush1.bf16.msra.mxu0 %v1762
  %1821 = vmatprep.subr.bf16.mxu0 0
  %1822 = vmatpush1.bf16.msra.mxu0 %v1761
  %1823 = vmatprep.subr.bf16.mxu0 0
  %1824 = vmatpush1.bf16.msra.mxu0 %v1760
  %1825 = vmatprep.subr.bf16.mxu0 0
  %1826 = vmatpush1.bf16.msra.mxu0 %v1759
  %1827 = vmatprep.subr.bf16.mxu0 0
  %1828 = vmatpush1.bf16.msra.mxu0 %v1758
  %1829 = vmatprep.subr.bf16.mxu0 0
  %1830 = vmatpush1.bf16.msra.mxu0 %v1757
  %1831 = vmatprep.subr.bf16.mxu0 0
  %1832 = vmatpush1.bf16.msra.mxu0 %v1756
  %1833 = vmatprep.subr.bf16.mxu0 0
  %1834 = vmatpush1.bf16.msra.mxu0 %v1755
  %1835 = vmatprep.subr.bf16.mxu0 0
  %1836 = vmatpush2.bf16.msra.mxu0 %v1770
  %1837 = vmatprep.subr.bf16.mxu0 0
  %1838 = vmatpush2.bf16.msra.mxu0 %v1769
  %1839 = vmatprep.subr.bf16.mxu0 0
  %1840 = vmatpush2.bf16.msra.mxu0 %v1768
  %1841 = vmatprep.subr.bf16.mxu0 0
  %1842 = vmatpush2.bf16.msra.mxu0 %v1767
  %1843 = vmatprep.subr.bf16.mxu0 0
  %1844 = vmatpush2.bf16.msra.mxu0 %v1766
  %1845 = vmatprep.subr.bf16.mxu0 0
  %1846 = vmatpush2.bf16.msra.mxu0 %v1765
  %1847 = vmatprep.subr.bf16.mxu0 0
  %1848 = vmatpush2.bf16.msra.mxu0 %v1764
  %1849 = vmatprep.subr.bf16.mxu0 0
  %1850 = vmatpush2.bf16.msra.mxu0 %v1763
  %1851 = vmatprep.mubr.bf16.mxu0 %v1564
  %1852 = vmatmul.mubr.bf16.gmra.mxu0 %v1563
  %v1853 = vpop.f32.mrf.mxu0
  %v1854 = vadd.f32 %v667, %v1853
  %v1855 = vpop.f32.mrf.mxu0
  %v1856 = vpop.f32.mrf.mxu0
  %v1857 = vadd.f32 %v667, %v1856
  %v1858 = vpop.f32.mrf.mxu0
  %1859 = vmatprep.mubr.bf16.mxu0 %v1568
  %1860 = vmatmul.mubr.bf16.gmra.mxu0 %v1567
  %v1861 = vpop.f32.mrf.mxu0
  %v1862 = vadd.f32 %v667, %v1861
  %v1863 = vpop.f32.mrf.mxu0
  %v1864 = vpop.f32.mrf.mxu0
  %v1865 = vadd.f32 %v667, %v1864
  %v1866 = vpop.f32.mrf.mxu0
  %1867 = vmatprep.mubr.bf16.mxu0 %v1572
  %1868 = vmatmul.mubr.bf16.gmra.mxu0 %v1571
  %v1869 = vpop.f32.mrf.mxu0
  %v1870 = vadd.f32 %v667, %v1869
  %v1871 = vpop.f32.mrf.mxu0
  %v1872 = vpop.f32.mrf.mxu0
  %v1873 = vadd.f32 %v667, %v1872
  %v1874 = vpop.f32.mrf.mxu0
  %1875 = vmatprep.mubr.bf16.mxu0 %v1576
  %1876 = vmatmul.mubr.bf16.gmra.mxu0 %v1575
  %v1877 = vpop.f32.mrf.mxu0
  %v1878 = vadd.f32 %v667, %v1877
  %v1879 = vpop.f32.mrf.mxu0
  %v1880 = vpop.f32.mrf.mxu0
  %v1881 = vadd.f32 %v667, %v1880
  %v1882 = vpop.f32.mrf.mxu0
  %1883 = vmatprep.mubr.bf16.mxu0 %v1580
  %1884 = vmatmul.mubr.bf16.gmra.mxu0 %v1579
  %v1885 = vpop.f32.mrf.mxu0
  %v1886 = vadd.f32 %v667, %v1885
  %v1887 = vpop.f32.mrf.mxu0
  %v1888 = vpop.f32.mrf.mxu0
  %v1889 = vadd.f32 %v667, %v1888
  %v1890 = vpop.f32.mrf.mxu0
  %1891 = vmatprep.mubr.bf16.mxu0 %v1584
  %1892 = vmatmul.mubr.bf16.gmra.mxu0 %v1583
  %v1893 = vpop.f32.mrf.mxu0
  %v1894 = vadd.f32 %v667, %v1893
  %v1895 = vpop.f32.mrf.mxu0
  %v1896 = vpop.f32.mrf.mxu0
  %v1897 = vadd.f32 %v667, %v1896
  %v1898 = vpop.f32.mrf.mxu0
  %1899 = vmatprep.mubr.bf16.mxu0 %v1588
  %1900 = vmatmul.mubr.bf16.gmra.mxu0 %v1587
  %v1901 = vpop.f32.mrf.mxu0
  %v1902 = vadd.f32 %v667, %v1901
  %v1903 = vpop.f32.mrf.mxu0
  %v1904 = vpop.f32.mrf.mxu0
  %v1905 = vadd.f32 %v667, %v1904
  %v1906 = vpop.f32.mrf.mxu0
  %1907 = vmatprep.mubr.bf16.mxu0 %v1592
  %1908 = vmatmul.mubr.bf16.gmra.mxu0 %v1591
  %v1909 = vpop.f32.mrf.mxu0
  %v1910 = vadd.f32 %v667, %v1909
  %v1911 = vpop.f32.mrf.mxu0
  %v1912 = vpop.f32.mrf.mxu0
  %v1913 = vadd.f32 %v667, %v1912
  %v1914 = vpop.f32.mrf.mxu0
  %1915 = vdwg.mxu0
  %1916 = vmatprep.subr.bf16.mxu0 0
  %1917 = vmatpush1.bf16.msra.mxu0 %v1778
  %1918 = vmatprep.subr.bf16.mxu0 0
  %1919 = vmatpush1.bf16.msra.mxu0 %v1777
  %1920 = vmatprep.subr.bf16.mxu0 0
  %1921 = vmatpush1.bf16.msra.mxu0 %v1776
  %1922 = vmatprep.subr.bf16.mxu0 0
  %1923 = vmatpush1.bf16.msra.mxu0 %v1775
  %1924 = vmatprep.subr.bf16.mxu0 0
  %1925 = vmatpush1.bf16.msra.mxu0 %v1774
  %1926 = vmatprep.subr.bf16.mxu0 0
  %1927 = vmatpush1.bf16.msra.mxu0 %v1773
  %1928 = vmatprep.subr.bf16.mxu0 0
  %1929 = vmatpush1.bf16.msra.mxu0 %v1772
  %1930 = vmatprep.subr.bf16.mxu0 0
  %1931 = vmatpush1.bf16.msra.mxu0 %v1771
  %1932 = vmatprep.subr.bf16.mxu0 0
  %1933 = vmatpush2.bf16.msra.mxu0 %v1786
  %1934 = vmatprep.subr.bf16.mxu0 0
  %1935 = vmatpush2.bf16.msra.mxu0 %v1785
  %1936 = vmatprep.subr.bf16.mxu0 0
  %1937 = vmatpush2.bf16.msra.mxu0 %v1784
  %1938 = vmatprep.subr.bf16.mxu0 0
  %1939 = vmatpush2.bf16.msra.mxu0 %v1783
  %1940 = vmatprep.subr.bf16.mxu0 0
  %1941 = vmatpush2.bf16.msra.mxu0 %v1782
  %1942 = vmatprep.subr.bf16.mxu0 0
  %1943 = vmatpush2.bf16.msra.mxu0 %v1781
  %1944 = vmatprep.subr.bf16.mxu0 0
  %1945 = vmatpush2.bf16.msra.mxu0 %v1780
  %1946 = vmatprep.subr.bf16.mxu0 0
  %1947 = vmatpush2.bf16.msra.mxu0 %v1779
  %1948 = vmatprep.mubr.bf16.mxu0 %v1566
  %1949 = vmatmul.mubr.bf16.gmra.mxu0 %v1565
  %v1950 = vpop.f32.mrf.mxu0
  %v1951 = vadd.f32 %v1854, %v1950
  %v1952 = vpop.f32.mrf.mxu0
  %v1953 = vpop.f32.mrf.mxu0
  %v1954 = vadd.f32 %v1857, %v1953
  %v1955 = vpop.f32.mrf.mxu0
  %1956 = vmatprep.mubr.bf16.mxu0 %v1570
  %1957 = vmatmul.mubr.bf16.gmra.mxu0 %v1569
  %v1958 = vpop.f32.mrf.mxu0
  %v1959 = vadd.f32 %v1862, %v1958
  %v1960 = vpop.f32.mrf.mxu0
  %v1961 = vpop.f32.mrf.mxu0
  %v1962 = vadd.f32 %v1865, %v1961
  %v1963 = vpop.f32.mrf.mxu0
  %1964 = vmatprep.mubr.bf16.mxu0 %v1574
  %1965 = vmatmul.mubr.bf16.gmra.mxu0 %v1573
  %v1966 = vpop.f32.mrf.mxu0
  %v1967 = vadd.f32 %v1870, %v1966
  %v1968 = vpop.f32.mrf.mxu0
  %v1969 = vpop.f32.mrf.mxu0
  %v1970 = vadd.f32 %v1873, %v1969
  %v1971 = vpop.f32.mrf.mxu0
  %1972 = vmatprep.mubr.bf16.mxu0 %v1578
  %1973 = vmatmul.mubr.bf16.gmra.mxu0 %v1577
  %v1974 = vpop.f32.mrf.mxu0
  %v1975 = vadd.f32 %v1878, %v1974
  %v1976 = vpop.f32.mrf.mxu0
  %v1977 = vpop.f32.mrf.mxu0
  %v1978 = vadd.f32 %v1881, %v1977
  %v1979 = vpop.f32.mrf.mxu0
  %1980 = vmatprep.mubr.bf16.mxu0 %v1582
  %1981 = vmatmul.mubr.bf16.gmra.mxu0 %v1581
  %v1982 = vpop.f32.mrf.mxu0
  %v1983 = vadd.f32 %v1886, %v1982
  %v1984 = vpop.f32.mrf.mxu0
  %v1985 = vpop.f32.mrf.mxu0
  %v1986 = vadd.f32 %v1889, %v1985
  %v1987 = vpop.f32.mrf.mxu0
  %1988 = vmatprep.mubr.bf16.mxu0 %v1586
  %1989 = vmatmul.mubr.bf16.gmra.mxu0 %v1585
  %v1990 = vpop.f32.mrf.mxu0
  %v1991 = vadd.f32 %v1894, %v1990
  %v1992 = vpop.f32.mrf.mxu0
  %v1993 = vpop.f32.mrf.mxu0
  %v1994 = vadd.f32 %v1897, %v1993
  %v1995 = vpop.f32.mrf.mxu0
  %1996 = vmatprep.mubr.bf16.mxu0 %v1590
  %1997 = vmatmul.mubr.bf16.gmra.mxu0 %v1589
  %v1998 = vpop.f32.mrf.mxu0
  %v1999 = vadd.f32 %v1902, %v1998
  %v2000 = vpop.f32.mrf.mxu0
  %v2001 = vpop.f32.mrf.mxu0
  %v2002 = vadd.f32 %v1905, %v2001
  %v2003 = vpop.f32.mrf.mxu0
  %2004 = vmatprep.mubr.bf16.mxu0 %v1594
  %2005 = vmatmul.mubr.bf16.gmra.mxu0 %v1593
  %v2006 = vpop.f32.mrf.mxu0
  %v2007 = vadd.f32 %v1910, %v2006
  %v2008 = vpop.f32.mrf.mxu0
  %v2009 = vpop.f32.mrf.mxu0
  %v2010 = vadd.f32 %v1913, %v2009
  %v2011 = vpop.f32.mrf.mxu0
  %2012 = vdwg.mxu0
  %v2013 = vtanh.pop %v1951
  %v2014 = vtanh.pop %v1954
  %v2015 = vtanh.pop %v1959
  %v2016 = vtanh.pop %v1962
  %v2017 = vtanh.pop %v1967
  %v2018 = vtanh.pop %v1970
  %v2019 = vtanh.pop %v1975
  %v2020 = vtanh.pop %v1978
  %v2021 = vtanh.pop %v1983
  %v2022 = vtanh.pop %v1986
  %v2023 = vtanh.pop %v1991
  %v2024 = vtanh.pop %v1994
  %v2025 = vtanh.pop %v1999
  %v2026 = vtanh.pop %v2002
  %v2027 = vtanh.pop %v2007
  %v2028 = vtanh.pop %v2010
  %2045 = vrot.lane.b32.xlu0 %v2013, 8
  %v2046 = vpop.permute.xlu0 %2045
  %2047 = vrot.lane.b32.xlu0 %v2014, 8
  %v2048 = vpop.permute.xlu0 %2047
  %2049 = vrot.lane.b32.xlu0 %v2015, 8
  %v2050 = vpop.permute.xlu0 %2049
  %2051 = vrot.lane.b32.xlu0 %v2016, 8
  %v2052 = vpop.permute.xlu0 %2051
  %2053 = vrot.lane.b32.xlu0 %v2017, 8
  %v2054 = vpop.permute.xlu0 %2053
  %2055 = vrot.lane.b32.xlu0 %v2018, 8
  %v2056 = vpop.permute.xlu0 %2055
  %2057 = vrot.lane.b32.xlu0 %v2019, 8
  %v2058 = vpop.permute.xlu0 %2057
  %2059 = vrot.lane.b32.xlu0 %v2020, 8
  %v2060 = vpop.permute.xlu0 %2059
  %2061 = vrot.lane.b32.xlu0 %v2021, 8
  %v2062 = vpop.permute.xlu0 %2061
  %2063 = vrot.lane.b32.xlu0 %v2022, 8
  %v2064 = vpop.permute.xlu0 %2063
  %2065 = vrot.lane.b32.xlu0 %v2023, 8
  %v2066 = vpop.permute.xlu0 %2065
  %2067 = vrot.lane.b32.xlu0 %v2024, 8
  %v2068 = vpop.permute.xlu0 %2067
  %2069 = vrot.lane.b32.xlu0 %v2025, 8
  %v2070 = vpop.permute.xlu0 %2069
  %2071 = vrot.lane.b32.xlu0 %v2026, 8
  %v2072 = vpop.permute.xlu0 %2071
  %2073 = vrot.lane.b32.xlu0 %v2027, 8
  %v2074 = vpop.permute.xlu0 %2073
  %2075 = vrot.lane.b32.xlu0 %v2028, 8
  %v2076 = vpop.permute.xlu0 %2075
  %vm2093 = vcmask 64512
  %v2094 = vsel %vm2093, %v1119, %v2046
  %v2095 = vsel %vm2093, %v1120, %v2048
  %v2096 = vsel %vm2093, %v1121, %v2050
  %v2097 = vsel %vm2093, %v1122, %v2052
  %v2098 = vsel %vm2093, %v1123, %v2054
  %v2099 = vsel %vm2093, %v1124, %v2056
  %v2100 = vsel %vm2093, %v1125, %v2058
  %v2101 = vsel %vm2093, %v1126, %v2060
  %v2102 = vsel %vm2093, %v1127, %v2062
  %v2103 = vsel %vm2093, %v1128, %v2064
  %v2104 = vsel %vm2093, %v1129, %v2066
  %v2105 = vsel %vm2093, %v1130, %v2068
  %v2106 = vsel %vm2093, %v1131, %v2070
  %v2107 = vsel %vm2093, %v1132, %v2072
  %v2108 = vsel %vm2093, %v1133, %v2074
  %v2109 = vsel %vm2093, %v1134, %v2076
  %vm2110 = vcmask 130048
  %2111 = vst.msk [vmem:[%s4] sm:$0xff] %vm2110, %v2094
  %2112 = vst.msk [vmem:[%s4 + $0x10] sm:$0xff] %vm2110, %v2095
  %2113 = vst.msk [vmem:[%s4 + $0x20] sm:$0xff] %vm2110, %v2096
  %2114 = vst.msk [vmem:[%s4 + $0x30] sm:$0xff] %vm2110, %v2097
  %2115 = vst.msk [vmem:[%s4 + $0x40] sm:$0xff] %vm2110, %v2098
  %2116 = vst.msk [vmem:[%s4 + $0x50] sm:$0xff] %vm2110, %v2099
  %2117 = vst.msk [vmem:[%s4 + $0x60] sm:$0xff] %vm2110, %v2100
  %2118 = vst.msk [vmem:[%s4 + $0x70] sm:$0xff] %vm2110, %v2101
  %2119 = vst.msk [vmem:[%s4 + $0x80] sm:$0xff] %vm2110, %v2102
  %2120 = vst.msk [vmem:[%s4 + $0x90] sm:$0xff] %vm2110, %v2103
  %2121 = vst.msk [vmem:[%s4 + $0xa0] sm:$0xff] %vm2110, %v2104
  %2122 = vst.msk [vmem:[%s4 + $0xb0] sm:$0xff] %vm2110, %v2105
  %2123 = vst.msk [vmem:[%s4 + $0xc0] sm:$0xff] %vm2110, %v2106
  %2124 = vst.msk [vmem:[%s4 + $0xd0] sm:$0xff] %vm2110, %v2107
  %2125 = vst.msk [vmem:[%s4 + $0xe0] sm:$0xff] %vm2110, %v2108
  %2126 = vst.msk [vmem:[%s4 + $0xf0] sm:$0xff] %vm2110, %v2109
  %v2128 = vshrl.u32 %v407, 16
  %v2130 = vshll.u32 %v407, 16
  %v2132 = vrot.slane %v2130, 1
  %v2133 = vor.u32 %v2128, %v2132
  %v2135 = vshrl.u32 %v417, 16
  %v2137 = vshll.u32 %v417, 16
  %v2139 = vrot.slane %v2137, 1
  %v2140 = vor.u32 %v2135, %v2139
  %v2143 = vunpack.c.l.b16 %v407
  %v2144 = vunpack.c.l.b16 %v2133
  %v2145 = vunpack.c.l.b16 %v417
  %v2146 = vunpack.c.l.b16 %v2140
  %s2147 = scalar_lea.vmem %s2, 512
  %v2148 = vld [vmem:[%s2147] sm:$0xf]
  %v2149 = vld [vmem:[%s2147 + $0x4] sm:$0xf]
  %v2150 = vld [vmem:[%s2147 + $0x8] sm:$0xf]
  %v2151 = vld [vmem:[%s2147 + $0xc] sm:$0xf]
  %v2152 = vld [vmem:[%s2147 + $0x10] sm:$0xf]
  %v2153 = vld [vmem:[%s2147 + $0x14] sm:$0xf]
  %v2154 = vld [vmem:[%s2147 + $0x18] sm:$0xf]
  %v2155 = vld [vmem:[%s2147 + $0x1c] sm:$0xf]
  %v2156 = vld [vmem:[%s2147 + $0x20] sm:$0xf]
  %v2157 = vld [vmem:[%s2147 + $0x24] sm:$0xf]
  %v2158 = vld [vmem:[%s2147 + $0x28] sm:$0xf]
  %v2159 = vld [vmem:[%s2147 + $0x2c] sm:$0xf]
  %v2160 = vld [vmem:[%s2147 + $0x30] sm:$0xf]
  %v2161 = vld [vmem:[%s2147 + $0x34] sm:$0xf]
  %v2162 = vld [vmem:[%s2147 + $0x38] sm:$0xf]
  %v2163 = vld [vmem:[%s2147 + $0x3c] sm:$0xf]
  %v2164 = vld [vmem:[%s2147 + $0x40] sm:$0xf]
  %v2165 = vld [vmem:[%s2147 + $0x44] sm:$0xf]
  %v2166 = vld [vmem:[%s2147 + $0x48] sm:$0xf]
  %v2167 = vld [vmem:[%s2147 + $0x4c] sm:$0xf]
  %v2168 = vld [vmem:[%s2147 + $0x50] sm:$0xf]
  %v2169 = vld [vmem:[%s2147 + $0x54] sm:$0xf]
  %v2170 = vld [vmem:[%s2147 + $0x58] sm:$0xf]
  %v2171 = vld [vmem:[%s2147 + $0x5c] sm:$0xf]
  %v2172 = vld [vmem:[%s2147 + $0x60] sm:$0xf]
  %v2173 = vld [vmem:[%s2147 + $0x64] sm:$0xf]
  %v2174 = vld [vmem:[%s2147 + $0x68] sm:$0xf]
  %v2175 = vld [vmem:[%s2147 + $0x6c] sm:$0xf]
  %v2176 = vld [vmem:[%s2147 + $0x70] sm:$0xf]
  %v2177 = vld [vmem:[%s2147 + $0x74] sm:$0xf]
  %v2178 = vld [vmem:[%s2147 + $0x78] sm:$0xf]
  %v2179 = vld [vmem:[%s2147 + $0x7c] sm:$0xf]
  %v2180 = vld [vmem:[%s2147 + $0x80] sm:$0xf]
  %v2181 = vld [vmem:[%s2147 + $0x84] sm:$0xf]
  %v2182 = vld [vmem:[%s2147 + $0x88] sm:$0xf]
  %v2183 = vld [vmem:[%s2147 + $0x8c] sm:$0xf]
  %v2184 = vld [vmem:[%s2147 + $0x90] sm:$0xf]
  %v2185 = vld [vmem:[%s2147 + $0x94] sm:$0xf]
  %v2186 = vld [vmem:[%s2147 + $0x98] sm:$0xf]
  %v2187 = vld [vmem:[%s2147 + $0x9c] sm:$0xf]
  %v2188 = vld [vmem:[%s2147 + $0xa0] sm:$0xf]
  %v2189 = vld [vmem:[%s2147 + $0xa4] sm:$0xf]
  %v2190 = vld [vmem:[%s2147 + $0xa8] sm:$0xf]
  %v2191 = vld [vmem:[%s2147 + $0xac] sm:$0xf]
  %v2192 = vld [vmem:[%s2147 + $0xb0] sm:$0xf]
  %v2193 = vld [vmem:[%s2147 + $0xb4] sm:$0xf]
  %v2194 = vld [vmem:[%s2147 + $0xb8] sm:$0xf]
  %v2195 = vld [vmem:[%s2147 + $0xbc] sm:$0xf]
  %v2196 = vld [vmem:[%s2147 + $0xc0] sm:$0xf]
  %v2197 = vld [vmem:[%s2147 + $0xc4] sm:$0xf]
  %v2198 = vld [vmem:[%s2147 + $0xc8] sm:$0xf]
  %v2199 = vld [vmem:[%s2147 + $0xcc] sm:$0xf]
  %v2200 = vld [vmem:[%s2147 + $0xd0] sm:$0xf]
  %v2201 = vld [vmem:[%s2147 + $0xd4] sm:$0xf]
  %v2202 = vld [vmem:[%s2147 + $0xd8] sm:$0xf]
  %v2203 = vld [vmem:[%s2147 + $0xdc] sm:$0xf]
  %v2204 = vld [vmem:[%s2147 + $0xe0] sm:$0xf]
  %v2205 = vld [vmem:[%s2147 + $0xe4] sm:$0xf]
  %v2206 = vld [vmem:[%s2147 + $0xe8] sm:$0xf]
  %v2207 = vld [vmem:[%s2147 + $0xec] sm:$0xf]
  %v2208 = vld [vmem:[%s2147 + $0xf0] sm:$0xf]
  %v2209 = vld [vmem:[%s2147 + $0xf4] sm:$0xf]
  %v2210 = vld [vmem:[%s2147 + $0xf8] sm:$0xf]
  %v2211 = vld [vmem:[%s2147 + $0xfc] sm:$0xf]
  %v2212 = vld [vmem:[%s3] sm:$0x1]
  %v2214 = vlaneseq
  %v2215 = vshrl.u32 %v2214, 7
  %v2216 = vsub.s32 0, %v2215
  %v2217 = vrot.slane %v2212, %v2216
  %v2219 = vpack.c.b16 %v2143, %v578
  %v2220 = vpack.c.b16 %v2144, %v579
  %v2221 = vpack.c.b16 %v2145, %v596
  %v2222 = vpack.c.b16 %v2146, %v597
  %v2291 = vunpack.c.l.b16 %v2148
  %v2292 = vunpack.c.l.b16 %v2149
  %v2293 = vunpack.c.l.b16 %v2150
  %v2294 = vunpack.c.l.b16 %v2151
  %v2295 = vunpack.c.l.b16 %v2152
  %v2296 = vunpack.c.l.b16 %v2153
  %v2297 = vunpack.c.l.b16 %v2154
  %v2298 = vunpack.c.l.b16 %v2155
  %v2299 = vunpack.c.l.b16 %v2156
  %v2300 = vunpack.c.l.b16 %v2157
  %v2301 = vunpack.c.l.b16 %v2158
  %v2302 = vunpack.c.l.b16 %v2159
  %v2303 = vunpack.c.l.b16 %v2160
  %v2304 = vunpack.c.l.b16 %v2161
  %v2305 = vunpack.c.l.b16 %v2162
  %v2306 = vunpack.c.l.b16 %v2163
  %v2307 = vunpack.c.l.b16 %v2164
  %v2308 = vunpack.c.l.b16 %v2165
  %v2309 = vunpack.c.l.b16 %v2166
  %v2310 = vunpack.c.l.b16 %v2167
  %v2311 = vunpack.c.l.b16 %v2168
  %v2312 = vunpack.c.l.b16 %v2169
  %v2313 = vunpack.c.l.b16 %v2170
  %v2314 = vunpack.c.l.b16 %v2171
  %v2315 = vunpack.c.l.b16 %v2172
  %v2316 = vunpack.c.l.b16 %v2173
  %v2317 = vunpack.c.l.b16 %v2174
  %v2318 = vunpack.c.l.b16 %v2175
  %v2319 = vunpack.c.l.b16 %v2176
  %v2320 = vunpack.c.l.b16 %v2177
  %v2321 = vunpack.c.l.b16 %v2178
  %v2322 = vunpack.c.l.b16 %v2179
  %v2323 = vunpack.c.l.b16 %v2180
  %v2324 = vunpack.c.l.b16 %v2181
  %v2325 = vunpack.c.l.b16 %v2182
  %v2326 = vunpack.c.l.b16 %v2183
  %v2327 = vunpack.c.l.b16 %v2184
  %v2328 = vunpack.c.l.b16 %v2185
  %v2329 = vunpack.c.l.b16 %v2186
  %v2330 = vunpack.c.l.b16 %v2187
  %v2331 = vunpack.c.l.b16 %v2188
  %v2332 = vunpack.c.l.b16 %v2189
  %v2333 = vunpack.c.l.b16 %v2190
  %v2334 = vunpack.c.l.b16 %v2191
  %v2335 = vunpack.c.l.b16 %v2192
  %v2336 = vunpack.c.l.b16 %v2193
  %v2337 = vunpack.c.l.b16 %v2194
  %v2338 = vunpack.c.l.b16 %v2195
  %v2339 = vunpack.c.l.b16 %v2196
  %v2340 = vunpack.c.l.b16 %v2197
  %v2341 = vunpack.c.l.b16 %v2198
  %v2342 = vunpack.c.l.b16 %v2199
  %v2343 = vunpack.c.l.b16 %v2200
  %v2344 = vunpack.c.l.b16 %v2201
  %v2345 = vunpack.c.l.b16 %v2202
  %v2346 = vunpack.c.l.b16 %v2203
  %v2347 = vunpack.c.l.b16 %v2204
  %v2348 = vunpack.c.l.b16 %v2205
  %v2349 = vunpack.c.l.b16 %v2206
  %v2350 = vunpack.c.l.b16 %v2207
  %v2351 = vunpack.c.l.b16 %v2208
  %v2352 = vunpack.c.l.b16 %v2209
  %v2353 = vunpack.c.l.b16 %v2210
  %v2354 = vunpack.c.l.b16 %v2211
  %v2355 = vpack.c.b16 %v2292, %v2291
  %v2356 = vpack.c.b16 %v2294, %v2293
  %v2357 = vpack.c.b16 %v2296, %v2295
  %v2358 = vpack.c.b16 %v2298, %v2297
  %v2359 = vpack.c.b16 %v2300, %v2299
  %v2360 = vpack.c.b16 %v2302, %v2301
  %v2361 = vpack.c.b16 %v2304, %v2303
  %v2362 = vpack.c.b16 %v2306, %v2305
  %v2363 = vpack.c.b16 %v2308, %v2307
  %v2364 = vpack.c.b16 %v2310, %v2309
  %v2365 = vpack.c.b16 %v2312, %v2311
  %v2366 = vpack.c.b16 %v2314, %v2313
  %v2367 = vpack.c.b16 %v2316, %v2315
  %v2368 = vpack.c.b16 %v2318, %v2317
  %v2369 = vpack.c.b16 %v2320, %v2319
  %v2370 = vpack.c.b16 %v2322, %v2321
  %v2371 = vpack.c.b16 %v2324, %v2323
  %v2372 = vpack.c.b16 %v2326, %v2325
  %v2373 = vpack.c.b16 %v2328, %v2327
  %v2374 = vpack.c.b16 %v2330, %v2329
  %v2375 = vpack.c.b16 %v2332, %v2331
  %v2376 = vpack.c.b16 %v2334, %v2333
  %v2377 = vpack.c.b16 %v2336, %v2335
  %v2378 = vpack.c.b16 %v2338, %v2337
  %v2379 = vpack.c.b16 %v2340, %v2339
  %v2380 = vpack.c.b16 %v2342, %v2341
  %v2381 = vpack.c.b16 %v2344, %v2343
  %v2382 = vpack.c.b16 %v2346, %v2345
  %v2383 = vpack.c.b16 %v2348, %v2347
  %v2384 = vpack.c.b16 %v2350, %v2349
  %v2385 = vpack.c.b16 %v2352, %v2351
  %v2386 = vpack.c.b16 %v2354, %v2353
  %2419 = vmatprep.subr.bf16.mxu0 0
  %2420 = vmatpush1.bf16.msra.mxu0 %v2362
  %2421 = vmatprep.subr.bf16.mxu0 0
  %2422 = vmatpush1.bf16.msra.mxu0 %v2361
  %2423 = vmatprep.subr.bf16.mxu0 0
  %2424 = vmatpush1.bf16.msra.mxu0 %v2360
  %2425 = vmatprep.subr.bf16.mxu0 0
  %2426 = vmatpush1.bf16.msra.mxu0 %v2359
  %2427 = vmatprep.subr.bf16.mxu0 0
  %2428 = vmatpush1.bf16.msra.mxu0 %v2358
  %2429 = vmatprep.subr.bf16.mxu0 0
  %2430 = vmatpush1.bf16.msra.mxu0 %v2357
  %2431 = vmatprep.subr.bf16.mxu0 0
  %2432 = vmatpush1.bf16.msra.mxu0 %v2356
  %2433 = vmatprep.subr.bf16.mxu0 0
  %2434 = vmatpush1.bf16.msra.mxu0 %v2355
  %2435 = vmatprep.subr.bf16.mxu0 0
  %2436 = vmatpush2.bf16.msra.mxu0 %v2370
  %2437 = vmatprep.subr.bf16.mxu0 0
  %2438 = vmatpush2.bf16.msra.mxu0 %v2369
  %2439 = vmatprep.subr.bf16.mxu0 0
  %2440 = vmatpush2.bf16.msra.mxu0 %v2368
  %2441 = vmatprep.subr.bf16.mxu0 0
  %2442 = vmatpush2.bf16.msra.mxu0 %v2367
  %2443 = vmatprep.subr.bf16.mxu0 0
  %2444 = vmatpush2.bf16.msra.mxu0 %v2366
  %2445 = vmatprep.subr.bf16.mxu0 0
  %2446 = vmatpush2.bf16.msra.mxu0 %v2365
  %2447 = vmatprep.subr.bf16.mxu0 0
  %2448 = vmatpush2.bf16.msra.mxu0 %v2364
  %2449 = vmatprep.subr.bf16.mxu0 0
  %2450 = vmatpush2.bf16.msra.mxu0 %v2363
  %2451 = vmatprep.mubr.bf16.mxu0 %v672
  %2452 = vmatmul.mubr.bf16.gmra.mxu0 %v671
  %v2453 = vpop.f32.mrf.mxu0
  %v2454 = vadd.f32 %v2217, %v2453
  %v2455 = vpop.f32.mrf.mxu0
  %v2456 = vpop.f32.mrf.mxu0
  %v2457 = vadd.f32 %v2217, %v2456
  %v2458 = vpop.f32.mrf.mxu0
  %2459 = vmatprep.mubr.bf16.mxu0 %v676
  %2460 = vmatmul.mubr.bf16.gmra.mxu0 %v675
  %v2461 = vpop.f32.mrf.mxu0
  %v2462 = vadd.f32 %v2217, %v2461
  %v2463 = vpop.f32.mrf.mxu0
  %v2464 = vpop.f32.mrf.mxu0
  %v2465 = vadd.f32 %v2217, %v2464
  %v2466 = vpop.f32.mrf.mxu0
  %2467 = vmatprep.mubr.bf16.mxu0 %v680
  %2468 = vmatmul.mubr.bf16.gmra.mxu0 %v679
  %v2469 = vpop.f32.mrf.mxu0
  %v2470 = vadd.f32 %v2217, %v2469
  %v2471 = vpop.f32.mrf.mxu0
  %v2472 = vpop.f32.mrf.mxu0
  %v2473 = vadd.f32 %v2217, %v2472
  %v2474 = vpop.f32.mrf.mxu0
  %2475 = vmatprep.mubr.bf16.mxu0 %v684
  %2476 = vmatmul.mubr.bf16.gmra.mxu0 %v683
  %v2477 = vpop.f32.mrf.mxu0
  %v2478 = vadd.f32 %v2217, %v2477
  %v2479 = vpop.f32.mrf.mxu0
  %v2480 = vpop.f32.mrf.mxu0
  %v2481 = vadd.f32 %v2217, %v2480
  %v2482 = vpop.f32.mrf.mxu0
  %2483 = vmatprep.mubr.bf16.mxu0 %v688
  %2484 = vmatmul.mubr.bf16.gmra.mxu0 %v687
  %v2485 = vpop.f32.mrf.mxu0
  %v2486 = vadd.f32 %v2217, %v2485
  %v2487 = vpop.f32.mrf.mxu0
  %v2488 = vpop.f32.mrf.mxu0
  %v2489 = vadd.f32 %v2217, %v2488
  %v2490 = vpop.f32.mrf.mxu0
  %2491 = vmatprep.mubr.bf16.mxu0 %v692
  %2492 = vmatmul.mubr.bf16.gmra.mxu0 %v691
  %v2493 = vpop.f32.mrf.mxu0
  %v2494 = vadd.f32 %v2217, %v2493
  %v2495 = vpop.f32.mrf.mxu0
  %v2496 = vpop.f32.mrf.mxu0
  %v2497 = vadd.f32 %v2217, %v2496
  %v2498 = vpop.f32.mrf.mxu0
  %2499 = vmatprep.mubr.bf16.mxu0 %v696
  %2500 = vmatmul.mubr.bf16.gmra.mxu0 %v695
  %v2501 = vpop.f32.mrf.mxu0
  %v2502 = vadd.f32 %v2217, %v2501
  %v2503 = vpop.f32.mrf.mxu0
  %v2504 = vpop.f32.mrf.mxu0
  %v2505 = vadd.f32 %v2217, %v2504
  %v2506 = vpop.f32.mrf.mxu0
  %2507 = vmatprep.mubr.bf16.mxu0 %v700
  %2508 = vmatmul.mubr.bf16.gmra.mxu0 %v699
  %v2509 = vpop.f32.mrf.mxu0
  %v2510 = vadd.f32 %v2217, %v2509
  %v2511 = vpop.f32.mrf.mxu0
  %v2512 = vpop.f32.mrf.mxu0
  %v2513 = vadd.f32 %v2217, %v2512
  %v2514 = vpop.f32.mrf.mxu0
  %2515 = vdwg.mxu0
  %2516 = vmatprep.subr.bf16.mxu0 0
  %2517 = vmatpush1.bf16.msra.mxu0 %v2378
  %2518 = vmatprep.subr.bf16.mxu0 0
  %2519 = vmatpush1.bf16.msra.mxu0 %v2377
  %2520 = vmatprep.subr.bf16.mxu0 0
  %2521 = vmatpush1.bf16.msra.mxu0 %v2376
  %2522 = vmatprep.subr.bf16.mxu0 0
  %2523 = vmatpush1.bf16.msra.mxu0 %v2375
  %2524 = vmatprep.subr.bf16.mxu0 0
  %2525 = vmatpush1.bf16.msra.mxu0 %v2374
  %2526 = vmatprep.subr.bf16.mxu0 0
  %2527 = vmatpush1.bf16.msra.mxu0 %v2373
  %2528 = vmatprep.subr.bf16.mxu0 0
  %2529 = vmatpush1.bf16.msra.mxu0 %v2372
  %2530 = vmatprep.subr.bf16.mxu0 0
  %2531 = vmatpush1.bf16.msra.mxu0 %v2371
  %2532 = vmatprep.subr.bf16.mxu0 0
  %2533 = vmatpush2.bf16.msra.mxu0 %v2386
  %2534 = vmatprep.subr.bf16.mxu0 0
  %2535 = vmatpush2.bf16.msra.mxu0 %v2385
  %2536 = vmatprep.subr.bf16.mxu0 0
  %2537 = vmatpush2.bf16.msra.mxu0 %v2384
  %2538 = vmatprep.subr.bf16.mxu0 0
  %2539 = vmatpush2.bf16.msra.mxu0 %v2383
  %2540 = vmatprep.subr.bf16.mxu0 0
  %2541 = vmatpush2.bf16.msra.mxu0 %v2382
  %2542 = vmatprep.subr.bf16.mxu0 0
  %2543 = vmatpush2.bf16.msra.mxu0 %v2381
  %2544 = vmatprep.subr.bf16.mxu0 0
  %2545 = vmatpush2.bf16.msra.mxu0 %v2380
  %2546 = vmatprep.subr.bf16.mxu0 0
  %2547 = vmatpush2.bf16.msra.mxu0 %v2379
  %2548 = vmatprep.mubr.bf16.mxu0 %v674
  %2549 = vmatmul.mubr.bf16.gmra.mxu0 %v673
  %v2550 = vpop.f32.mrf.mxu0
  %v2551 = vadd.f32 %v2454, %v2550
  %v2552 = vpop.f32.mrf.mxu0
  %v2553 = vpop.f32.mrf.mxu0
  %v2554 = vadd.f32 %v2457, %v2553
  %v2555 = vpop.f32.mrf.mxu0
  %2556 = vmatprep.mubr.bf16.mxu0 %v678
  %2557 = vmatmul.mubr.bf16.gmra.mxu0 %v677
  %v2558 = vpop.f32.mrf.mxu0
  %v2559 = vadd.f32 %v2462, %v2558
  %v2560 = vpop.f32.mrf.mxu0
  %v2561 = vpop.f32.mrf.mxu0
  %v2562 = vadd.f32 %v2465, %v2561
  %v2563 = vpop.f32.mrf.mxu0
  %2564 = vmatprep.mubr.bf16.mxu0 %v682
  %2565 = vmatmul.mubr.bf16.gmra.mxu0 %v681
  %v2566 = vpop.f32.mrf.mxu0
  %v2567 = vadd.f32 %v2470, %v2566
  %v2568 = vpop.f32.mrf.mxu0
  %v2569 = vpop.f32.mrf.mxu0
  %v2570 = vadd.f32 %v2473, %v2569
  %v2571 = vpop.f32.mrf.mxu0
  %2572 = vmatprep.mubr.bf16.mxu0 %v2220
  %2573 = vmatmul.mubr.bf16.gmra.mxu0 %v2219
  %v2574 = vpop.f32.mrf.mxu0
  %v2575 = vadd.f32 %v2478, %v2574
  %v2576 = vpop.f32.mrf.mxu0
  %v2577 = vpop.f32.mrf.mxu0
  %v2578 = vadd.f32 %v2481, %v2577
  %v2579 = vpop.f32.mrf.mxu0
  %2580 = vmatprep.mubr.bf16.mxu0 %v690
  %2581 = vmatmul.mubr.bf16.gmra.mxu0 %v689
  %v2582 = vpop.f32.mrf.mxu0
  %v2583 = vadd.f32 %v2486, %v2582
  %v2584 = vpop.f32.mrf.mxu0
  %v2585 = vpop.f32.mrf.mxu0
  %v2586 = vadd.f32 %v2489, %v2585
  %v2587 = vpop.f32.mrf.mxu0
  %2588 = vmatprep.mubr.bf16.mxu0 %v694
  %2589 = vmatmul.mubr.bf16.gmra.mxu0 %v693
  %v2590 = vpop.f32.mrf.mxu0
  %v2591 = vadd.f32 %v2494, %v2590
  %v2592 = vpop.f32.mrf.mxu0
  %v2593 = vpop.f32.mrf.mxu0
  %v2594 = vadd.f32 %v2497, %v2593
  %v2595 = vpop.f32.mrf.mxu0
  %2596 = vmatprep.mubr.bf16.mxu0 %v698
  %2597 = vmatmul.mubr.bf16.gmra.mxu0 %v697
  %v2598 = vpop.f32.mrf.mxu0
  %v2599 = vadd.f32 %v2502, %v2598
  %v2600 = vpop.f32.mrf.mxu0
  %v2601 = vpop.f32.mrf.mxu0
  %v2602 = vadd.f32 %v2505, %v2601
  %v2603 = vpop.f32.mrf.mxu0
  %2604 = vmatprep.mubr.bf16.mxu0 %v2222
  %2605 = vmatmul.mubr.bf16.gmra.mxu0 %v2221
  %v2606 = vpop.f32.mrf.mxu0
  %v2607 = vadd.f32 %v2510, %v2606
  %v2608 = vpop.f32.mrf.mxu0
  %v2609 = vpop.f32.mrf.mxu0
  %v2610 = vadd.f32 %v2513, %v2609
  %v2611 = vpop.f32.mrf.mxu0
  %2612 = vdwg.mxu0
  %v2613 = vtanh.pop %v2551
  %v2614 = vtanh.pop %v2554
  %v2615 = vtanh.pop %v2559
  %v2616 = vtanh.pop %v2562
  %v2617 = vtanh.pop %v2567
  %v2618 = vtanh.pop %v2570
  %v2619 = vtanh.pop %v2575
  %v2620 = vtanh.pop %v2578
  %v2621 = vtanh.pop %v2583
  %v2622 = vtanh.pop %v2586
  %v2623 = vtanh.pop %v2591
  %v2624 = vtanh.pop %v2594
  %v2625 = vtanh.pop %v2599
  %v2626 = vtanh.pop %v2602
  %v2627 = vtanh.pop %v2607
  %v2628 = vtanh.pop %v2610
  %v2629 = vunpack.c.h.b16 %v407
  %v2630 = vunpack.c.h.b16 %v2133
  %v2631 = vunpack.c.h.b16 %v417
  %v2632 = vunpack.c.h.b16 %v2140
  %v2633 = vpack.c.b16 %v2144, %v2143
  %v2634 = vpack.c.b16 %v2630, %v2629
  %v2635 = vpack.c.b16 %v2146, %v2145
  %v2636 = vpack.c.b16 %v2632, %v2631
  %v2638 = vshrl.u32 %v2633, 16
  %v2640 = vrot.slane %v2638, 4
  %v2641 = vshll.u32 %v2633, 16
  %v2643 = vrot.slane %v2641, 5
  %v2644 = vor.u32 %v2640, %v2643
  %v2645 = vrot.slane %v2644, 4
  %v2647 = vshll.u32 %v2634, 16
  %v2649 = vrot.slane %v2647, 5
  %v2650 = vsel %vm1209, %v2645, %v2649
  %v2652 = vshrl.u32 %v2635, 16
  %v2654 = vrot.slane %v2652, 4
  %v2655 = vshll.u32 %v2635, 16
  %v2657 = vrot.slane %v2655, 5
  %v2658 = vor.u32 %v2654, %v2657
  %v2659 = vrot.slane %v2658, 4
  %v2661 = vshll.u32 %v2636, 16
  %v2663 = vrot.slane %v2661, 5
  %v2664 = vsel %vm1209, %v2659, %v2663
  %s2665 = scalar_lea.vmem %s2, 768
  %v2666 = vld [vmem:[%s2665] sm:$0xf]
  %v2667 = vld [vmem:[%s2665 + $0x4] sm:$0xf]
  %v2668 = vld [vmem:[%s2665 + $0x8] sm:$0xf]
  %v2669 = vld [vmem:[%s2665 + $0xc] sm:$0xf]
  %v2670 = vld [vmem:[%s2665 + $0x10] sm:$0xf]
  %v2671 = vld [vmem:[%s2665 + $0x14] sm:$0xf]
  %v2672 = vld [vmem:[%s2665 + $0x18] sm:$0xf]
  %v2673 = vld [vmem:[%s2665 + $0x1c] sm:$0xf]
  %v2674 = vld [vmem:[%s2665 + $0x20] sm:$0xf]
  %v2675 = vld [vmem:[%s2665 + $0x24] sm:$0xf]
  %v2676 = vld [vmem:[%s2665 + $0x28] sm:$0xf]
  %v2677 = vld [vmem:[%s2665 + $0x2c] sm:$0xf]
  %v2678 = vld [vmem:[%s2665 + $0x30] sm:$0xf]
  %v2679 = vld [vmem:[%s2665 + $0x34] sm:$0xf]
  %v2680 = vld [vmem:[%s2665 + $0x38] sm:$0xf]
  %v2681 = vld [vmem:[%s2665 + $0x3c] sm:$0xf]
  %v2682 = vld [vmem:[%s2665 + $0x40] sm:$0xf]
  %v2683 = vld [vmem:[%s2665 + $0x44] sm:$0xf]
  %v2684 = vld [vmem:[%s2665 + $0x48] sm:$0xf]
  %v2685 = vld [vmem:[%s2665 + $0x4c] sm:$0xf]
  %v2686 = vld [vmem:[%s2665 + $0x50] sm:$0xf]
  %v2687 = vld [vmem:[%s2665 + $0x54] sm:$0xf]
  %v2688 = vld [vmem:[%s2665 + $0x58] sm:$0xf]
  %v2689 = vld [vmem:[%s2665 + $0x5c] sm:$0xf]
  %v2690 = vld [vmem:[%s2665 + $0x60] sm:$0xf]
  %v2691 = vld [vmem:[%s2665 + $0x64] sm:$0xf]
  %v2692 = vld [vmem:[%s2665 + $0x68] sm:$0xf]
  %v2693 = vld [vmem:[%s2665 + $0x6c] sm:$0xf]
  %v2694 = vld [vmem:[%s2665 + $0x70] sm:$0xf]
  %v2695 = vld [vmem:[%s2665 + $0x74] sm:$0xf]
  %v2696 = vld [vmem:[%s2665 + $0x78] sm:$0xf]
  %v2697 = vld [vmem:[%s2665 + $0x7c] sm:$0xf]
  %v2698 = vld [vmem:[%s2665 + $0x80] sm:$0xf]
  %v2699 = vld [vmem:[%s2665 + $0x84] sm:$0xf]
  %v2700 = vld [vmem:[%s2665 + $0x88] sm:$0xf]
  %v2701 = vld [vmem:[%s2665 + $0x8c] sm:$0xf]
  %v2702 = vld [vmem:[%s2665 + $0x90] sm:$0xf]
  %v2703 = vld [vmem:[%s2665 + $0x94] sm:$0xf]
  %v2704 = vld [vmem:[%s2665 + $0x98] sm:$0xf]
  %v2705 = vld [vmem:[%s2665 + $0x9c] sm:$0xf]
  %v2706 = vld [vmem:[%s2665 + $0xa0] sm:$0xf]
  %v2707 = vld [vmem:[%s2665 + $0xa4] sm:$0xf]
  %v2708 = vld [vmem:[%s2665 + $0xa8] sm:$0xf]
  %v2709 = vld [vmem:[%s2665 + $0xac] sm:$0xf]
  %v2710 = vld [vmem:[%s2665 + $0xb0] sm:$0xf]
  %v2711 = vld [vmem:[%s2665 + $0xb4] sm:$0xf]
  %v2712 = vld [vmem:[%s2665 + $0xb8] sm:$0xf]
  %v2713 = vld [vmem:[%s2665 + $0xbc] sm:$0xf]
  %v2714 = vld [vmem:[%s2665 + $0xc0] sm:$0xf]
  %v2715 = vld [vmem:[%s2665 + $0xc4] sm:$0xf]
  %v2716 = vld [vmem:[%s2665 + $0xc8] sm:$0xf]
  %v2717 = vld [vmem:[%s2665 + $0xcc] sm:$0xf]
  %v2718 = vld [vmem:[%s2665 + $0xd0] sm:$0xf]
  %v2719 = vld [vmem:[%s2665 + $0xd4] sm:$0xf]
  %v2720 = vld [vmem:[%s2665 + $0xd8] sm:$0xf]
  %v2721 = vld [vmem:[%s2665 + $0xdc] sm:$0xf]
  %v2722 = vld [vmem:[%s2665 + $0xe0] sm:$0xf]
  %v2723 = vld [vmem:[%s2665 + $0xe4] sm:$0xf]
  %v2724 = vld [vmem:[%s2665 + $0xe8] sm:$0xf]
  %v2725 = vld [vmem:[%s2665 + $0xec] sm:$0xf]
  %v2726 = vld [vmem:[%s2665 + $0xf0] sm:$0xf]
  %v2727 = vld [vmem:[%s2665 + $0xf4] sm:$0xf]
  %v2728 = vld [vmem:[%s2665 + $0xf8] sm:$0xf]
  %v2729 = vld [vmem:[%s2665 + $0xfc] sm:$0xf]
  %v2730 = vunpack.c.l.b16 %v2650
  %v2731 = vunpack.c.h.b16 %v2650
  %v2732 = vunpack.c.l.b16 %v2664
  %v2733 = vunpack.c.h.b16 %v2664
  %v2734 = vpack.c.b16 %v2730, %v1543
  %v2735 = vpack.c.b16 %v2731, %v1544
  %v2736 = vpack.c.b16 %v2732, %v1561
  %v2737 = vpack.c.b16 %v2733, %v1562
  %v2806 = vunpack.c.l.b16 %v2666
  %v2807 = vunpack.c.l.b16 %v2667
  %v2808 = vunpack.c.l.b16 %v2668
  %v2809 = vunpack.c.l.b16 %v2669
  %v2810 = vunpack.c.l.b16 %v2670
  %v2811 = vunpack.c.l.b16 %v2671
  %v2812 = vunpack.c.l.b16 %v2672
  %v2813 = vunpack.c.l.b16 %v2673
  %v2814 = vunpack.c.l.b16 %v2674
  %v2815 = vunpack.c.l.b16 %v2675
  %v2816 = vunpack.c.l.b16 %v2676
  %v2817 = vunpack.c.l.b16 %v2677
  %v2818 = vunpack.c.l.b16 %v2678
  %v2819 = vunpack.c.l.b16 %v2679
  %v2820 = vunpack.c.l.b16 %v2680
  %v2821 = vunpack.c.l.b16 %v2681
  %v2822 = vunpack.c.l.b16 %v2682
  %v2823 = vunpack.c.l.b16 %v2683
  %v2824 = vunpack.c.l.b16 %v2684
  %v2825 = vunpack.c.l.b16 %v2685
  %v2826 = vunpack.c.l.b16 %v2686
  %v2827 = vunpack.c.l.b16 %v2687
  %v2828 = vunpack.c.l.b16 %v2688
  %v2829 = vunpack.c.l.b16 %v2689
  %v2830 = vunpack.c.l.b16 %v2690
  %v2831 = vunpack.c.l.b16 %v2691
  %v2832 = vunpack.c.l.b16 %v2692
  %v2833 = vunpack.c.l.b16 %v2693
  %v2834 = vunpack.c.l.b16 %v2694
  %v2835 = vunpack.c.l.b16 %v2695
  %v2836 = vunpack.c.l.b16 %v2696
  %v2837 = vunpack.c.l.b16 %v2697
  %v2838 = vunpack.c.l.b16 %v2698
  %v2839 = vunpack.c.l.b16 %v2699
  %v2840 = vunpack.c.l.b16 %v2700
  %v2841 = vunpack.c.l.b16 %v2701
  %v2842 = vunpack.c.l.b16 %v2702
  %v2843 = vunpack.c.l.b16 %v2703
  %v2844 = vunpack.c.l.b16 %v2704
  %v2845 = vunpack.c.l.b16 %v2705
  %v2846 = vunpack.c.l.b16 %v2706
  %v2847 = vunpack.c.l.b16 %v2707
  %v2848 = vunpack.c.l.b16 %v2708
  %v2849 = vunpack.c.l.b16 %v2709
  %v2850 = vunpack.c.l.b16 %v2710
  %v2851 = vunpack.c.l.b16 %v2711
  %v2852 = vunpack.c.l.b16 %v2712
  %v2853 = vunpack.c.l.b16 %v2713
  %v2854 = vunpack.c.l.b16 %v2714
  %v2855 = vunpack.c.l.b16 %v2715
  %v2856 = vunpack.c.l.b16 %v2716
  %v2857 = vunpack.c.l.b16 %v2717
  %v2858 = vunpack.c.l.b16 %v2718
  %v2859 = vunpack.c.l.b16 %v2719
  %v2860 = vunpack.c.l.b16 %v2720
  %v2861 = vunpack.c.l.b16 %v2721
  %v2862 = vunpack.c.l.b16 %v2722
  %v2863 = vunpack.c.l.b16 %v2723
  %v2864 = vunpack.c.l.b16 %v2724
  %v2865 = vunpack.c.l.b16 %v2725
  %v2866 = vunpack.c.l.b16 %v2726
  %v2867 = vunpack.c.l.b16 %v2727
  %v2868 = vunpack.c.l.b16 %v2728
  %v2869 = vunpack.c.l.b16 %v2729
  %v2870 = vpack.c.b16 %v2807, %v2806
  %v2871 = vpack.c.b16 %v2809, %v2808
  %v2872 = vpack.c.b16 %v2811, %v2810
  %v2873 = vpack.c.b16 %v2813, %v2812
  %v2874 = vpack.c.b16 %v2815, %v2814
  %v2875 = vpack.c.b16 %v2817, %v2816
  %v2876 = vpack.c.b16 %v2819, %v2818
  %v2877 = vpack.c.b16 %v2821, %v2820
  %v2878 = vpack.c.b16 %v2823, %v2822
  %v2879 = vpack.c.b16 %v2825, %v2824
  %v2880 = vpack.c.b16 %v2827, %v2826
  %v2881 = vpack.c.b16 %v2829, %v2828
  %v2882 = vpack.c.b16 %v2831, %v2830
  %v2883 = vpack.c.b16 %v2833, %v2832
  %v2884 = vpack.c.b16 %v2835, %v2834
  %v2885 = vpack.c.b16 %v2837, %v2836
  %v2886 = vpack.c.b16 %v2839, %v2838
  %v2887 = vpack.c.b16 %v2841, %v2840
  %v2888 = vpack.c.b16 %v2843, %v2842
  %v2889 = vpack.c.b16 %v2845, %v2844
  %v2890 = vpack.c.b16 %v2847, %v2846
  %v2891 = vpack.c.b16 %v2849, %v2848
  %v2892 = vpack.c.b16 %v2851, %v2850
  %v2893 = vpack.c.b16 %v2853, %v2852
  %v2894 = vpack.c.b16 %v2855, %v2854
  %v2895 = vpack.c.b16 %v2857, %v2856
  %v2896 = vpack.c.b16 %v2859, %v2858
  %v2897 = vpack.c.b16 %v2861, %v2860
  %v2898 = vpack.c.b16 %v2863, %v2862
  %v2899 = vpack.c.b16 %v2865, %v2864
  %v2900 = vpack.c.b16 %v2867, %v2866
  %v2901 = vpack.c.b16 %v2869, %v2868
  %2934 = vmatprep.subr.bf16.mxu0 0
  %2935 = vmatpush1.bf16.msra.mxu0 %v2877
  %2936 = vmatprep.subr.bf16.mxu0 0
  %2937 = vmatpush1.bf16.msra.mxu0 %v2876
  %2938 = vmatprep.subr.bf16.mxu0 0
  %2939 = vmatpush1.bf16.msra.mxu0 %v2875
  %2940 = vmatprep.subr.bf16.mxu0 0
  %2941 = vmatpush1.bf16.msra.mxu0 %v2874
  %2942 = vmatprep.subr.bf16.mxu0 0
  %2943 = vmatpush1.bf16.msra.mxu0 %v2873
  %2944 = vmatprep.subr.bf16.mxu0 0
  %2945 = vmatpush1.bf16.msra.mxu0 %v2872
  %2946 = vmatprep.subr.bf16.mxu0 0
  %2947 = vmatpush1.bf16.msra.mxu0 %v2871
  %2948 = vmatprep.subr.bf16.mxu0 0
  %2949 = vmatpush1.bf16.msra.mxu0 %v2870
  %2950 = vmatprep.subr.bf16.mxu0 0
  %2951 = vmatpush2.bf16.msra.mxu0 %v2885
  %2952 = vmatprep.subr.bf16.mxu0 0
  %2953 = vmatpush2.bf16.msra.mxu0 %v2884
  %2954 = vmatprep.subr.bf16.mxu0 0
  %2955 = vmatpush2.bf16.msra.mxu0 %v2883
  %2956 = vmatprep.subr.bf16.mxu0 0
  %2957 = vmatpush2.bf16.msra.mxu0 %v2882
  %2958 = vmatprep.subr.bf16.mxu0 0
  %2959 = vmatpush2.bf16.msra.mxu0 %v2881
  %2960 = vmatprep.subr.bf16.mxu0 0
  %2961 = vmatpush2.bf16.msra.mxu0 %v2880
  %2962 = vmatprep.subr.bf16.mxu0 0
  %2963 = vmatpush2.bf16.msra.mxu0 %v2879
  %2964 = vmatprep.subr.bf16.mxu0 0
  %2965 = vmatpush2.bf16.msra.mxu0 %v2878
  %2966 = vmatprep.mubr.bf16.mxu0 %v1566
  %2967 = vmatmul.mubr.bf16.gmra.mxu0 %v1565
  %v2968 = vpop.f32.mrf.mxu0
  %v2969 = vadd.f32 %v2217, %v2968
  %v2970 = vpop.f32.mrf.mxu0
  %v2971 = vpop.f32.mrf.mxu0
  %v2972 = vadd.f32 %v2217, %v2971
  %v2973 = vpop.f32.mrf.mxu0
  %2974 = vmatprep.mubr.bf16.mxu0 %v1570
  %2975 = vmatmul.mubr.bf16.gmra.mxu0 %v1569
  %v2976 = vpop.f32.mrf.mxu0
  %v2977 = vadd.f32 %v2217, %v2976
  %v2978 = vpop.f32.mrf.mxu0
  %v2979 = vpop.f32.mrf.mxu0
  %v2980 = vadd.f32 %v2217, %v2979
  %v2981 = vpop.f32.mrf.mxu0
  %2982 = vmatprep.mubr.bf16.mxu0 %v1574
  %2983 = vmatmul.mubr.bf16.gmra.mxu0 %v1573
  %v2984 = vpop.f32.mrf.mxu0
  %v2985 = vadd.f32 %v2217, %v2984
  %v2986 = vpop.f32.mrf.mxu0
  %v2987 = vpop.f32.mrf.mxu0
  %v2988 = vadd.f32 %v2217, %v2987
  %v2989 = vpop.f32.mrf.mxu0
  %2990 = vmatprep.mubr.bf16.mxu0 %v1578
  %2991 = vmatmul.mubr.bf16.gmra.mxu0 %v1577
  %v2992 = vpop.f32.mrf.mxu0
  %v2993 = vadd.f32 %v2217, %v2992
  %v2994 = vpop.f32.mrf.mxu0
  %v2995 = vpop.f32.mrf.mxu0
  %v2996 = vadd.f32 %v2217, %v2995
  %v2997 = vpop.f32.mrf.mxu0
  %2998 = vmatprep.mubr.bf16.mxu0 %v1582
  %2999 = vmatmul.mubr.bf16.gmra.mxu0 %v1581
  %v3000 = vpop.f32.mrf.mxu0
  %v3001 = vadd.f32 %v2217, %v3000
  %v3002 = vpop.f32.mrf.mxu0
  %v3003 = vpop.f32.mrf.mxu0
  %v3004 = vadd.f32 %v2217, %v3003
  %v3005 = vpop.f32.mrf.mxu0
  %3006 = vmatprep.mubr.bf16.mxu0 %v1586
  %3007 = vmatmul.mubr.bf16.gmra.mxu0 %v1585
  %v3008 = vpop.f32.mrf.mxu0
  %v3009 = vadd.f32 %v2217, %v3008
  %v3010 = vpop.f32.mrf.mxu0
  %v3011 = vpop.f32.mrf.mxu0
  %v3012 = vadd.f32 %v2217, %v3011
  %v3013 = vpop.f32.mrf.mxu0
  %3014 = vmatprep.mubr.bf16.mxu0 %v1590
  %3015 = vmatmul.mubr.bf16.gmra.mxu0 %v1589
  %v3016 = vpop.f32.mrf.mxu0
  %v3017 = vadd.f32 %v2217, %v3016
  %v3018 = vpop.f32.mrf.mxu0
  %v3019 = vpop.f32.mrf.mxu0
  %v3020 = vadd.f32 %v2217, %v3019
  %v3021 = vpop.f32.mrf.mxu0
  %3022 = vmatprep.mubr.bf16.mxu0 %v1594
  %3023 = vmatmul.mubr.bf16.gmra.mxu0 %v1593
  %v3024 = vpop.f32.mrf.mxu0
  %v3025 = vadd.f32 %v2217, %v3024
  %v3026 = vpop.f32.mrf.mxu0
  %v3027 = vpop.f32.mrf.mxu0
  %v3028 = vadd.f32 %v2217, %v3027
  %v3029 = vpop.f32.mrf.mxu0
  %3030 = vdwg.mxu0
  %3031 = vmatprep.subr.bf16.mxu0 0
  %3032 = vmatpush1.bf16.msra.mxu0 %v2893
  %3033 = vmatprep.subr.bf16.mxu0 0
  %3034 = vmatpush1.bf16.msra.mxu0 %v2892
  %3035 = vmatprep.subr.bf16.mxu0 0
  %3036 = vmatpush1.bf16.msra.mxu0 %v2891
  %3037 = vmatprep.subr.bf16.mxu0 0
  %3038 = vmatpush1.bf16.msra.mxu0 %v2890
  %3039 = vmatprep.subr.bf16.mxu0 0
  %3040 = vmatpush1.bf16.msra.mxu0 %v2889
  %3041 = vmatprep.subr.bf16.mxu0 0
  %3042 = vmatpush1.bf16.msra.mxu0 %v2888
  %3043 = vmatprep.subr.bf16.mxu0 0
  %3044 = vmatpush1.bf16.msra.mxu0 %v2887
  %3045 = vmatprep.subr.bf16.mxu0 0
  %3046 = vmatpush1.bf16.msra.mxu0 %v2886
  %3047 = vmatprep.subr.bf16.mxu0 0
  %3048 = vmatpush2.bf16.msra.mxu0 %v2901
  %3049 = vmatprep.subr.bf16.mxu0 0
  %3050 = vmatpush2.bf16.msra.mxu0 %v2900
  %3051 = vmatprep.subr.bf16.mxu0 0
  %3052 = vmatpush2.bf16.msra.mxu0 %v2899
  %3053 = vmatprep.subr.bf16.mxu0 0
  %3054 = vmatpush2.bf16.msra.mxu0 %v2898
  %3055 = vmatprep.subr.bf16.mxu0 0
  %3056 = vmatpush2.bf16.msra.mxu0 %v2897
  %3057 = vmatprep.subr.bf16.mxu0 0
  %3058 = vmatpush2.bf16.msra.mxu0 %v2896
  %3059 = vmatprep.subr.bf16.mxu0 0
  %3060 = vmatpush2.bf16.msra.mxu0 %v2895
  %3061 = vmatprep.subr.bf16.mxu0 0
  %3062 = vmatpush2.bf16.msra.mxu0 %v2894
  %3063 = vmatprep.mubr.bf16.mxu0 %v1568
  %3064 = vmatmul.mubr.bf16.gmra.mxu0 %v1567
  %v3065 = vpop.f32.mrf.mxu0
  %v3066 = vadd.f32 %v2969, %v3065
  %v3067 = vpop.f32.mrf.mxu0
  %v3068 = vpop.f32.mrf.mxu0
  %v3069 = vadd.f32 %v2972, %v3068
  %v3070 = vpop.f32.mrf.mxu0
  %3071 = vmatprep.mubr.bf16.mxu0 %v1572
  %3072 = vmatmul.mubr.bf16.gmra.mxu0 %v1571
  %v3073 = vpop.f32.mrf.mxu0
  %v3074 = vadd.f32 %v2977, %v3073
  %v3075 = vpop.f32.mrf.mxu0
  %v3076 = vpop.f32.mrf.mxu0
  %v3077 = vadd.f32 %v2980, %v3076
  %v3078 = vpop.f32.mrf.mxu0
  %3079 = vmatprep.mubr.bf16.mxu0 %v1576
  %3080 = vmatmul.mubr.bf16.gmra.mxu0 %v1575
  %v3081 = vpop.f32.mrf.mxu0
  %v3082 = vadd.f32 %v2985, %v3081
  %v3083 = vpop.f32.mrf.mxu0
  %v3084 = vpop.f32.mrf.mxu0
  %v3085 = vadd.f32 %v2988, %v3084
  %v3086 = vpop.f32.mrf.mxu0
  %3087 = vmatprep.mubr.bf16.mxu0 %v2735
  %3088 = vmatmul.mubr.bf16.gmra.mxu0 %v2734
  %v3089 = vpop.f32.mrf.mxu0
  %v3090 = vadd.f32 %v2993, %v3089
  %v3091 = vpop.f32.mrf.mxu0
  %v3092 = vpop.f32.mrf.mxu0
  %v3093 = vadd.f32 %v2996, %v3092
  %v3094 = vpop.f32.mrf.mxu0
  %3095 = vmatprep.mubr.bf16.mxu0 %v1584
  %3096 = vmatmul.mubr.bf16.gmra.mxu0 %v1583
  %v3097 = vpop.f32.mrf.mxu0
  %v3098 = vadd.f32 %v3001, %v3097
  %v3099 = vpop.f32.mrf.mxu0
  %v3100 = vpop.f32.mrf.mxu0
  %v3101 = vadd.f32 %v3004, %v3100
  %v3102 = vpop.f32.mrf.mxu0
  %3103 = vmatprep.mubr.bf16.mxu0 %v1588
  %3104 = vmatmul.mubr.bf16.gmra.mxu0 %v1587
  %v3105 = vpop.f32.mrf.mxu0
  %v3106 = vadd.f32 %v3009, %v3105
  %v3107 = vpop.f32.mrf.mxu0
  %v3108 = vpop.f32.mrf.mxu0
  %v3109 = vadd.f32 %v3012, %v3108
  %v3110 = vpop.f32.mrf.mxu0
  %3111 = vmatprep.mubr.bf16.mxu0 %v1592
  %3112 = vmatmul.mubr.bf16.gmra.mxu0 %v1591
  %v3113 = vpop.f32.mrf.mxu0
  %v3114 = vadd.f32 %v3017, %v3113
  %v3115 = vpop.f32.mrf.mxu0
  %v3116 = vpop.f32.mrf.mxu0
  %v3117 = vadd.f32 %v3020, %v3116
  %v3118 = vpop.f32.mrf.mxu0
  %3119 = vmatprep.mubr.bf16.mxu0 %v2737
  %3120 = vmatmul.mubr.bf16.gmra.mxu0 %v2736
  %v3121 = vpop.f32.mrf.mxu0
  %v3122 = vadd.f32 %v3025, %v3121
  %v3123 = vpop.f32.mrf.mxu0
  %v3124 = vpop.f32.mrf.mxu0
  %v3125 = vadd.f32 %v3028, %v3124
  %v3126 = vpop.f32.mrf.mxu0
  %3127 = vdwg.mxu0
  %v3128 = vtanh.pop %v3066
  %v3129 = vtanh.pop %v3069
  %v3130 = vtanh.pop %v3074
  %v3131 = vtanh.pop %v3077
  %v3132 = vtanh.pop %v3082
  %v3133 = vtanh.pop %v3085
  %v3134 = vtanh.pop %v3090
  %v3135 = vtanh.pop %v3093
  %v3136 = vtanh.pop %v3098
  %v3137 = vtanh.pop %v3101
  %v3138 = vtanh.pop %v3106
  %v3139 = vtanh.pop %v3109
  %v3140 = vtanh.pop %v3114
  %v3141 = vtanh.pop %v3117
  %v3142 = vtanh.pop %v3122
  %v3143 = vtanh.pop %v3125
  %3160 = vrot.lane.b32.xlu0 %v3128, 8
  %v3161 = vpop.permute.xlu0 %3160
  %3162 = vrot.lane.b32.xlu0 %v3129, 8
  %v3163 = vpop.permute.xlu0 %3162
  %3164 = vrot.lane.b32.xlu0 %v3130, 8
  %v3165 = vpop.permute.xlu0 %3164
  %3166 = vrot.lane.b32.xlu0 %v3131, 8
  %v3167 = vpop.permute.xlu0 %3166
  %3168 = vrot.lane.b32.xlu0 %v3132, 8
  %v3169 = vpop.permute.xlu0 %3168
  %3170 = vrot.lane.b32.xlu0 %v3133, 8
  %v3171 = vpop.permute.xlu0 %3170
  %3172 = vrot.lane.b32.xlu0 %v3134, 8
  %v3173 = vpop.permute.xlu0 %3172
  %3174 = vrot.lane.b32.xlu0 %v3135, 8
  %v3175 = vpop.permute.xlu0 %3174
  %3176 = vrot.lane.b32.xlu0 %v3136, 8
  %v3177 = vpop.permute.xlu0 %3176
  %3178 = vrot.lane.b32.xlu0 %v3137, 8
  %v3179 = vpop.permute.xlu0 %3178
  %3180 = vrot.lane.b32.xlu0 %v3138, 8
  %v3181 = vpop.permute.xlu0 %3180
  %3182 = vrot.lane.b32.xlu0 %v3139, 8
  %v3183 = vpop.permute.xlu0 %3182
  %3184 = vrot.lane.b32.xlu0 %v3140, 8
  %v3185 = vpop.permute.xlu0 %3184
  %3186 = vrot.lane.b32.xlu0 %v3141, 8
  %v3187 = vpop.permute.xlu0 %3186
  %3188 = vrot.lane.b32.xlu0 %v3142, 8
  %v3189 = vpop.permute.xlu0 %3188
  %3190 = vrot.lane.b32.xlu0 %v3143, 8
  %v3191 = vpop.permute.xlu0 %3190
  %v3208 = vsel %vm2093, %v2613, %v3161
  %v3209 = vsel %vm2093, %v2614, %v3163
  %v3210 = vsel %vm2093, %v2615, %v3165
  %v3211 = vsel %vm2093, %v2616, %v3167
  %v3212 = vsel %vm2093, %v2617, %v3169
  %v3213 = vsel %vm2093, %v2618, %v3171
  %v3214 = vsel %vm2093, %v2619, %v3173
  %v3215 = vsel %vm2093, %v2620, %v3175
  %v3216 = vsel %vm2093, %v2621, %v3177
  %v3217 = vsel %vm2093, %v2622, %v3179
  %v3218 = vsel %vm2093, %v2623, %v3181
  %v3219 = vsel %vm2093, %v2624, %v3183
  %v3220 = vsel %vm2093, %v2625, %v3185
  %v3221 = vsel %vm2093, %v2626, %v3187
  %v3222 = vsel %vm2093, %v2627, %v3189
  %v3223 = vsel %vm2093, %v2628, %v3191
  %s3224 = scalar_lea.vmem %s4, 8
  %3225 = vst.msk [vmem:[%s3224] sm:$0xff] %vm2110, %v3208
  %3226 = vst.msk [vmem:[%s3224 + $0x10] sm:$0xff] %vm2110, %v3209
  %3227 = vst.msk [vmem:[%s3224 + $0x20] sm:$0xff] %vm2110, %v3210
  %3228 = vst.msk [vmem:[%s3224 + $0x30] sm:$0xff] %vm2110, %v3211
  %3229 = vst.msk [vmem:[%s3224 + $0x40] sm:$0xff] %vm2110, %v3212
  %3230 = vst.msk [vmem:[%s3224 + $0x50] sm:$0xff] %vm2110, %v3213
  %3231 = vst.msk [vmem:[%s3224 + $0x60] sm:$0xff] %vm2110, %v3214
  %3232 = vst.msk [vmem:[%s3224 + $0x70] sm:$0xff] %vm2110, %v3215
  %3233 = vst.msk [vmem:[%s3224 + $0x80] sm:$0xff] %vm2110, %v3216
  %3234 = vst.msk [vmem:[%s3224 + $0x90] sm:$0xff] %vm2110, %v3217
  %3235 = vst.msk [vmem:[%s3224 + $0xa0] sm:$0xff] %vm2110, %v3218
  %3236 = vst.msk [vmem:[%s3224 + $0xb0] sm:$0xff] %vm2110, %v3219
  %3237 = vst.msk [vmem:[%s3224 + $0xc0] sm:$0xff] %vm2110, %v3220
  %3238 = vst.msk [vmem:[%s3224 + $0xd0] sm:$0xff] %vm2110, %v3221
  %3239 = vst.msk [vmem:[%s3224 + $0xe0] sm:$0xff] %vm2110, %v3222
  %3240 = vst.msk [vmem:[%s3224 + $0xf0] sm:$0xff] %vm2110, %v3223
  // Predicated region
  $region18: #{generator_forward_pallas.7} parent=0 // pred_check
    _
  $region19: #{generator_forward_pallas.7} parent=0 // pred_check_branch
    %3242 = sbr.rel (0) target = $region21
  $region20: #{generator_forward_pallas.7} parent=0 // pred_region
    _
  $region21: #{generator_forward_pallas.7} parent=0 // pred_fallthru
    _
  // Predicated region
  $region22: #{generator_forward_pallas.7} parent=0 // pred_check
    _
  $region23: #{generator_forward_pallas.7} parent=0 // pred_check_branch
    %3244 = sbr.rel (0) target = $region25
  $region24: #{generator_forward_pallas.7} parent=0 // pred_region
    _
  $region25: #{generator_forward_pallas.7} parent=0 // pred_fallthru
    _

</llo_original>
